<compile_context>
chip_gen: v7x
topology: tpu7x:2x2x1
jax: 0.10.0
libtpu: 0.0.40
codegen_flags: <defaults>
</compile_context>

<pallas_src>
import functools

import jax
import jax.numpy as jnp
import numpy as np
from jax.experimental import pallas as pl
from jax.experimental.pallas import tpu as pltpu


def _round_up(x, m):
    return (x + m - 1) // m * m


# ----------------------------------------------------------------------------
# LSTM layer: grid over time-chunks, state carried in VMEM scratch.
#
# Per grid step (one chunk of tc timesteps, all Bp batch rows):
#   1. xw = sum_i x_i @ W_in_i^T + b        (one MXU matmul per input stream)
#   2. fori_loop over tc steps:  gates = xw[t] + h @ W_hh^T ; LSTM cell update
#
# refs: x_0..x_{n-1}            (tc*Bp, I_i)   row chunk (row = t*Bp + b)
#       w_in_t_0..w_in_t_{n-1}  (I_i, 4Hp)     resident (gate-padded, transposed)
#       w_hh_t                  (Hp, 4Hp)      resident
#       b                       (1, 4Hp)       resident (b_ih + b_hh, gate-padded)
#       h_all                   (tc*Bp, Hp)    output chunk
#       h_scr, c_scr            (Bp, Hp)       recurrent state (persists across grid)
#       xw_scr                  (tc*Bp, 4Hp)   hoisted input projection
# ----------------------------------------------------------------------------
def _make_lstm_kernel(n_in, Bp, tc):
    def kernel(*refs):
        x_refs = refs[:n_in]
        w_in_refs = refs[n_in:2 * n_in]
        w_hh_ref = refs[2 * n_in]
        b_ref = refs[2 * n_in + 1]
        h_all_ref = refs[2 * n_in + 2]
        h_scr, c_scr, xw_scr = refs[2 * n_in + 3:]
        Hp = w_hh_ref.shape[0]

        @pl.when(pl.program_id(0) == 0)
        def _():
            h_scr[...] = jnp.zeros_like(h_scr)
            c_scr[...] = jnp.zeros_like(c_scr)

        # Hoisted input projection for the whole chunk (MXU-friendly M = tc*Bp).
        xw = None
        for xr, wr in zip(x_refs, w_in_refs):
            part = jnp.dot(xr[...].astype(wr.dtype), wr[...],
                           preferred_element_type=jnp.float32)
            xw = part if xw is None else xw + part
        xw_scr[...] = xw + b_ref[...]

        def step(i, carry):
            off = pl.multiple_of(i * Bp, Bp)
            h = h_scr[...]
            c = c_scr[...]
            gates = xw_scr[pl.ds(off, Bp), :] + jnp.dot(
                h.astype(w_hh_ref.dtype), w_hh_ref[...],
                preferred_element_type=jnp.float32)
            # Gate blocks are Hp-wide (Hp % 128 == 0) -> lane-aligned slices.
            i_g = jax.nn.sigmoid(gates[:, 0 * Hp:1 * Hp])
            f_g = jax.nn.sigmoid(gates[:, 1 * Hp:2 * Hp])
            g_g = jnp.tanh(gates[:, 2 * Hp:3 * Hp])
            o_g = jax.nn.sigmoid(gates[:, 3 * Hp:4 * Hp])
            c_new = f_g * c + i_g * g_g
            h_new = o_g * jnp.tanh(c_new)
            h_scr[...] = h_new
            c_scr[...] = c_new
            h_all_ref[pl.ds(off, Bp), :] = h_new
            return carry

        jax.lax.fori_loop(0, tc, step, 0)

    return kernel


def lstm_layer(xs, w_in_ts, w_hh_t, b, *, Bp, tc):
    """Runs one PyTorch-semantics LSTM layer (zero initial state).

    xs: list of row-major (Tp*Bp, I_i) input streams (their projections are
        summed -> replaces the concat of (mel_hidden, context)).
    """
    n_rows = xs[0].shape[0]
    Hp = w_hh_t.shape[0]
    rows_per_chunk = tc * Bp
    n_chunks = n_rows // rows_per_chunk

    in_specs = (
        [pl.BlockSpec((rows_per_chunk, x.shape[-1]), lambda t: (t, 0)) for x in xs]
        + [pl.BlockSpec(w.shape, lambda t: (0, 0)) for w in w_in_ts]
        + [pl.BlockSpec(w_hh_t.shape, lambda t: (0, 0)),
           pl.BlockSpec(b.shape, lambda t: (0, 0))]
    )

    return pl.pallas_call(
        _make_lstm_kernel(len(xs), Bp, tc),
        out_shape=jax.ShapeDtypeStruct((n_rows, Hp), jnp.float32),
        grid=(n_chunks,),
        in_specs=in_specs,
        out_specs=pl.BlockSpec((rows_per_chunk, Hp), lambda t: (t, 0)),
        scratch_shapes=[
            pltpu.VMEM((Bp, Hp), jnp.float32),               # h state
            pltpu.VMEM((Bp, Hp), jnp.float32),               # c state
            pltpu.VMEM((rows_per_chunk, 4 * Hp), jnp.float32),  # hoisted xW
        ],
        compiler_params=pltpu.CompilerParams(
            dimension_semantics=("arbitrary",)),  # state carries across chunks
    )(*xs, *w_in_ts, w_hh_t, b)


# ----------------------------------------------------------------------------
# Head: DenseLayer (2x tanh(Linear)) + 1x1 Conv + affine coupling.
# Transposed layout: channels on sublanes, rows (T*B) on the 128-lane axis
# -> lane-dense outputs, parallel grid over row tiles.
#
# h_ref:   (Hp, n)    mel_ref: (A, n)
# w1: (H, Hp)  b1: (H,1)   w2: (H, H)  b2: (H,1)   wc: (2A, H)  bc: (2A,1)
# outputs: mel_out (A, n), log_s (A, n)
# ----------------------------------------------------------------------------
def _head_kernel(h_ref, mel_ref, w1_ref, b1_ref, w2_ref, b2_ref,
                 wc_ref, bc_ref, mel_out_ref, log_s_ref):
    A = mel_ref.shape[0]
    x = h_ref[...].astype(w1_ref.dtype)
    d1 = jnp.tanh(jnp.dot(w1_ref[...], x,
                          preferred_element_type=jnp.float32) + b1_ref[...])
    d2 = jnp.tanh(jnp.dot(w2_ref[...], d1.astype(w2_ref.dtype),
                          preferred_element_type=jnp.float32) + b2_ref[...])
    dec = jnp.dot(wc_ref[...], d2.astype(wc_ref.dtype),
                  preferred_element_type=jnp.float32) + bc_ref[...]
    log_s = dec[:A, :]                 # scaling_fn == 'exp'
    bias = dec[A:, :]
    mel_out_ref[...] = jnp.exp(log_s) * mel_ref[...] + bias
    log_s_ref[...] = log_s


def head(h_rows, mel_rows, hp, Hp, *, lane_tile=512, matmul_dtype=jnp.float32):
    n_rows = h_rows.shape[0]
    A = mel_rows.shape[-1]
    H = hp["w1"].shape[0]

    # Transpose so T*B sits on the lane axis (lane-dense stores); layout
    # plumbing done in the wrapper.
    h_t = jnp.transpose(h_rows)                                  # (Hp, N)
    m_t = jnp.transpose(mel_rows)                                # (A, N)
    n_tile = min(lane_tile, _round_up(n_rows, 128))
    n_pad = _round_up(n_rows, n_tile)
    h_t = jnp.pad(h_t, ((0, 0), (0, n_pad - n_rows)))
    m_t = jnp.pad(m_t, ((0, 0), (0, n_pad - n_rows)))

    w1 = jnp.pad(hp["w1"], ((0, 0), (0, Hp - H))).astype(matmul_dtype)  # (H, Hp)
    b1 = hp["b1"].reshape(H, 1)
    w2 = hp["w2"].astype(matmul_dtype)                                   # (H, H)
    b2 = hp["b2"].reshape(H, 1)
    wc = hp["wc"].astype(matmul_dtype)                                   # (2A, H)
    bc = hp["bc"].reshape(2 * A, 1)

    full = lambda arr: pl.BlockSpec(arr.shape, lambda i: (0, 0))

    mel_out_t, log_s_t = pl.pallas_call(
        _head_kernel,
        out_shape=(jax.ShapeDtypeStruct((A, n_pad), jnp.float32),
                   jax.ShapeDtypeStruct((A, n_pad), jnp.float32)),
        grid=(n_pad // n_tile,),
        in_specs=[
            pl.BlockSpec((Hp, n_tile), lambda i: (0, i)),
            pl.BlockSpec((A, n_tile), lambda i: (0, i)),
            full(w1), full(b1), full(w2), full(b2), full(wc), full(bc),
        ],
        out_specs=(pl.BlockSpec((A, n_tile), lambda i: (0, i)),
                   pl.BlockSpec((A, n_tile), lambda i: (0, i))),
        compiler_params=pltpu.CompilerParams(
            dimension_semantics=("parallel",)),
    )(h_t, m_t, w1, b1, w2, b2, wc, bc)

    mel_out = jnp.transpose(mel_out_t[:, :n_rows])               # (N, A)
    log_s = jnp.transpose(log_s_t[:, :n_rows])
    return mel_out, log_s


# ----------------------------------------------------------------------------
# Parameter preparation: gate-pad H -> Hp (multiple of 128), transpose,
# optionally cast matmul operands (bf16 recommended on v6e/v7x).
# ----------------------------------------------------------------------------
def _pad_gate_rows(w, H, Hp):
    """(4H, X) -> (4Hp, X): zero-pad each of the i/f/g/o gate row blocks."""
    X = w.shape[-1]
    w4 = w.reshape(4, H, X)
    return jnp.pad(w4, ((0, 0), (0, Hp - H), (0, 0))).reshape(4 * Hp, X)


def _prep_lstm(w_ih_parts, w_hh, b_ih, b_hh, in_col_pads, lane, dtype):
    H = w_hh.shape[1]
    Hp = _round_up(H, lane)
    w_in_ts = []
    for w, cp in zip(w_ih_parts, in_col_pads):
        wp = _pad_gate_rows(w, H, Hp)                       # (4Hp, I)
        if cp is not None and cp > w.shape[1]:
            wp = jnp.pad(wp, ((0, 0), (0, cp - w.shape[1])))
        w_in_ts.append(jnp.transpose(wp).astype(dtype))     # (I_pad, 4Hp)
    whh = _pad_gate_rows(w_hh, H, Hp)                       # (4Hp, H)
    whh = jnp.pad(whh, ((0, 0), (0, Hp - H)))               # (4Hp, Hp)
    w_hh_t = jnp.transpose(whh).astype(dtype)               # (Hp, 4Hp)
    b = (b_ih + b_hh).reshape(4, H)
    b = jnp.pad(b, ((0, 0), (0, Hp - H))).reshape(1, 4 * Hp).astype(jnp.float32)
    return w_in_ts, w_hh_t, b, Hp


# ----------------------------------------------------------------------------
# Full AR_Step.forward (lens=None, scaling_fn='exp', no spline flow).
# ----------------------------------------------------------------------------
def ar_step_forward(mel, context, params, *, time_chunk=32, lane=128,
                    head_lane_tile=512, matmul_dtype=jnp.float32):
    T, B, A = mel.shape
    H = params["head"]["w1"].shape[0]
    tc = max(1, min(time_chunk, T))
    Tp = _round_up(T, tc)
    Bp = _round_up(B, 8)          # sublane-pad the batch
    n_rows = Tp * Bp

    # mel0 = cat(zeros(1,B,A), mel[:-1])   (shift right in time)
    mel0 = jnp.concatenate([jnp.zeros((1, B, A), mel.dtype), mel[:-1]], axis=0)

    def pad_flat(x):  # (T, B, C) -> (Tp*Bp, C), row = t*Bp + b
        x = jnp.pad(x, ((0, Tp - T), (0, Bp - B), (0, 0)))
        return x.reshape(n_rows, x.shape[-1])

    mel_rows = pad_flat(mel)
    mel0_rows = pad_flat(mel0)
    ctx_rows = pad_flat(context)

    # ---- attr_lstm -----------------------------------------------------------
    w_ih, w_hh, b_ih, b_hh = params["attr_lstm"][0]
    w_in_ts, w_hh_t, b, Hp = _prep_lstm([w_ih], w_hh, b_ih, b_hh,
                                        [None], lane, matmul_dtype)
    h = lstm_layer([mel0_rows], w_in_ts, w_hh_t, b, Bp=Bp, tc=tc)

    # ---- stacked LSTM (concat avoided by splitting W_ih column blocks) -------
    for li, (w_ih, w_hh, b_ih, b_hh) in enumerate(params["lstm"]):
        if li == 0:
            parts = [w_ih[:, :H], w_ih[:, H:]]   # [hidden | context] columns
            col_pads = [Hp, None]
            xs = [h, ctx_rows]
        else:
            parts = [w_ih]
            col_pads = [Hp]
            xs = [h]
        w_in_ts, w_hh_t, b, Hp = _prep_lstm(parts, w_hh, b_ih, b_hh,
                                            col_pads, lane, matmul_dtype)
        h = lstm_layer(xs, w_in_ts, w_hh_t, b, Bp=Bp, tc=tc)

    # ---- head ----------------------------------------------------------------
    mel_out_rows, log_s_rows = head(h, mel_rows, params["head"], Hp,
                                    lane_tile=head_lane_tile,
                                    matmul_dtype=matmul_dtype)
    mel_out = mel_out_rows.reshape(Tp, Bp, A)[:T, :B]
    log_s = log_s_rows.reshape(Tp, Bp, A)[:T, :B]
    return mel_out, log_s


# ----------------------------------------------------------------------------
# Deterministic parameter construction (shapes per AR_Step.__init__).
# ----------------------------------------------------------------------------
def init_params(key, n_attr, n_speaker, n_text, n_hidden, n_lstm_layers):
    def nxt():
        nonlocal key
        key, sub = jax.random.split(key)
        return sub

    def lstm_p(in_dim, hid):
        return (
            0.1 * jax.random.normal(nxt(), (4 * hid, in_dim), jnp.float32),
            0.1 * jax.random.normal(nxt(), (4 * hid, hid), jnp.float32),
            0.1 * jax.random.normal(nxt(), (4 * hid,), jnp.float32),
            0.1 * jax.random.normal(nxt(), (4 * hid,), jnp.float32),
        )

    params = {
        "attr_lstm": [lstm_p(n_attr, n_hidden)],
        "lstm": [
            lstm_p(n_hidden + n_text + n_speaker if l == 0 else n_hidden, n_hidden)
            for l in range(n_lstm_layers)
        ],
        "head": {
            "w1": 0.1 * jax.random.normal(nxt(), (n_hidden, n_hidden), jnp.float32),
            "b1": 0.1 * jax.random.normal(nxt(), (n_hidden,), jnp.float32),
            "w2": 0.1 * jax.random.normal(nxt(), (n_hidden, n_hidden), jnp.float32),
            "b2": 0.1 * jax.random.normal(nxt(), (n_hidden,), jnp.float32),
            # Conv1d(n_hidden, 2*n_attr, 1): weight (2A, H, 1) -> squeeze to (2A, H)
            "wc": 0.1 * jax.random.normal(nxt(), (2 * n_attr, n_hidden), jnp.float32),
            "bc": 0.1 * jax.random.normal(nxt(), (2 * n_attr,), jnp.float32),
        },
    }
    return params


# ----------------------------------------------------------------------------
# Pure-JAX reference (mirrors PyTorch semantics) for validation.
# ----------------------------------------------------------------------------
def _ref_lstm(x, w_ih, w_hh, b_ih, b_hh):
    H = w_hh.shape[1]
    B = x.shape[1]

    def step(carry, x_t):
        h, c = carry
        gates = x_t @ w_ih.T + h @ w_hh.T + b_ih + b_hh
        i = jax.nn.sigmoid(gates[:, :H])
        f = jax.nn.sigmoid(gates[:, H:2 * H])
        g = jnp.tanh(gates[:, 2 * H:3 * H])
        o = jax.nn.sigmoid(gates[:, 3 * H:])
        c = f * c + i * g
        h = o * jnp.tanh(c)
        return (h, c), h

    init = (jnp.zeros((B, H), jnp.float32), jnp.zeros((B, H), jnp.float32))
    _, hs = jax.lax.scan(step, init, x)
    return hs


def ref_forward(mel, context, params):
    T, B, A = mel.shape
    mel0 = jnp.concatenate([jnp.zeros((1, B, A), mel.dtype), mel[:-1]], axis=0)
    mel_hidden = _ref_lstm(mel0, *params["attr_lstm"][0])
    h = jnp.concatenate([mel_hidden, context], axis=-1)
    for lp in params["lstm"]:
        h = _ref_lstm(h, *lp)
    hp = params["head"]
    d = jnp.tanh(h @ hp["w1"].T + hp["b1"])
    d = jnp.tanh(d @ hp["w2"].T + hp["b2"])
    dec = d @ hp["wc"].T + hp["bc"]
    log_s = dec[..., :A]
    s = jnp.exp(log_s)
    bias = dec[..., A:]
    return s * mel + bias, log_s


if __name__ == "__main__":
    T, B = 8, 2
    n_attr, n_speaker, n_text, n_hidden, n_lstm_layers = 4, 8, 16, 32, 2

    key = jax.random.PRNGKey(0)
    k_mel, k_ctx, k_par = jax.random.split(key, 3)
    mel = jax.random.normal(k_mel, (T, B, n_attr), jnp.float32)
    context = jax.random.normal(k_ctx, (T, B, n_text + n_speaker), jnp.float32)
    params = init_params(k_par, n_attr, n_speaker, n_text, n_hidden, n_lstm_layers)

    fwd = jax.jit(functools.partial(ar_step_forward, params=params,
                                    time_chunk=4))  # 2 T-chunks: exercises carry
    mel_out, log_s = fwd(mel, context)
    jax.block_until_ready((mel_out, log_s))

    mel_ref, log_s_ref = ref_forward(mel, context, params)
    np.testing.assert_allclose(np.asarray(mel_out), np.asarray(mel_ref),
                               rtol=1e-4, atol=1e-4)
    np.testing.assert_allclose(np.asarray(log_s), np.asarray(log_s_ref),
                               rtol=1e-4, atol=1e-4)
    print("KERNEL_OK")
</pallas_src>

<mosaic_0001>
module attributes {stable_mosaic.version = 11 : i64} {
  func.func @kernel(%arg0: i32, %arg1: memref<32x128xf32, #tpu.memory_space<vmem>>, %arg2: memref<32x24xf32, #tpu.memory_space<vmem>>, %arg3: memref<128x512xf32, #tpu.memory_space<vmem>>, %arg4: memref<24x512xf32, #tpu.memory_space<vmem>>, %arg5: memref<128x512xf32, #tpu.memory_space<vmem>>, %arg6: memref<1x512xf32, #tpu.memory_space<vmem>>, %arg7: memref<32x128xf32, #tpu.memory_space<vmem>>, %arg8: memref<8x128xf32, #tpu.memory_space<vmem>>, %arg9: memref<8x128xf32, #tpu.memory_space<vmem>>, %arg10: memref<32x512xf32, #tpu.memory_space<vmem>>) attributes {dimension_semantics = [#tpu.dimension_semantics<arbitrary>], iteration_bounds = array<i64: 2>, scalar_prefetch = 0 : i64, scratch_operands = 3 : i64, tpu.core_type = #tpu.core_type<tc>, window_params = [{transform_indices = @transform_0, window_bounds = array<i64: 32, 128>}, {transform_indices = @transform_1, window_bounds = array<i64: 32, 24>}, {pipeline_mode = #tpu.pipeline_mode<synchronous>, transform_indices = @transform_2, window_bounds = array<i64: 128, 512>}, {pipeline_mode = #tpu.pipeline_mode<synchronous>, transform_indices = @transform_3, window_bounds = array<i64: 24, 512>}, {pipeline_mode = #tpu.pipeline_mode<synchronous>, transform_indices = @transform_4, window_bounds = array<i64: 128, 512>}, {pipeline_mode = #tpu.pipeline_mode<synchronous>, transform_indices = @transform_5, window_bounds = array<i64: 1, 512>}, {transform_indices = @transform_6, window_bounds = array<i64: 32, 128>}]} {
    %c0_i32 = arith.constant 0 : i32
    %0 = arith.cmpi eq, %arg0, %c0_i32 : i32
    %1 = arith.extui %0 : i1 to i32
    %c0_i32_0 = arith.constant 0 : i32
    %2 = arith.cmpi ne, %1, %c0_i32_0 : i32
    scf.if %2 {
      %cst_15 = arith.constant 0.000000e+00 : f32
      %15 = vector.broadcast %cst_15 : f32 to vector<8x128xf32>
      %c0_16 = arith.constant 0 : index
      %c0_17 = arith.constant 0 : index
      %16 = vector.load %arg8[%c0_16, %c0_17] : memref<8x128xf32, #tpu.memory_space<vmem>>, vector<8x128xf32>
      tpu.vector_store %arg8[%c0_16, %c0_17], %15 {strides = array<i32>} : memref<8x128xf32, #tpu.memory_space<vmem>>, vector<8x128xf32>,
      %cst_18 = arith.constant 0.000000e+00 : f32
      %17 = vector.broadcast %cst_18 : f32 to vector<8x128xf32>
      %c0_19 = arith.constant 0 : index
      %c0_20 = arith.constant 0 : index
      %18 = vector.load %arg9[%c0_19, %c0_20] : memref<8x128xf32, #tpu.memory_space<vmem>>, vector<8x128xf32>
      tpu.vector_store %arg9[%c0_19, %c0_20], %17 {strides = array<i32>} : memref<8x128xf32, #tpu.memory_space<vmem>>, vector<8x128xf32>,
    } else {
    }
    %c0 = arith.constant 0 : index
    %c0_1 = arith.constant 0 : index
    %3 = vector.load %arg1[%c0, %c0_1] : memref<32x128xf32, #tpu.memory_space<vmem>>, vector<32x128xf32>
    %c0_2 = arith.constant 0 : index
    %c0_3 = arith.constant 0 : index
    %4 = vector.load %arg3[%c0_2, %c0_3] : memref<128x512xf32, #tpu.memory_space<vmem>>, vector<128x512xf32>
    %cst = arith.constant dense<0.000000e+00> : vector<32x512xf32>
    %5 = tpu.matmul %3, %4, %cst {dimension_numbers = #tpu.dot_dimension_numbers<[1], [0], [0], [1], [0, 0, 1, 1], [], []>} : vector<32x128xf32>, vector<128x512xf32>, vector<32x512xf32> -> vector<32x512xf32>
    %c0_4 = arith.constant 0 : index
    %c0_5 = arith.constant 0 : index
    %6 = vector.load %arg2[%c0_4, %c0_5] : memref<32x24xf32, #tpu.memory_space<vmem>>, vector<32x24xf32>
    %c0_6 = arith.constant 0 : index
    %c0_7 = arith.constant 0 : index
    %7 = vector.load %arg4[%c0_6, %c0_7] : memref<24x512xf32, #tpu.memory_space<vmem>>, vector<24x512xf32>
    %cst_8 = arith.constant dense<0.000000e+00> : vector<32x512xf32>
    %8 = tpu.matmul %6, %7, %cst_8 {dimension_numbers = #tpu.dot_dimension_numbers<[1], [0], [0], [1], [0, 0, 1, 1], [], []>} : vector<32x24xf32>, vector<24x512xf32>, vector<32x512xf32> -> vector<32x512xf32>
    %9 = arith.addf %5, %8 : vector<32x512xf32>
    %c0_9 = arith.constant 0 : index
    %c0_10 = arith.constant 0 : index
    %10 = vector.load %arg6[%c0_9, %c0_10] : memref<1x512xf32, #tpu.memory_space<vmem>>, vector<1x512xf32>
    %11 = vector.broadcast %10 : vector<1x512xf32> to vector<32x512xf32>
    %12 = arith.addf %9, %11 : vector<32x512xf32>
    %c0_11 = arith.constant 0 : index
    %c0_12 = arith.constant 0 : index
    %13 = vector.load %arg10[%c0_11, %c0_12] : memref<32x512xf32, #tpu.memory_space<vmem>>, vector<32x512xf32>
    tpu.vector_store %arg10[%c0_11, %c0_12], %12 {strides = array<i32>} : memref<32x512xf32, #tpu.memory_space<vmem>>, vector<32x512xf32>,
    %c0_i32_13 = arith.constant 0 : i32
    %c4_i32 = arith.constant 4 : i32
    %14 = arith.addi %c0_i32_13, %c4_i32 : i32
    %c1_i32 = arith.constant 1 : i32
    scf.for %arg11 = %c0_i32_13 to %14 step %c1_i32  : i32 {
      %c8_i32 = arith.constant 8 : i32
      %15 = arith.muli %arg11, %c8_i32 : i32
      %16 = tpu.assume_multiple %15, 8 : i32
      %c0_15 = arith.constant 0 : index
      %c0_16 = arith.constant 0 : index
      %17 = vector.load %arg8[%c0_15, %c0_16] : memref<8x128xf32, #tpu.memory_space<vmem>>, vector<8x128xf32>
      %c0_17 = arith.constant 0 : index
      %c0_18 = arith.constant 0 : index
      %18 = vector.load %arg9[%c0_17, %c0_18] : memref<8x128xf32, #tpu.memory_space<vmem>>, vector<8x128xf32>
      %19 = arith.index_cast %16 : i32 to index
      %c0_19 = arith.constant 0 : index
      %20 = vector.load %arg10[%19, %c0_19] : memref<32x512xf32, #tpu.memory_space<vmem>>, vector<8x512xf32>
      %c0_20 = arith.constant 0 : index
      %c0_21 = arith.constant 0 : index
      %21 = vector.load %arg5[%c0_20, %c0_21] : memref<128x512xf32, #tpu.memory_space<vmem>>, vector<128x512xf32>
      %cst_22 = arith.constant dense<0.000000e+00> : vector<8x512xf32>
      %22 = tpu.matmul %17, %21, %cst_22 {dimension_numbers = #tpu.dot_dimension_numbers<[1], [0], [0], [1], [0, 0, 1, 1], [], []>} : vector<8x128xf32>, vector<128x512xf32>, vector<8x512xf32> -> vector<8x512xf32>
      %23 = arith.addf %20, %22 : vector<8x512xf32>
      %24 = vector.extract_strided_slice %23 {offsets = [0, 0], sizes = [8, 128], strides = [1, 1]} : vector<8x512xf32> to vector<8x128xf32>
      %25 = arith.negf %24 : vector<8x128xf32>
      %26 = math.exp %25 : vector<8x128xf32>
      %cst_23 = arith.constant 1.000000e+00 : f32
      %27 = vector.broadcast %cst_23 : f32 to vector<8x128xf32>
      %28 = arith.addf %27, %26 : vector<8x128xf32>
      %29 = arith.divf %27, %28 : vector<8x128xf32>
      %30 = vector.extract_strided_slice %23 {offsets = [0, 128], sizes = [8, 128], strides = [1, 1]} : vector<8x512xf32> to vector<8x128xf32>
      %31 = arith.negf %30 : vector<8x128xf32>
      %32 = math.exp %31 : vector<8x128xf32>
      %cst_24 = arith.constant 1.000000e+00 : f32
      %33 = vector.broadcast %cst_24 : f32 to vector<8x128xf32>
      %34 = arith.addf %33, %32 : vector<8x128xf32>
      %35 = arith.divf %33, %34 : vector<8x128xf32>
      %36 = vector.extract_strided_slice %23 {offsets = [0, 256], sizes = [8, 128], strides = [1, 1]} : vector<8x512xf32> to vector<8x128xf32>
      %37 = math.tanh %36 : vector<8x128xf32>
      %38 = vector.extract_strided_slice %23 {offsets = [0, 384], sizes = [8, 128], strides = [1, 1]} : vector<8x512xf32> to vector<8x128xf32>
      %39 = arith.negf %38 : vector<8x128xf32>
      %40 = math.exp %39 : vector<8x128xf32>
      %cst_25 = arith.constant 1.000000e+00 : f32
      %41 = vector.broadcast %cst_25 : f32 to vector<8x128xf32>
      %42 = arith.addf %41, %40 : vector<8x128xf32>
      %43 = arith.divf %41, %42 : vector<8x128xf32>
      %44 = arith.mulf %35, %18 : vector<8x128xf32>
      %45 = arith.mulf %29, %37 : vector<8x128xf32>
      %46 = arith.addf %44, %45 : vector<8x128xf32>
      %47 = math.tanh %46 : vector<8x128xf32>
      %48 = arith.mulf %43, %47 : vector<8x128xf32>
      %c0_26 = arith.constant 0 : index
      %c0_27 = arith.constant 0 : index
      %49 = vector.load %arg8[%c0_26, %c0_27] : memref<8x128xf32, #tpu.memory_space<vmem>>, vector<8x128xf32>
      tpu.vector_store %arg8[%c0_26, %c0_27], %48 {strides = array<i32>} : memref<8x128xf32, #tpu.memory_space<vmem>>, vector<8x128xf32>,
      %c0_28 = arith.constant 0 : index
      %c0_29 = arith.constant 0 : index
      %50 = vector.load %arg9[%c0_28, %c0_29] : memref<8x128xf32, #tpu.memory_space<vmem>>, vector<8x128xf32>
      tpu.vector_store %arg9[%c0_28, %c0_29], %46 {strides = array<i32>} : memref<8x128xf32, #tpu.memory_space<vmem>>, vector<8x128xf32>,
      %51 = arith.index_cast %16 : i32 to index
      %c0_30 = arith.constant 0 : index
      %52 = vector.load %arg7[%51, %c0_30] : memref<32x128xf32, #tpu.memory_space<vmem>>, vector<8x128xf32>
      tpu.vector_store %arg7[%51, %c0_30], %48 {strides = array<i32>} : memref<32x128xf32, #tpu.memory_space<vmem>>, vector<8x128xf32>,
    }
    %c4_i32_14 = arith.constant 4 : i32
    return
  }
  func.func @transform_0(%arg0: i32) -> (i32, i32) {
    %c0_i32 = arith.constant 0 : i32
    %c0_i32_0 = arith.constant 0 : i32
    return %arg0, %c0_i32 : i32, i32
  }
  func.func @transform_1(%arg0: i32) -> (i32, i32) {
    %c0_i32 = arith.constant 0 : i32
    %c0_i32_0 = arith.constant 0 : i32
    return %arg0, %c0_i32 : i32, i32
  }
  func.func @transform_2(%arg0: i32) -> (i32, i32) {
    %c0_i32 = arith.constant 0 : i32
    %c0_i32_0 = arith.constant 0 : i32
    %c0_i32_1 = arith.constant 0 : i32
    return %c0_i32, %c0_i32_0 : i32, i32
  }
  func.func @transform_3(%arg0: i32) -> (i32, i32) {
    %c0_i32 = arith.constant 0 : i32
    %c0_i32_0 = arith.constant 0 : i32
    %c0_i32_1 = arith.constant 0 : i32
    return %c0_i32, %c0_i32_0 : i32, i32
  }
  func.func @transform_4(%arg0: i32) -> (i32, i32) {
    %c0_i32 = arith.constant 0 : i32
    %c0_i32_0 = arith.constant 0 : i32
    %c0_i32_1 = arith.constant 0 : i32
    return %c0_i32, %c0_i32_0 : i32, i32
  }
  func.func @transform_5(%arg0: i32) -> (i32, i32) {
    %c0_i32 = arith.constant 0 : i32
    %c0_i32_0 = arith.constant 0 : i32
    %c0_i32_1 = arith.constant 0 : i32
    return %c0_i32, %c0_i32_0 : i32, i32
  }
  func.func @transform_6(%arg0: i32) -> (i32, i32) {
    %c0_i32 = arith.constant 0 : i32
    %c0_i32_0 = arith.constant 0 : i32
    return %arg0, %c0_i32 : i32, i32
  }
}

module attributes {stable_mosaic.version = 11 : i64} {
  func.func @kernel(%arg0: i32, %arg1: memref<32x4xf32, #tpu.memory_space<vmem>>, %arg2: memref<4x512xf32, #tpu.memory_space<vmem>>, %arg3: memref<128x512xf32, #tpu.memory_space<vmem>>, %arg4: memref<1x512xf32, #tpu.memory_space<vmem>>, %arg5: memref<32x128xf32, #tpu.memory_space<vmem>>, %arg6: memref<8x128xf32, #tpu.memory_space<vmem>>, %arg7: memref<8x128xf32, #tpu.memory_space<vmem>>, %arg8: memref<32x512xf32, #tpu.memory_space<vmem>>) attributes {dimension_semantics = [#tpu.dimension_semantics<arbitrary>], iteration_bounds = array<i64: 2>, scalar_prefetch = 0 : i64, scratch_operands = 3 : i64, tpu.core_type = #tpu.core_type<tc>, window_params = [{transform_indices = @transform_0, window_bounds = array<i64: 32, 4>}, {pipeline_mode = #tpu.pipeline_mode<synchronous>, transform_indices = @transform_1, window_bounds = array<i64: 4, 512>}, {pipeline_mode = #tpu.pipeline_mode<synchronous>, transform_indices = @transform_2, window_bounds = array<i64: 128, 512>}, {pipeline_mode = #tpu.pipeline_mode<synchronous>, transform_indices = @transform_3, window_bounds = array<i64: 1, 512>}, {transform_indices = @transform_4, window_bounds = array<i64: 32, 128>}]} {
    %c0_i32 = arith.constant 0 : i32
    %0 = arith.cmpi eq, %arg0, %c0_i32 : i32
    %1 = arith.extui %0 : i1 to i32
    %c0_i32_0 = arith.constant 0 : i32
    %2 = arith.cmpi ne, %1, %c0_i32_0 : i32
    scf.if %2 {
      %cst_10 = arith.constant 0.000000e+00 : f32
      %11 = vector.broadcast %cst_10 : f32 to vector<8x128xf32>
      %c0_11 = arith.constant 0 : index
      %c0_12 = arith.constant 0 : index
      %12 = vector.load %arg6[%c0_11, %c0_12] : memref<8x128xf32, #tpu.memory_space<vmem>>, vector<8x128xf32>
      tpu.vector_store %arg6[%c0_11, %c0_12], %11 {strides = array<i32>} : memref<8x128xf32, #tpu.memory_space<vmem>>, vector<8x128xf32>,
      %cst_13 = arith.constant 0.000000e+00 : f32
      %13 = vector.broadcast %cst_13 : f32 to vector<8x128xf32>
      %c0_14 = arith.constant 0 : index
      %c0_15 = arith.constant 0 : index
      %14 = vector.load %arg7[%c0_14, %c0_15] : memref<8x128xf32, #tpu.memory_space<vmem>>, vector<8x128xf32>
      tpu.vector_store %arg7[%c0_14, %c0_15], %13 {strides = array<i32>} : memref<8x128xf32, #tpu.memory_space<vmem>>, vector<8x128xf32>,
    } else {
    }
    %c0 = arith.constant 0 : index
    %c0_1 = arith.constant 0 : index
    %3 = vector.load %arg1[%c0, %c0_1] : memref<32x4xf32, #tpu.memory_space<vmem>>, vector<32x4xf32>
    %c0_2 = arith.constant 0 : index
    %c0_3 = arith.constant 0 : index
    %4 = vector.load %arg2[%c0_2, %c0_3] : memref<4x512xf32, #tpu.memory_space<vmem>>, vector<4x512xf32>
    %cst = arith.constant dense<0.000000e+00> : vector<32x512xf32>
    %5 = tpu.matmul %3, %4, %cst {dimension_numbers = #tpu.dot_dimension_numbers<[1], [0], [0], [1], [0, 0, 1, 1], [], []>} : vector<32x4xf32>, vector<4x512xf32>, vector<32x512xf32> -> vector<32x512xf32>
    %c0_4 = arith.constant 0 : index
    %c0_5 = arith.constant 0 : index
    %6 = vector.load %arg4[%c0_4, %c0_5] : memref<1x512xf32, #tpu.memory_space<vmem>>, vector<1x512xf32>
    %7 = vector.broadcast %6 : vector<1x512xf32> to vector<32x512xf32>
    %8 = arith.addf %5, %7 : vector<32x512xf32>
    %c0_6 = arith.constant 0 : index
    %c0_7 = arith.constant 0 : index
    %9 = vector.load %arg8[%c0_6, %c0_7] : memref<32x512xf32, #tpu.memory_space<vmem>>, vector<32x512xf32>
    tpu.vector_store %arg8[%c0_6, %c0_7], %8 {strides = array<i32>} : memref<32x512xf32, #tpu.memory_space<vmem>>, vector<32x512xf32>,
    %c0_i32_8 = arith.constant 0 : i32
    %c4_i32 = arith.constant 4 : i32
    %10 = arith.addi %c0_i32_8, %c4_i32 : i32
    %c1_i32 = arith.constant 1 : i32
    scf.for %arg9 = %c0_i32_8 to %10 step %c1_i32  : i32 {
      %c8_i32 = arith.constant 8 : i32
      %11 = arith.muli %arg9, %c8_i32 : i32
      %12 = tpu.assume_multiple %11, 8 : i32
      %c0_10 = arith.constant 0 : index
      %c0_11 = arith.constant 0 : index
      %13 = vector.load %arg6[%c0_10, %c0_11] : memref<8x128xf32, #tpu.memory_space<vmem>>, vector<8x128xf32>
      %c0_12 = arith.constant 0 : index
      %c0_13 = arith.constant 0 : index
      %14 = vector.load %arg7[%c0_12, %c0_13] : memref<8x128xf32, #tpu.memory_space<vmem>>, vector<8x128xf32>
      %15 = arith.index_cast %12 : i32 to index
      %c0_14 = arith.constant 0 : index
      %16 = vector.load %arg8[%15, %c0_14] : memref<32x512xf32, #tpu.memory_space<vmem>>, vector<8x512xf32>
      %c0_15 = arith.constant 0 : index
      %c0_16 = arith.constant 0 : index
      %17 = vector.load %arg3[%c0_15, %c0_16] : memref<128x512xf32, #tpu.memory_space<vmem>>, vector<128x512xf32>
      %cst_17 = arith.constant dense<0.000000e+00> : vector<8x512xf32>
      %18 = tpu.matmul %13, %17, %cst_17 {dimension_numbers = #tpu.dot_dimension_numbers<[1], [0], [0], [1], [0, 0, 1, 1], [], []>} : vector<8x128xf32>, vector<128x512xf32>, vector<8x512xf32> -> vector<8x512xf32>
      %19 = arith.addf %16, %18 : vector<8x512xf32>
      %20 = vector.extract_strided_slice %19 {offsets = [0, 0], sizes = [8, 128], strides = [1, 1]} : vector<8x512xf32> to vector<8x128xf32>
      %21 = arith.negf %20 : vector<8x128xf32>
      %22 = math.exp %21 : vector<8x128xf32>
      %cst_18 = arith.constant 1.000000e+00 : f32
      %23 = vector.broadcast %cst_18 : f32 to vector<8x128xf32>
      %24 = arith.addf %23, %22 : vector<8x128xf32>
      %25 = arith.divf %23, %24 : vector<8x128xf32>
      %26 = vector.extract_strided_slice %19 {offsets = [0, 128], sizes = [8, 128], strides = [1, 1]} : vector<8x512xf32> to vector<8x128xf32>
      %27 = arith.negf %26 : vector<8x128xf32>
      %28 = math.exp %27 : vector<8x128xf32>
      %cst_19 = arith.constant 1.000000e+00 : f32
      %29 = vector.broadcast %cst_19 : f32 to vector<8x128xf32>
      %30 = arith.addf %29, %28 : vector<8x128xf32>
      %31 = arith.divf %29, %30 : vector<8x128xf32>
      %32 = vector.extract_strided_slice %19 {offsets = [0, 256], sizes = [8, 128], strides = [1, 1]} : vector<8x512xf32> to vector<8x128xf32>
      %33 = math.tanh %32 : vector<8x128xf32>
      %34 = vector.extract_strided_slice %19 {offsets = [0, 384], sizes = [8, 128], strides = [1, 1]} : vector<8x512xf32> to vector<8x128xf32>
      %35 = arith.negf %34 : vector<8x128xf32>
      %36 = math.exp %35 : vector<8x128xf32>
      %cst_20 = arith.constant 1.000000e+00 : f32
      %37 = vector.broadcast %cst_20 : f32 to vector<8x128xf32>
      %38 = arith.addf %37, %36 : vector<8x128xf32>
      %39 = arith.divf %37, %38 : vector<8x128xf32>
      %40 = arith.mulf %31, %14 : vector<8x128xf32>
      %41 = arith.mulf %25, %33 : vector<8x128xf32>
      %42 = arith.addf %40, %41 : vector<8x128xf32>
      %43 = math.tanh %42 : vector<8x128xf32>
      %44 = arith.mulf %39, %43 : vector<8x128xf32>
      %c0_21 = arith.constant 0 : index
      %c0_22 = arith.constant 0 : index
      %45 = vector.load %arg6[%c0_21, %c0_22] : memref<8x128xf32, #tpu.memory_space<vmem>>, vector<8x128xf32>
      tpu.vector_store %arg6[%c0_21, %c0_22], %44 {strides = array<i32>} : memref<8x128xf32, #tpu.memory_space<vmem>>, vector<8x128xf32>,
      %c0_23 = arith.constant 0 : index
      %c0_24 = arith.constant 0 : index
      %46 = vector.load %arg7[%c0_23, %c0_24] : memref<8x128xf32, #tpu.memory_space<vmem>>, vector<8x128xf32>
      tpu.vector_store %arg7[%c0_23, %c0_24], %42 {strides = array<i32>} : memref<8x128xf32, #tpu.memory_space<vmem>>, vector<8x128xf32>,
      %47 = arith.index_cast %12 : i32 to index
      %c0_25 = arith.constant 0 : index
      %48 = vector.load %arg5[%47, %c0_25] : memref<32x128xf32, #tpu.memory_space<vmem>>, vector<8x128xf32>
      tpu.vector_store %arg5[%47, %c0_25], %44 {strides = array<i32>} : memref<32x128xf32, #tpu.memory_space<vmem>>, vector<8x128xf32>,
    }
    %c4_i32_9 = arith.constant 4 : i32
    return
  }
  func.func @transform_0(%arg0: i32) -> (i32, i32) {
    %c0_i32 = arith.constant 0 : i32
    %c0_i32_0 = arith.constant 0 : i32
    return %arg0, %c0_i32 : i32, i32
  }
  func.func @transform_1(%arg0: i32) -> (i32, i32) {
    %c0_i32 = arith.constant 0 : i32
    %c0_i32_0 = arith.constant 0 : i32
    %c0_i32_1 = arith.constant 0 : i32
    return %c0_i32, %c0_i32_0 : i32, i32
  }
  func.func @transform_2(%arg0: i32) -> (i32, i32) {
    %c0_i32 = arith.constant 0 : i32
    %c0_i32_0 = arith.constant 0 : i32
    %c0_i32_1 = arith.constant 0 : i32
    return %c0_i32, %c0_i32_0 : i32, i32
  }
  func.func @transform_3(%arg0: i32) -> (i32, i32) {
    %c0_i32 = arith.constant 0 : i32
    %c0_i32_0 = arith.constant 0 : i32
    %c0_i32_1 = arith.constant 0 : i32
    return %c0_i32, %c0_i32_0 : i32, i32
  }
  func.func @transform_4(%arg0: i32) -> (i32, i32) {
    %c0_i32 = arith.constant 0 : i32
    %c0_i32_0 = arith.constant 0 : i32
    return %arg0, %c0_i32 : i32, i32
  }
}

module attributes {stable_mosaic.version = 11 : i64} {
  func.func @kernel(%arg0: i32, %arg1: memref<32x128xf32, #tpu.memory_space<vmem>>, %arg2: memref<128x512xf32, #tpu.memory_space<vmem>>, %arg3: memref<128x512xf32, #tpu.memory_space<vmem>>, %arg4: memref<1x512xf32, #tpu.memory_space<vmem>>, %arg5: memref<32x128xf32, #tpu.memory_space<vmem>>, %arg6: memref<8x128xf32, #tpu.memory_space<vmem>>, %arg7: memref<8x128xf32, #tpu.memory_space<vmem>>, %arg8: memref<32x512xf32, #tpu.memory_space<vmem>>) attributes {dimension_semantics = [#tpu.dimension_semantics<arbitrary>], iteration_bounds = array<i64: 2>, scalar_prefetch = 0 : i64, scratch_operands = 3 : i64, tpu.core_type = #tpu.core_type<tc>, window_params = [{transform_indices = @transform_0, window_bounds = array<i64: 32, 128>}, {pipeline_mode = #tpu.pipeline_mode<synchronous>, transform_indices = @transform_1, window_bounds = array<i64: 128, 512>}, {pipeline_mode = #tpu.pipeline_mode<synchronous>, transform_indices = @transform_2, window_bounds = array<i64: 128, 512>}, {pipeline_mode = #tpu.pipeline_mode<synchronous>, transform_indices = @transform_3, window_bounds = array<i64: 1, 512>}, {transform_indices = @transform_4, window_bounds = array<i64: 32, 128>}]} {
    %c0_i32 = arith.constant 0 : i32
    %0 = arith.cmpi eq, %arg0, %c0_i32 : i32
    %1 = arith.extui %0 : i1 to i32
    %c0_i32_0 = arith.constant 0 : i32
    %2 = arith.cmpi ne, %1, %c0_i32_0 : i32
    scf.if %2 {
      %cst_10 = arith.constant 0.000000e+00 : f32
      %11 = vector.broadcast %cst_10 : f32 to vector<8x128xf32>
      %c0_11 = arith.constant 0 : index
      %c0_12 = arith.constant 0 : index
      %12 = vector.load %arg6[%c0_11, %c0_12] : memref<8x128xf32, #tpu.memory_space<vmem>>, vector<8x128xf32>
      tpu.vector_store %arg6[%c0_11, %c0_12], %11 {strides = array<i32>} : memref<8x128xf32, #tpu.memory_space<vmem>>, vector<8x128xf32>,
      %cst_13 = arith.constant 0.000000e+00 : f32
      %13 = vector.broadcast %cst_13 : f32 to vector<8x128xf32>
      %c0_14 = arith.constant 0 : index
      %c0_15 = arith.constant 0 : index
      %14 = vector.load %arg7[%c0_14, %c0_15] : memref<8x128xf32, #tpu.memory_space<vmem>>, vector<8x128xf32>
      tpu.vector_store %arg7[%c0_14, %c0_15], %13 {strides = array<i32>} : memref<8x128xf32, #tpu.memory_space<vmem>>, vector<8x128xf32>,
    } else {
    }
    %c0 = arith.constant 0 : index
    %c0_1 = arith.constant 0 : index
    %3 = vector.load %arg1[%c0, %c0_1] : memref<32x128xf32, #tpu.memory_space<vmem>>, vector<32x128xf32>
    %c0_2 = arith.constant 0 : index
    %c0_3 = arith.constant 0 : index
    %4 = vector.load %arg2[%c0_2, %c0_3] : memref<128x512xf32, #tpu.memory_space<vmem>>, vector<128x512xf32>
    %cst = arith.constant dense<0.000000e+00> : vector<32x512xf32>
    %5 = tpu.matmul %3, %4, %cst {dimension_numbers = #tpu.dot_dimension_numbers<[1], [0], [0], [1], [0, 0, 1, 1], [], []>} : vector<32x128xf32>, vector<128x512xf32>, vector<32x512xf32> -> vector<32x512xf32>
    %c0_4 = arith.constant 0 : index
    %c0_5 = arith.constant 0 : index
    %6 = vector.load %arg4[%c0_4, %c0_5] : memref<1x512xf32, #tpu.memory_space<vmem>>, vector<1x512xf32>
    %7 = vector.broadcast %6 : vector<1x512xf32> to vector<32x512xf32>
    %8 = arith.addf %5, %7 : vector<32x512xf32>
    %c0_6 = arith.constant 0 : index
    %c0_7 = arith.constant 0 : index
    %9 = vector.load %arg8[%c0_6, %c0_7] : memref<32x512xf32, #tpu.memory_space<vmem>>, vector<32x512xf32>
    tpu.vector_store %arg8[%c0_6, %c0_7], %8 {strides = array<i32>} : memref<32x512xf32, #tpu.memory_space<vmem>>, vector<32x512xf32>,
    %c0_i32_8 = arith.constant 0 : i32
    %c4_i32 = arith.constant 4 : i32
    %10 = arith.addi %c0_i32_8, %c4_i32 : i32
    %c1_i32 = arith.constant 1 : i32
    scf.for %arg9 = %c0_i32_8 to %10 step %c1_i32  : i32 {
      %c8_i32 = arith.constant 8 : i32
      %11 = arith.muli %arg9, %c8_i32 : i32
      %12 = tpu.assume_multiple %11, 8 : i32
      %c0_10 = arith.constant 0 : index
      %c0_11 = arith.constant 0 : index
      %13 = vector.load %arg6[%c0_10, %c0_11] : memref<8x128xf32, #tpu.memory_space<vmem>>, vector<8x128xf32>
      %c0_12 = arith.constant 0 : index
      %c0_13 = arith.constant 0 : index
      %14 = vector.load %arg7[%c0_12, %c0_13] : memref<8x128xf32, #tpu.memory_space<vmem>>, vector<8x128xf32>
      %15 = arith.index_cast %12 : i32 to index
      %c0_14 = arith.constant 0 : index
      %16 = vector.load %arg8[%15, %c0_14] : memref<32x512xf32, #tpu.memory_space<vmem>>, vector<8x512xf32>
      %c0_15 = arith.constant 0 : index
      %c0_16 = arith.constant 0 : index
      %17 = vector.load %arg3[%c0_15, %c0_16] : memref<128x512xf32, #tpu.memory_space<vmem>>, vector<128x512xf32>
      %cst_17 = arith.constant dense<0.000000e+00> : vector<8x512xf32>
      %18 = tpu.matmul %13, %17, %cst_17 {dimension_numbers = #tpu.dot_dimension_numbers<[1], [0], [0], [1], [0, 0, 1, 1], [], []>} : vector<8x128xf32>, vector<128x512xf32>, vector<8x512xf32> -> vector<8x512xf32>
      %19 = arith.addf %16, %18 : vector<8x512xf32>
      %20 = vector.extract_strided_slice %19 {offsets = [0, 0], sizes = [8, 128], strides = [1, 1]} : vector<8x512xf32> to vector<8x128xf32>
      %21 = arith.negf %20 : vector<8x128xf32>
      %22 = math.exp %21 : vector<8x128xf32>
      %cst_18 = arith.constant 1.000000e+00 : f32
      %23 = vector.broadcast %cst_18 : f32 to vector<8x128xf32>
      %24 = arith.addf %23, %22 : vector<8x128xf32>
      %25 = arith.divf %23, %24 : vector<8x128xf32>
      %26 = vector.extract_strided_slice %19 {offsets = [0, 128], sizes = [8, 128], strides = [1, 1]} : vector<8x512xf32> to vector<8x128xf32>
      %27 = arith.negf %26 : vector<8x128xf32>
      %28 = math.exp %27 : vector<8x128xf32>
      %cst_19 = arith.constant 1.000000e+00 : f32
      %29 = vector.broadcast %cst_19 : f32 to vector<8x128xf32>
      %30 = arith.addf %29, %28 : vector<8x128xf32>
      %31 = arith.divf %29, %30 : vector<8x128xf32>
      %32 = vector.extract_strided_slice %19 {offsets = [0, 256], sizes = [8, 128], strides = [1, 1]} : vector<8x512xf32> to vector<8x128xf32>
      %33 = math.tanh %32 : vector<8x128xf32>
      %34 = vector.extract_strided_slice %19 {offsets = [0, 384], sizes = [8, 128], strides = [1, 1]} : vector<8x512xf32> to vector<8x128xf32>
      %35 = arith.negf %34 : vector<8x128xf32>
      %36 = math.exp %35 : vector<8x128xf32>
      %cst_20 = arith.constant 1.000000e+00 : f32
      %37 = vector.broadcast %cst_20 : f32 to vector<8x128xf32>
      %38 = arith.addf %37, %36 : vector<8x128xf32>
      %39 = arith.divf %37, %38 : vector<8x128xf32>
      %40 = arith.mulf %31, %14 : vector<8x128xf32>
      %41 = arith.mulf %25, %33 : vector<8x128xf32>
      %42 = arith.addf %40, %41 : vector<8x128xf32>
      %43 = math.tanh %42 : vector<8x128xf32>
      %44 = arith.mulf %39, %43 : vector<8x128xf32>
      %c0_21 = arith.constant 0 : index
      %c0_22 = arith.constant 0 : index
      %45 = vector.load %arg6[%c0_21, %c0_22] : memref<8x128xf32, #tpu.memory_space<vmem>>, vector<8x128xf32>
      tpu.vector_store %arg6[%c0_21, %c0_22], %44 {strides = array<i32>} : memref<8x128xf32, #tpu.memory_space<vmem>>, vector<8x128xf32>,
      %c0_23 = arith.constant 0 : index
      %c0_24 = arith.constant 0 : index
      %46 = vector.load %arg7[%c0_23, %c0_24] : memref<8x128xf32, #tpu.memory_space<vmem>>, vector<8x128xf32>
      tpu.vector_store %arg7[%c0_23, %c0_24], %42 {strides = array<i32>} : memref<8x128xf32, #tpu.memory_space<vmem>>, vector<8x128xf32>,
      %47 = arith.index_cast %12 : i32 to index
      %c0_25 = arith.constant 0 : index
      %48 = vector.load %arg5[%47, %c0_25] : memref<32x128xf32, #tpu.memory_space<vmem>>, vector<8x128xf32>
      tpu.vector_store %arg5[%47, %c0_25], %44 {strides = array<i32>} : memref<32x128xf32, #tpu.memory_space<vmem>>, vector<8x128xf32>,
    }
    %c4_i32_9 = arith.constant 4 : i32
    return
  }
  func.func @transform_0(%arg0: i32) -> (i32, i32) {
    %c0_i32 = arith.constant 0 : i32
    %c0_i32_0 = arith.constant 0 : i32
    return %arg0, %c0_i32 : i32, i32
  }
  func.func @transform_1(%arg0: i32) -> (i32, i32) {
    %c0_i32 = arith.constant 0 : i32
    %c0_i32_0 = arith.constant 0 : i32
    %c0_i32_1 = arith.constant 0 : i32
    return %c0_i32, %c0_i32_0 : i32, i32
  }
  func.func @transform_2(%arg0: i32) -> (i32, i32) {
    %c0_i32 = arith.constant 0 : i32
    %c0_i32_0 = arith.constant 0 : i32
    %c0_i32_1 = arith.constant 0 : i32
    return %c0_i32, %c0_i32_0 : i32, i32
  }
  func.func @transform_3(%arg0: i32) -> (i32, i32) {
    %c0_i32 = arith.constant 0 : i32
    %c0_i32_0 = arith.constant 0 : i32
    %c0_i32_1 = arith.constant 0 : i32
    return %c0_i32, %c0_i32_0 : i32, i32
  }
  func.func @transform_4(%arg0: i32) -> (i32, i32) {
    %c0_i32 = arith.constant 0 : i32
    %c0_i32_0 = arith.constant 0 : i32
    return %arg0, %c0_i32 : i32, i32
  }
}

module attributes {stable_mosaic.version = 11 : i64} {
  func.func @_head_kernel(%arg0: i32, %arg1: memref<128x128xf32, #tpu.memory_space<vmem>>, %arg2: memref<4x128xf32, #tpu.memory_space<vmem>>, %arg3: memref<32x128xf32, #tpu.memory_space<vmem>>, %arg4: memref<32x1xf32, #tpu.memory_space<vmem>>, %arg5: memref<32x32xf32, #tpu.memory_space<vmem>>, %arg6: memref<32x1xf32, #tpu.memory_space<vmem>>, %arg7: memref<8x32xf32, #tpu.memory_space<vmem>>, %arg8: memref<8x1xf32, #tpu.memory_space<vmem>>, %arg9: memref<4x128xf32, #tpu.memory_space<vmem>>, %arg10: memref<4x128xf32, #tpu.memory_space<vmem>>) attributes {dimension_semantics = [#tpu.dimension_semantics<parallel>], iteration_bounds = array<i64: 1>, scalar_prefetch = 0 : i64, scratch_operands = 0 : i64, tpu.core_type = #tpu.core_type<tc>, window_params = [{transform_indices = @transform_0, window_bounds = array<i64: 128, 128>}, {transform_indices = @transform_1, window_bounds = array<i64: 4, 128>}, {pipeline_mode = #tpu.pipeline_mode<synchronous>, transform_indices = @transform_2, window_bounds = array<i64: 32, 128>}, {pipeline_mode = #tpu.pipeline_mode<synchronous>, transform_indices = @transform_3, window_bounds = array<i64: 32, 1>}, {pipeline_mode = #tpu.pipeline_mode<synchronous>, transform_indices = @transform_4, window_bounds = array<i64: 32, 32>}, {pipeline_mode = #tpu.pipeline_mode<synchronous>, transform_indices = @transform_5, window_bounds = array<i64: 32, 1>}, {pipeline_mode = #tpu.pipeline_mode<synchronous>, transform_indices = @transform_6, window_bounds = array<i64: 8, 32>}, {pipeline_mode = #tpu.pipeline_mode<synchronous>, transform_indices = @transform_7, window_bounds = array<i64: 8, 1>}, {transform_indices = @transform_8, window_bounds = array<i64: 4, 128>}, {transform_indices = @transform_9, window_bounds = array<i64: 4, 128>}]} {
    %c0 = arith.constant 0 : index
    %c0_0 = arith.constant 0 : index
    %0 = vector.load %arg1[%c0, %c0_0] : memref<128x128xf32, #tpu.memory_space<vmem>>, vector<128x128xf32>
    %c0_1 = arith.constant 0 : index
    %c0_2 = arith.constant 0 : index
    %1 = vector.load %arg3[%c0_1, %c0_2] : memref<32x128xf32, #tpu.memory_space<vmem>>, vector<32x128xf32>
    %cst = arith.constant dense<0.000000e+00> : vector<32x128xf32>
    %2 = tpu.matmul %1, %0, %cst {dimension_numbers = #tpu.dot_dimension_numbers<[1], [0], [0], [1], [0, 0, 1, 1], [], []>} : vector<32x128xf32>, vector<128x128xf32>, vector<32x128xf32> -> vector<32x128xf32>
    %c0_3 = arith.constant 0 : index
    %c0_4 = arith.constant 0 : index
    %3 = vector.load %arg4[%c0_3, %c0_4] : memref<32x1xf32, #tpu.memory_space<vmem>>, vector<32x1xf32>
    %4 = vector.broadcast %3 : vector<32x1xf32> to vector<32x128xf32>
    %5 = arith.addf %2, %4 : vector<32x128xf32>
    %6 = math.tanh %5 : vector<32x128xf32>
    %c0_5 = arith.constant 0 : index
    %c0_6 = arith.constant 0 : index
    %7 = vector.load %arg5[%c0_5, %c0_6] : memref<32x32xf32, #tpu.memory_space<vmem>>, vector<32x32xf32>
    %cst_7 = arith.constant dense<0.000000e+00> : vector<32x128xf32>
    %8 = tpu.matmul %7, %6, %cst_7 {dimension_numbers = #tpu.dot_dimension_numbers<[1], [0], [0], [1], [0, 0, 1, 1], [], []>} : vector<32x32xf32>, vector<32x128xf32>, vector<32x128xf32> -> vector<32x128xf32>
    %c0_8 = arith.constant 0 : index
    %c0_9 = arith.constant 0 : index
    %9 = vector.load %arg6[%c0_8, %c0_9] : memref<32x1xf32, #tpu.memory_space<vmem>>, vector<32x1xf32>
    %10 = vector.broadcast %9 : vector<32x1xf32> to vector<32x128xf32>
    %11 = arith.addf %8, %10 : vector<32x128xf32>
    %12 = math.tanh %11 : vector<32x128xf32>
    %c0_10 = arith.constant 0 : index
    %c0_11 = arith.constant 0 : index
    %13 = vector.load %arg7[%c0_10, %c0_11] : memref<8x32xf32, #tpu.memory_space<vmem>>, vector<8x32xf32>
    %cst_12 = arith.constant dense<0.000000e+00> : vector<8x128xf32>
    %14 = tpu.matmul %13, %12, %cst_12 {dimension_numbers = #tpu.dot_dimension_numbers<[1], [0], [0], [1], [0, 0, 1, 1], [], []>} : vector<8x32xf32>, vector<32x128xf32>, vector<8x128xf32> -> vector<8x128xf32>
    %c0_13 = arith.constant 0 : index
    %c0_14 = arith.constant 0 : index
    %15 = vector.load %arg8[%c0_13, %c0_14] : memref<8x1xf32, #tpu.memory_space<vmem>>, vector<8x1xf32>
    %16 = vector.broadcast %15 : vector<8x1xf32> to vector<8x128xf32>
    %17 = arith.addf %14, %16 : vector<8x128xf32>
    %18 = vector.extract_strided_slice %17 {offsets = [0, 0], sizes = [4, 128], strides = [1, 1]} : vector<8x128xf32> to vector<4x128xf32>
    %19 = vector.extract_strided_slice %17 {offsets = [4, 0], sizes = [4, 128], strides = [1, 1]} : vector<8x128xf32> to vector<4x128xf32>
    %20 = math.exp %18 : vector<4x128xf32>
    %c0_15 = arith.constant 0 : index
    %c0_16 = arith.constant 0 : index
    %21 = vector.load %arg2[%c0_15, %c0_16] : memref<4x128xf32, #tpu.memory_space<vmem>>, vector<4x128xf32>
    %22 = arith.mulf %20, %21 : vector<4x128xf32>
    %23 = arith.addf %22, %19 : vector<4x128xf32>
    %c0_17 = arith.constant 0 : index
    %c0_18 = arith.constant 0 : index
    %24 = vector.load %arg9[%c0_17, %c0_18] : memref<4x128xf32, #tpu.memory_space<vmem>>, vector<4x128xf32>
    tpu.vector_store %arg9[%c0_17, %c0_18], %23 {strides = array<i32>} : memref<4x128xf32, #tpu.memory_space<vmem>>, vector<4x128xf32>,
    %c0_19 = arith.constant 0 : index
    %c0_20 = arith.constant 0 : index
    %25 = vector.load %arg10[%c0_19, %c0_20] : memref<4x128xf32, #tpu.memory_space<vmem>>, vector<4x128xf32>
    tpu.vector_store %arg10[%c0_19, %c0_20], %18 {strides = array<i32>} : memref<4x128xf32, #tpu.memory_space<vmem>>, vector<4x128xf32>,
    return
  }
  func.func @transform_0(%arg0: i32) -> (i32, i32) {
    %c0_i32 = arith.constant 0 : i32
    %c0_i32_0 = arith.constant 0 : i32
    return %c0_i32, %arg0 : i32, i32
  }
  func.func @transform_1(%arg0: i32) -> (i32, i32) {
    %c0_i32 = arith.constant 0 : i32
    %c0_i32_0 = arith.constant 0 : i32
    return %c0_i32, %arg0 : i32, i32
  }
  func.func @transform_2(%arg0: i32) -> (i32, i32) {
    %c0_i32 = arith.constant 0 : i32
    %c0_i32_0 = arith.constant 0 : i32
    %c0_i32_1 = arith.constant 0 : i32
    return %c0_i32, %c0_i32_0 : i32, i32
  }
  func.func @transform_3(%arg0: i32) -> (i32, i32) {
    %c0_i32 = arith.constant 0 : i32
    %c0_i32_0 = arith.constant 0 : i32
    %c0_i32_1 = arith.constant 0 : i32
    return %c0_i32, %c0_i32_0 : i32, i32
  }
  func.func @transform_4(%arg0: i32) -> (i32, i32) {
    %c0_i32 = arith.constant 0 : i32
    %c0_i32_0 = arith.constant 0 : i32
    %c0_i32_1 = arith.constant 0 : i32
    return %c0_i32, %c0_i32_0 : i32, i32
  }
  func.func @transform_5(%arg0: i32) -> (i32, i32) {
    %c0_i32 = arith.constant 0 : i32
    %c0_i32_0 = arith.constant 0 : i32
    %c0_i32_1 = arith.constant 0 : i32
    return %c0_i32, %c0_i32_0 : i32, i32
  }
  func.func @transform_6(%arg0: i32) -> (i32, i32) {
    %c0_i32 = arith.constant 0 : i32
    %c0_i32_0 = arith.constant 0 : i32
    %c0_i32_1 = arith.constant 0 : i32
    return %c0_i32, %c0_i32_0 : i32, i32
  }
  func.func @transform_7(%arg0: i32) -> (i32, i32) {
    %c0_i32 = arith.constant 0 : i32
    %c0_i32_0 = arith.constant 0 : i32
    %c0_i32_1 = arith.constant 0 : i32
    return %c0_i32, %c0_i32_0 : i32, i32
  }
  func.func @transform_8(%arg0: i32) -> (i32, i32) {
    %c0_i32 = arith.constant 0 : i32
    %c0_i32_0 = arith.constant 0 : i32
    return %c0_i32, %arg0 : i32, i32
  }
  func.func @transform_9(%arg0: i32) -> (i32, i32) {
    %c0_i32 = arith.constant 0 : i32
    %c0_i32_0 = arith.constant 0 : i32
    return %c0_i32, %arg0 : i32, i32
  }
}

</mosaic_0001>

<llo_original>
// kernel: ar_step_forward.6
$region0: #{ar_step_forward.6}
  #allocation0 [shape = 'u32[]', space=smem, size = 0x4, offset = 0x4, fixed_abs, tag = 'smem constant byte address 0x4 - core index']
  #allocation1 [shape = 'u32[144,128]{1,0:T(1,128)}', space=vmem, size = 0x12000, scoped, tag = 'internal scratch']
  #allocation2 [shape = 'f32[8,128]{1,0:T(8,128)}', space=vmem, size = 0x1000, scoped, tag = 'scratch operand']
  #allocation3 [shape = 'f32[8,128]{1,0:T(8,128)}', space=vmem, size = 0x1000, scoped, tag = 'scratch operand']
  #allocation4 [shape = 'f32[32,512]{1,0:T(8,128)}', space=vmem, size = 0x10000, scoped, tag = 'scratch operand']
  %s0 = inlined_call_operand.vmem [shape: f32[64,128], index: 0, kind: input, shape index: {}]
  %s1 = inlined_call_operand.vmem [shape: f32[128,512], index: 1, kind: input, shape index: {}]
  %s2 = inlined_call_operand.vmem [shape: f32[128,512], index: 2, kind: input, shape index: {}]
  %s3 = inlined_call_operand.vmem [shape: f32[1,512], index: 3, kind: input, shape index: {}]
  %s4 = inlined_call_operand.vmem [shape: f32[64,128], index: 4, kind: output, shape index: {}]
  %s5 = sld [smem:[#allocation0]]
  $region60: #{ar_step_forward.6} parent=0
    _
  %s7 = ssub.s32 1, %s5
  %s8 = scalar_select 0, %s7, %s5
  loop: start=0, step=1, limit=4
  $region2: #{ar_step_forward.6} parent=0 // loop_pre_header
    _
  $region3: #{ar_step_forward.6} parent=0 // loop_header
    %s10 = sphi 0, %s14
    %p11 = scmp.ge.s32.totalorder %s10, 4
    %s20 = sphi 0, %s22
    %s23 = sphi 0, %s20
    %s24 = sphi 0, %s23
    %s40 = sphi 0, %s24
    %s44 = sphi 0, %s44
    %s46 = sphi 0, %s44
    %s47 = sphi 0, %s46
    %s61 = sphi 0, %s47
    %s65 = sphi 0, %s65
    %s67 = sphi 0, %s65
    %s68 = sphi 0, %s67
    %s82 = sphi 0, %s68
    %s86 = sphi 0, %s86
    %s88 = sphi 0, %s86
    %s89 = sphi 0, %s88
    %s103 = sphi 0, %s89
    %s109 = sphi 0, %s111
    %s112 = sphi 0, %s109
    %s113 = sphi 0, %s112
    %s129 = sphi 0, %s113
  $region4: #{ar_step_forward.6} parent=0 // loop_header_branch
    %13 = sbr.rel (%p11) target = $region8
  $region5: #{ar_step_forward.6} parent=0 // loop_body
    %s15 = ssub.s32 %s10, 1
    %s16 = ssub.s32 %s10, 2
    %s17 = sadd.s32 %s10, 1
    %s18 = ssub.s32 %s10, %s17
    %p19 = scmp.eq.s32.totalorder %s18, 0
    %s21 = sadd.s32 %s20, 1
    %s22 = scalar_select %p19, %s20, %s21
    %p25 = pneg %p19
    %p26 = scmp.eq.s32.totalorder %s10, 1
    %p27 = por %p25, %p26
    %p28 = scmp.ne.s32.totalorder %s20, %s23
    %p29 = scmp.eq.s32.totalorder %s10, 0
    %p30 = por %p28, %p29
    %p31 = scmp.ne.s32.totalorder %s20, %s23
    %p32 = scmp.eq.s32.totalorder %s15, 1
    %p33 = por %p31, %p32
    %p34 = scmp.ne.s32.totalorder %s23, %s24
    %p35 = scmp.eq.s32.totalorder %s15, 0
    %p36 = por %p34, %p35
    %p37 = scmp.ne.s32.totalorder %s23, %s24
    %p38 = scmp.eq.s32.totalorder %s16, 1
    %p39 = por %p37, %p38
    %p41 = scmp.ne.s32.totalorder %s24, %s40
    %p42 = scmp.eq.s32.totalorder %s16, 0
    %p43 = por %p41, %p42
    %s45 = sadd.s32 %s44, 1
    %p48 = scmp.eq.s32.totalorder %s10, 1
    %p49 = scmp.ne.s32.totalorder %s44, %s46
    %p50 = scmp.eq.s32.totalorder %s10, 0
    %p51 = por %p49, %p50
    %p52 = scmp.ne.s32.totalorder %s44, %s46
    %p53 = scmp.eq.s32.totalorder %s15, 1
    %p54 = por %p52, %p53
    %p55 = scmp.ne.s32.totalorder %s46, %s47
    %p56 = scmp.eq.s32.totalorder %s15, 0
    %p57 = por %p55, %p56
    %p58 = scmp.ne.s32.totalorder %s46, %s47
    %p59 = scmp.eq.s32.totalorder %s16, 1
    %p60 = por %p58, %p59
    %p62 = scmp.ne.s32.totalorder %s47, %s61
    %p63 = scmp.eq.s32.totalorder %s16, 0
    %p64 = por %p62, %p63
    %s66 = sadd.s32 %s65, 1
    %p69 = scmp.eq.s32.totalorder %s10, 1
    %p70 = scmp.ne.s32.totalorder %s65, %s67
    %p71 = scmp.eq.s32.totalorder %s10, 0
    %p72 = por %p70, %p71
    %p73 = scmp.ne.s32.totalorder %s65, %s67
    %p74 = scmp.eq.s32.totalorder %s15, 1
    %p75 = por %p73, %p74
    %p76 = scmp.ne.s32.totalorder %s67, %s68
    %p77 = scmp.eq.s32.totalorder %s15, 0
    %p78 = por %p76, %p77
    %p79 = scmp.ne.s32.totalorder %s67, %s68
    %p80 = scmp.eq.s32.totalorder %s16, 1
    %p81 = por %p79, %p80
    %p83 = scmp.ne.s32.totalorder %s68, %s82
    %p84 = scmp.eq.s32.totalorder %s16, 0
    %p85 = por %p83, %p84
    %s87 = sadd.s32 %s86, 1
    %p90 = scmp.eq.s32.totalorder %s10, 1
    %p91 = scmp.ne.s32.totalorder %s86, %s88
    %p92 = scmp.eq.s32.totalorder %s10, 0
    %p93 = por %p91, %p92
    %p94 = scmp.ne.s32.totalorder %s86, %s88
    %p95 = scmp.eq.s32.totalorder %s15, 1
    %p96 = por %p94, %p95
    %p97 = scmp.ne.s32.totalorder %s88, %s89
    %p98 = scmp.eq.s32.totalorder %s15, 0
    %p99 = por %p97, %p98
    %p100 = scmp.ne.s32.totalorder %s88, %s89
    %p101 = scmp.eq.s32.totalorder %s16, 1
    %p102 = por %p100, %p101
    %p104 = scmp.ne.s32.totalorder %s89, %s103
    %p105 = scmp.eq.s32.totalorder %s16, 0
    %p106 = por %p104, %p105
    %s107 = ssub.s32 %s10, %s17
    %p108 = scmp.eq.s32.totalorder %s107, 0
    %s110 = sadd.s32 %s109, 1
    %s111 = scalar_select %p108, %s109, %s110
    %p114 = pneg %p108
    %p115 = scmp.eq.s32.totalorder %s10, 1
    %p116 = por %p114, %p115
    %p117 = scmp.ne.s32.totalorder %s109, %s112
    %p118 = scmp.eq.s32.totalorder %s10, 0
    %p119 = por %p117, %p118
    %p120 = scmp.ne.s32.totalorder %s109, %s112
    %p121 = scmp.eq.s32.totalorder %s15, 1
    %p122 = por %p120, %p121
    %p123 = scmp.ne.s32.totalorder %s112, %s113
    %p124 = scmp.eq.s32.totalorder %s15, 0
    %p125 = por %p123, %p124
    %p126 = scmp.ne.s32.totalorder %s112, %s113
    %p127 = scmp.eq.s32.totalorder %s16, 1
    %p128 = por %p126, %p127
    %p130 = scmp.ne.s32.totalorder %s113, %s129
    %p131 = scmp.eq.s32.totalorder %s16, 0
    %p132 = por %p130, %p131
    %p133 = scmp.le.s32.totalorder 1, %s10
    %p134 = scmp.lt.s32.totalorder %s10, 3
    %p135 = pnand %p133, %p134
    %p136 = pneg %p135
    // Predicated region
    $region9: #{ar_step_forward.6} parent=5 // pred_check
      _
    $region10: #{ar_step_forward.6} parent=5 // pred_check_branch
      %138 = sbr.rel (%p135) target = $region12
    $region11: #{ar_step_forward.6} parent=5 // pred_region
      %s139 = ssub.s32 %s10, 1
      // Predicated region
      $region13: #{ar_step_forward.6} parent=11 // pred_check
        %p140 = pneg %p57
      $region14: #{ar_step_forward.6} parent=11 // pred_check_branch
        %142 = sbr.rel (%p140) target = $region16
      $region15: #{ar_step_forward.6} parent=11 // pred_region
        _
      $region16: #{ar_step_forward.6} parent=11 // pred_fallthru
        _
      // Predicated region
      $region17: #{ar_step_forward.6} parent=11 // pred_check
        %p143 = pneg %p78
      $region18: #{ar_step_forward.6} parent=11 // pred_check_branch
        %145 = sbr.rel (%p143) target = $region20
      $region19: #{ar_step_forward.6} parent=11 // pred_region
        _
      $region20: #{ar_step_forward.6} parent=11 // pred_fallthru
        _
      // Predicated region
      $region21: #{ar_step_forward.6} parent=11 // pred_check
        %p146 = pneg %p99
      $region22: #{ar_step_forward.6} parent=11 // pred_check_branch
        %148 = sbr.rel (%p146) target = $region24
      $region23: #{ar_step_forward.6} parent=11 // pred_region
        _
      $region24: #{ar_step_forward.6} parent=11 // pred_fallthru
        _
    $region12: #{ar_step_forward.6} parent=5 // pred_fallthru
      _
    %p149 = scmp.lt.s32.totalorder %s10, 2
    // Predicated region
    $region25: #{ar_step_forward.6} parent=5 // pred_check
      %p150 = pneg %p149
    $region26: #{ar_step_forward.6} parent=5 // pred_check_branch
      %152 = sbr.rel (%p150) target = $region28
    $region27: #{ar_step_forward.6} parent=5 // pred_region
      // Predicated region
      $region29: #{ar_step_forward.6} parent=27 // pred_check
        %p153 = pneg %p30
      $region30: #{ar_step_forward.6} parent=27 // pred_check_branch
        %155 = sbr.rel (%p153) target = $region32
      $region31: #{ar_step_forward.6} parent=27 // pred_region
        %s156 = smul.u32 4, %s10
        %p157 = scmp.lt.s32.totalorder %s156, 7
        %s158 = scalar_select %p157, %s156, 7
        %s159 = smul.addr %s158, 8
        %s160 = scalar_lea.vmem %s0, %s159
        %s161 = smul.u32 4, %s10
      $region32: #{ar_step_forward.6} parent=27 // pred_fallthru
        _
    $region28: #{ar_step_forward.6} parent=5 // pred_fallthru
      _
    %p162 = scmp.le.s32.totalorder 1, %s10
    %p163 = scmp.lt.s32.totalorder %s10, 3
    %p164 = pnand %p162, %p163
    %p165 = pneg %p164
    // Predicated region
    $region33: #{ar_step_forward.6} parent=5 // pred_check
      _
    $region34: #{ar_step_forward.6} parent=5 // pred_check_branch
      %167 = sbr.rel (%p164) target = $region36
    $region35: #{ar_step_forward.6} parent=5 // pred_region
      %s168 = ssub.s32 %s10, 1
      %s169 = smul.u32 4, %s15
      %p170 = scmp.lt.s32.totalorder %s169, 7
      %s171 = scalar_select %p170, %s169, 7
      %s172 = smul.addr %s171, 8
      %s173 = scalar_lea.vmem %s0, %s172
      %p174 = pneg %p36
      %p175 = pneg %p33
      %p176 = pneg %p57
      %p177 = pneg %p54
      %p178 = pneg %p78
      %p179 = pneg %p75
      %p180 = pneg %p99
      %p181 = pneg %p96
      %p182 = pneg %p125
      %p183 = pneg %p122
      %s184 = smul.u32 4, %s15
      %p185 = scmp.lt.s32.totalorder %s184, 7
      %s186 = scalar_select %p185, %s184, 7
      %s187 = smul.addr %s186, 8
      %s188 = scalar_lea.vmem %s4, %s187
      %s189 = smul.u32 4, %s15
      %p190 = scmp.lt.s32.totalorder %s189, 7
      %s191 = scalar_select %p190, %s189, 7
      %s192 = smul.addr %s191, 8
      %s193 = scalar_lea.vmem %s0, %s192
      %s194 = smul.u32 4, %s15
      %s195 = smul.u32 4, %s15
      %p196 = scmp.lt.s32.totalorder %s195, 7
      %s197 = scalar_select %p196, %s195, 7
      %s198 = smul.addr %s197, 8
      %s199 = scalar_lea.vmem %s4, %s198
      %s200 = smul.u32 4, %s15
      %p201 = scmp.eq.s32.totalorder %s15, 0
      // Predicated region
      $region37: #{ar_step_forward.6} parent=35 // pred_check
        %p202 = pneg %p201
      $region38: #{ar_step_forward.6} parent=35 // pred_check_branch
        %204 = sbr.rel (%p202) target = $region40
      $region39: #{ar_step_forward.6} parent=35 // pred_region
        %205 = vst [vmem:[#allocation2] sm:$0xff] 0.0
        %206 = vst [vmem:[#allocation3] sm:$0xff] 0.0
      $region40: #{ar_step_forward.6} parent=35 // pred_fallthru
        _
      %v207 = vld [vmem:[%s193] sm:$0xff]
      %v208 = vld [vmem:[%s193 + $0x8] sm:$0xff]
      %v209 = vld [vmem:[%s193 + $0x10] sm:$0xff]
      %v210 = vld [vmem:[%s193 + $0x18] sm:$0xff]
      %v211 = vld [vmem:[%s1] sm:$0xff]
      %v212 = vld [vmem:[%s1 + $0x8] sm:$0xff]
      %v213 = vld [vmem:[%s1 + $0x10] sm:$0xff]
      %v214 = vld [vmem:[%s1 + $0x18] sm:$0xff]
      %v215 = vld [vmem:[%s1 + $0x20] sm:$0xff]
      %v216 = vld [vmem:[%s1 + $0x28] sm:$0xff]
      %v217 = vld [vmem:[%s1 + $0x30] sm:$0xff]
      %v218 = vld [vmem:[%s1 + $0x38] sm:$0xff]
      %v219 = vld [vmem:[%s1 + $0x40] sm:$0xff]
      %v220 = vld [vmem:[%s1 + $0x48] sm:$0xff]
      %v221 = vld [vmem:[%s1 + $0x50] sm:$0xff]
      %v222 = vld [vmem:[%s1 + $0x58] sm:$0xff]
      %v223 = vld [vmem:[%s1 + $0x60] sm:$0xff]
      %v224 = vld [vmem:[%s1 + $0x68] sm:$0xff]
      %v225 = vld [vmem:[%s1 + $0x70] sm:$0xff]
      %v226 = vld [vmem:[%s1 + $0x78] sm:$0xff]
      %v227 = vld [vmem:[%s1 + $0x80] sm:$0xff]
      %v228 = vld [vmem:[%s1 + $0x88] sm:$0xff]
      %v229 = vld [vmem:[%s1 + $0x90] sm:$0xff]
      %v230 = vld [vmem:[%s1 + $0x98] sm:$0xff]
      %v231 = vld [vmem:[%s1 + $0xa0] sm:$0xff]
      %v232 = vld [vmem:[%s1 + $0xa8] sm:$0xff]
      %v233 = vld [vmem:[%s1 + $0xb0] sm:$0xff]
      %v234 = vld [vmem:[%s1 + $0xb8] sm:$0xff]
      %v235 = vld [vmem:[%s1 + $0xc0] sm:$0xff]
      %v236 = vld [vmem:[%s1 + $0xc8] sm:$0xff]
      %v237 = vld [vmem:[%s1 + $0xd0] sm:$0xff]
      %v238 = vld [vmem:[%s1 + $0xd8] sm:$0xff]
      %v239 = vld [vmem:[%s1 + $0xe0] sm:$0xff]
      %v240 = vld [vmem:[%s1 + $0xe8] sm:$0xff]
      %v241 = vld [vmem:[%s1 + $0xf0] sm:$0xff]
      %v242 = vld [vmem:[%s1 + $0xf8] sm:$0xff]
      %v243 = vld [vmem:[%s1 + $0x100] sm:$0xff]
      %v244 = vld [vmem:[%s1 + $0x108] sm:$0xff]
      %v245 = vld [vmem:[%s1 + $0x110] sm:$0xff]
      %v246 = vld [vmem:[%s1 + $0x118] sm:$0xff]
      %v247 = vld [vmem:[%s1 + $0x120] sm:$0xff]
      %v248 = vld [vmem:[%s1 + $0x128] sm:$0xff]
      %v249 = vld [vmem:[%s1 + $0x130] sm:$0xff]
      %v250 = vld [vmem:[%s1 + $0x138] sm:$0xff]
      %v251 = vld [vmem:[%s1 + $0x140] sm:$0xff]
      %v252 = vld [vmem:[%s1 + $0x148] sm:$0xff]
      %v253 = vld [vmem:[%s1 + $0x150] sm:$0xff]
      %v254 = vld [vmem:[%s1 + $0x158] sm:$0xff]
      %v255 = vld [vmem:[%s1 + $0x160] sm:$0xff]
      %v256 = vld [vmem:[%s1 + $0x168] sm:$0xff]
      %v257 = vld [vmem:[%s1 + $0x170] sm:$0xff]
      %v258 = vld [vmem:[%s1 + $0x178] sm:$0xff]
      %v259 = vld [vmem:[%s1 + $0x180] sm:$0xff]
      %v260 = vld [vmem:[%s1 + $0x188] sm:$0xff]
      %v261 = vld [vmem:[%s1 + $0x190] sm:$0xff]
      %v262 = vld [vmem:[%s1 + $0x198] sm:$0xff]
      %v263 = vld [vmem:[%s1 + $0x1a0] sm:$0xff]
      %v264 = vld [vmem:[%s1 + $0x1a8] sm:$0xff]
      %v265 = vld [vmem:[%s1 + $0x1b0] sm:$0xff]
      %v266 = vld [vmem:[%s1 + $0x1b8] sm:$0xff]
      %v267 = vld [vmem:[%s1 + $0x1c0] sm:$0xff]
      %v268 = vld [vmem:[%s1 + $0x1c8] sm:$0xff]
      %v269 = vld [vmem:[%s1 + $0x1d0] sm:$0xff]
      %v270 = vld [vmem:[%s1 + $0x1d8] sm:$0xff]
      %v271 = vld [vmem:[%s1 + $0x1e0] sm:$0xff]
      %v272 = vld [vmem:[%s1 + $0x1e8] sm:$0xff]
      %v273 = vld [vmem:[%s1 + $0x1f0] sm:$0xff]
      %v274 = vld [vmem:[%s1 + $0x1f8] sm:$0xff]
      %v275 = vld [vmem:[%s3] sm:$0xf]
      %v277 = vlaneseq
      %v278 = vshrl.u32 %v277, 7
      %v279 = vsub.s32 0, %v278
      %v280 = vrot.slane %v275, %v279
      %v281 = vlaneseq
      %v282 = vshrl.u32 %v281, 7
      %v283 = vsub.s32 1, %v282
      %v284 = vrot.slane %v275, %v283
      %v285 = vlaneseq
      %v286 = vshrl.u32 %v285, 7
      %v287 = vsub.s32 2, %v286
      %v288 = vrot.slane %v275, %v287
      %v289 = vlaneseq
      %v290 = vshrl.u32 %v289, 7
      %v291 = vsub.s32 3, %v290
      %v292 = vrot.slane %v275, %v291
      %297 = vmatprep.subr.mxu0 %v212
      %298 = vmatpush1.msra.mxu0 %v211
      %299 = vmatprep.subr.mxu0 %v216
      %300 = vmatpush1.msra.mxu0 %v215
      %301 = vmatprep.subr.mxu0 %v220
      %302 = vmatpush1.msra.mxu0 %v219
      %303 = vmatprep.subr.mxu0 %v224
      %304 = vmatpush1.msra.mxu0 %v223
      %305 = vmatprep.subr.mxu0 %v228
      %306 = vmatpush1.msra.mxu0 %v227
      %307 = vmatprep.subr.mxu0 %v232
      %308 = vmatpush1.msra.mxu0 %v231
      %309 = vmatprep.subr.mxu0 %v236
      %310 = vmatpush1.msra.mxu0 %v235
      %311 = vmatprep.subr.mxu0 %v240
      %312 = vmatpush1.msra.mxu0 %v239
      %313 = vmatprep.subr.mxu0 %v244
      %314 = vmatpush1.msra.mxu0 %v243
      %315 = vmatprep.subr.mxu0 %v248
      %316 = vmatpush1.msra.mxu0 %v247
      %317 = vmatprep.subr.mxu0 %v252
      %318 = vmatpush1.msra.mxu0 %v251
      %319 = vmatprep.subr.mxu0 %v256
      %320 = vmatpush1.msra.mxu0 %v255
      %321 = vmatprep.subr.mxu0 %v260
      %322 = vmatpush1.msra.mxu0 %v259
      %323 = vmatprep.subr.mxu0 %v264
      %324 = vmatpush1.msra.mxu0 %v263
      %325 = vmatprep.subr.mxu0 %v268
      %326 = vmatpush1.msra.mxu0 %v267
      %327 = vmatprep.subr.mxu0 %v272
      %328 = vmatpush1.msra.mxu0 %v271
      %329 = vmatprep.subr.mxu0 0.0
      %330 = vmatpush1.msra.mxu0 0.0
      %331 = vmatprep.subr.mxu0 0.0
      %332 = vmatpush1.msra.mxu0 0.0
      %333 = vmatprep.subr.mxu0 0.0
      %334 = vmatpush1.msra.mxu0 0.0
      %335 = vmatprep.subr.mxu0 0.0
      %336 = vmatpush1.msra.mxu0 0.0
      %337 = vmatprep.subr.mxu0 0.0
      %338 = vmatpush1.msra.mxu0 0.0
      %339 = vmatprep.subr.mxu0 0.0
      %340 = vmatpush1.msra.mxu0 0.0
      %341 = vmatprep.subr.mxu0 0.0
      %342 = vmatpush1.msra.mxu0 0.0
      %343 = vmatprep.subr.mxu0 0.0
      %344 = vmatpush1.msra.mxu0 0.0
      %345 = vmatprep.subr.mxu0 0.0
      %346 = vmatpush1.msra.mxu0 0.0
      %347 = vmatprep.subr.mxu0 0.0
      %348 = vmatpush1.msra.mxu0 0.0
      %349 = vmatprep.subr.mxu0 0.0
      %350 = vmatpush1.msra.mxu0 0.0
      %351 = vmatprep.subr.mxu0 0.0
      %352 = vmatpush1.msra.mxu0 0.0
      %353 = vmatprep.subr.mxu0 0.0
      %354 = vmatpush1.msra.mxu0 0.0
      %355 = vmatprep.subr.mxu0 0.0
      %356 = vmatpush1.msra.mxu0 0.0
      %357 = vmatprep.subr.mxu0 0.0
      %358 = vmatpush1.msra.mxu0 0.0
      %359 = vmatprep.subr.mxu0 0.0
      %360 = vmatpush1.msra.mxu0 0.0
      %361 = vmatprep.mubr.f32.mxu0 0.0
      %362 = vmatmul.mubr.f32.gmra.mrb[0].mxu0 %v207
      %v363 = vpop.f32.mrb[0].mxu0
      %v364 = vadd.f32 %v280, %v363
      %v365 = vpop.f32.mrb[0].mxu0
      %v366 = vadd.f32 %v284, %v365
      %367 = vmatprep.mubr.f32.mxu0 0.0
      %368 = vmatmul.mubr.f32.gmra.mrb[0].mxu0 %v208
      %v369 = vpop.f32.mrb[0].mxu0
      %v370 = vadd.f32 %v280, %v369
      %v371 = vpop.f32.mrb[0].mxu0
      %v372 = vadd.f32 %v284, %v371
      %373 = vmatprep.mubr.f32.mxu0 0.0
      %374 = vmatmul.mubr.f32.gmra.mrb[0].mxu0 %v209
      %v375 = vpop.f32.mrb[0].mxu0
      %v376 = vadd.f32 %v280, %v375
      %v377 = vpop.f32.mrb[0].mxu0
      %v378 = vadd.f32 %v284, %v377
      %379 = vmatprep.mubr.f32.mxu0 0.0
      %380 = vmatmul.mubr.f32.gmra.mrb[0].mxu0 %v210
      %v381 = vpop.f32.mrb[0].mxu0
      %v382 = vadd.f32 %v280, %v381
      %v383 = vpop.f32.mrb[0].mxu0
      %v384 = vadd.f32 %v284, %v383
      %385 = vdwg.mxu0
      %386 = vmatprep.subr.mxu0 %v214
      %387 = vmatpush1.msra.mxu0 %v213
      %388 = vmatprep.subr.mxu0 %v218
      %389 = vmatpush1.msra.mxu0 %v217
      %390 = vmatprep.subr.mxu0 %v222
      %391 = vmatpush1.msra.mxu0 %v221
      %392 = vmatprep.subr.mxu0 %v226
      %393 = vmatpush1.msra.mxu0 %v225
      %394 = vmatprep.subr.mxu0 %v230
      %395 = vmatpush1.msra.mxu0 %v229
      %396 = vmatprep.subr.mxu0 %v234
      %397 = vmatpush1.msra.mxu0 %v233
      %398 = vmatprep.subr.mxu0 %v238
      %399 = vmatpush1.msra.mxu0 %v237
      %400 = vmatprep.subr.mxu0 %v242
      %401 = vmatpush1.msra.mxu0 %v241
      %402 = vmatprep.subr.mxu0 %v246
      %403 = vmatpush1.msra.mxu0 %v245
      %404 = vmatprep.subr.mxu0 %v250
      %405 = vmatpush1.msra.mxu0 %v249
      %406 = vmatprep.subr.mxu0 %v254
      %407 = vmatpush1.msra.mxu0 %v253
      %408 = vmatprep.subr.mxu0 %v258
      %409 = vmatpush1.msra.mxu0 %v257
      %410 = vmatprep.subr.mxu0 %v262
      %411 = vmatpush1.msra.mxu0 %v261
      %412 = vmatprep.subr.mxu0 %v266
      %413 = vmatpush1.msra.mxu0 %v265
      %414 = vmatprep.subr.mxu0 %v270
      %415 = vmatpush1.msra.mxu0 %v269
      %416 = vmatprep.subr.mxu0 %v274
      %417 = vmatpush1.msra.mxu0 %v273
      %418 = vmatprep.subr.mxu0 0.0
      %419 = vmatpush1.msra.mxu0 0.0
      %420 = vmatprep.subr.mxu0 0.0
      %421 = vmatpush1.msra.mxu0 0.0
      %422 = vmatprep.subr.mxu0 0.0
      %423 = vmatpush1.msra.mxu0 0.0
      %424 = vmatprep.subr.mxu0 0.0
      %425 = vmatpush1.msra.mxu0 0.0
      %426 = vmatprep.subr.mxu0 0.0
      %427 = vmatpush1.msra.mxu0 0.0
      %428 = vmatprep.subr.mxu0 0.0
      %429 = vmatpush1.msra.mxu0 0.0
      %430 = vmatprep.subr.mxu0 0.0
      %431 = vmatpush1.msra.mxu0 0.0
      %432 = vmatprep.subr.mxu0 0.0
      %433 = vmatpush1.msra.mxu0 0.0
      %434 = vmatprep.subr.mxu0 0.0
      %435 = vmatpush1.msra.mxu0 0.0
      %436 = vmatprep.subr.mxu0 0.0
      %437 = vmatpush1.msra.mxu0 0.0
      %438 = vmatprep.subr.mxu0 0.0
      %439 = vmatpush1.msra.mxu0 0.0
      %440 = vmatprep.subr.mxu0 0.0
      %441 = vmatpush1.msra.mxu0 0.0
      %442 = vmatprep.subr.mxu0 0.0
      %443 = vmatpush1.msra.mxu0 0.0
      %444 = vmatprep.subr.mxu0 0.0
      %445 = vmatpush1.msra.mxu0 0.0
      %446 = vmatprep.subr.mxu0 0.0
      %447 = vmatpush1.msra.mxu0 0.0
      %448 = vmatprep.subr.mxu0 0.0
      %449 = vmatpush1.msra.mxu0 0.0
      %450 = vmatprep.mubr.f32.mxu0 0.0
      %451 = vmatmul.mubr.f32.gmra.mrb[0].mxu0 %v207
      %v452 = vpop.f32.mrb[0].mxu0
      %v453 = vadd.f32 %v288, %v452
      %v454 = vpop.f32.mrb[0].mxu0
      %v455 = vadd.f32 %v292, %v454
      %456 = vmatprep.mubr.f32.mxu0 0.0
      %457 = vmatmul.mubr.f32.gmra.mrb[0].mxu0 %v208
      %v458 = vpop.f32.mrb[0].mxu0
      %v459 = vadd.f32 %v288, %v458
      %v460 = vpop.f32.mrb[0].mxu0
      %v461 = vadd.f32 %v292, %v460
      %462 = vmatprep.mubr.f32.mxu0 0.0
      %463 = vmatmul.mubr.f32.gmra.mrb[0].mxu0 %v209
      %v464 = vpop.f32.mrb[0].mxu0
      %v465 = vadd.f32 %v288, %v464
      %v466 = vpop.f32.mrb[0].mxu0
      %v467 = vadd.f32 %v292, %v466
      %468 = vmatprep.mubr.f32.mxu0 0.0
      %469 = vmatmul.mubr.f32.gmra.mrb[0].mxu0 %v210
      %v470 = vpop.f32.mrb[0].mxu0
      %v471 = vadd.f32 %v288, %v470
      %v472 = vpop.f32.mrb[0].mxu0
      %v473 = vadd.f32 %v292, %v472
      %474 = vdwg.mxu0
      %475 = vst [vmem:[#allocation4] sm:$0xff] %v364
      %476 = vst [vmem:[#allocation4 + $0x8] sm:$0xff] %v366
      %477 = vst [vmem:[#allocation4 + $0x10] sm:$0xff] %v453
      %478 = vst [vmem:[#allocation4 + $0x18] sm:$0xff] %v455
      %479 = vst [vmem:[#allocation4 + $0x20] sm:$0xff] %v370
      %480 = vst [vmem:[#allocation4 + $0x28] sm:$0xff] %v372
      %481 = vst [vmem:[#allocation4 + $0x30] sm:$0xff] %v459
      %482 = vst [vmem:[#allocation4 + $0x38] sm:$0xff] %v461
      %483 = vst [vmem:[#allocation4 + $0x40] sm:$0xff] %v376
      %484 = vst [vmem:[#allocation4 + $0x48] sm:$0xff] %v378
      %485 = vst [vmem:[#allocation4 + $0x50] sm:$0xff] %v465
      %486 = vst [vmem:[#allocation4 + $0x58] sm:$0xff] %v467
      %487 = vst [vmem:[#allocation4 + $0x60] sm:$0xff] %v382
      %488 = vst [vmem:[#allocation4 + $0x68] sm:$0xff] %v384
      %489 = vst [vmem:[#allocation4 + $0x70] sm:$0xff] %v471
      %490 = vst [vmem:[#allocation4 + $0x78] sm:$0xff] %v473
      loop: start=0, step=1, limit=4
      $region41: #{ar_step_forward.6} parent=35 // loop_pre_header
        _
      $region42: #{ar_step_forward.6} parent=35 // loop_header
        %s492 = sphi 0, %s496
        %p493 = scmp.ge.s32.totalorder %s492, 4
      $region43: #{ar_step_forward.6} parent=35 // loop_header_branch
        %495 = sbr.rel (%p493) target = $region47
      $region44: #{ar_step_forward.6} parent=35 // loop_body
        %s497 = smul.u32 %s492, 8
        %v498 = vld [vmem:[#allocation2] sm:$0xff]
        %v499 = vld [vmem:[#allocation3] sm:$0xff]
        %s500 = sshra.s32 %s497, 3
        %s501 = sand.u32 %s497, 7
        %s502 = smul.u32 %s500, 4
        %s503 = smul.addr %s502, 8
        %s504 = scalar_lea.vmem [#allocation4], %s503
        %v505 = vld [vmem:[%s504] sm:$0xff]
        %v506 = vld [vmem:[%s504 + $0x8] sm:$0xff]
        %v507 = vld [vmem:[%s504 + $0x10] sm:$0xff]
        %v508 = vld [vmem:[%s504 + $0x18] sm:$0xff]
        %v509 = vld [vmem:[%s2] sm:$0xff]
        %v510 = vld [vmem:[%s2 + $0x8] sm:$0xff]
        %v511 = vld [vmem:[%s2 + $0x10] sm:$0xff]
        %v512 = vld [vmem:[%s2 + $0x18] sm:$0xff]
        %v513 = vld [vmem:[%s2 + $0x20] sm:$0xff]
        %v514 = vld [vmem:[%s2 + $0x28] sm:$0xff]
        %v515 = vld [vmem:[%s2 + $0x30] sm:$0xff]
        %v516 = vld [vmem:[%s2 + $0x38] sm:$0xff]
        %v517 = vld [vmem:[%s2 + $0x40] sm:$0xff]
        %v518 = vld [vmem:[%s2 + $0x48] sm:$0xff]
        %v519 = vld [vmem:[%s2 + $0x50] sm:$0xff]
        %v520 = vld [vmem:[%s2 + $0x58] sm:$0xff]
        %v521 = vld [vmem:[%s2 + $0x60] sm:$0xff]
        %v522 = vld [vmem:[%s2 + $0x68] sm:$0xff]
        %v523 = vld [vmem:[%s2 + $0x70] sm:$0xff]
        %v524 = vld [vmem:[%s2 + $0x78] sm:$0xff]
        %v525 = vld [vmem:[%s2 + $0x80] sm:$0xff]
        %v526 = vld [vmem:[%s2 + $0x88] sm:$0xff]
        %v527 = vld [vmem:[%s2 + $0x90] sm:$0xff]
        %v528 = vld [vmem:[%s2 + $0x98] sm:$0xff]
        %v529 = vld [vmem:[%s2 + $0xa0] sm:$0xff]
        %v530 = vld [vmem:[%s2 + $0xa8] sm:$0xff]
        %v531 = vld [vmem:[%s2 + $0xb0] sm:$0xff]
        %v532 = vld [vmem:[%s2 + $0xb8] sm:$0xff]
        %v533 = vld [vmem:[%s2 + $0xc0] sm:$0xff]
        %v534 = vld [vmem:[%s2 + $0xc8] sm:$0xff]
        %v535 = vld [vmem:[%s2 + $0xd0] sm:$0xff]
        %v536 = vld [vmem:[%s2 + $0xd8] sm:$0xff]
        %v537 = vld [vmem:[%s2 + $0xe0] sm:$0xff]
        %v538 = vld [vmem:[%s2 + $0xe8] sm:$0xff]
        %v539 = vld [vmem:[%s2 + $0xf0] sm:$0xff]
        %v540 = vld [vmem:[%s2 + $0xf8] sm:$0xff]
        %v541 = vld [vmem:[%s2 + $0x100] sm:$0xff]
        %v542 = vld [vmem:[%s2 + $0x108] sm:$0xff]
        %v543 = vld [vmem:[%s2 + $0x110] sm:$0xff]
        %v544 = vld [vmem:[%s2 + $0x118] sm:$0xff]
        %v545 = vld [vmem:[%s2 + $0x120] sm:$0xff]
        %v546 = vld [vmem:[%s2 + $0x128] sm:$0xff]
        %v547 = vld [vmem:[%s2 + $0x130] sm:$0xff]
        %v548 = vld [vmem:[%s2 + $0x138] sm:$0xff]
        %v549 = vld [vmem:[%s2 + $0x140] sm:$0xff]
        %v550 = vld [vmem:[%s2 + $0x148] sm:$0xff]
        %v551 = vld [vmem:[%s2 + $0x150] sm:$0xff]
        %v552 = vld [vmem:[%s2 + $0x158] sm:$0xff]
        %v553 = vld [vmem:[%s2 + $0x160] sm:$0xff]
        %v554 = vld [vmem:[%s2 + $0x168] sm:$0xff]
        %v555 = vld [vmem:[%s2 + $0x170] sm:$0xff]
        %v556 = vld [vmem:[%s2 + $0x178] sm:$0xff]
        %v557 = vld [vmem:[%s2 + $0x180] sm:$0xff]
        %v558 = vld [vmem:[%s2 + $0x188] sm:$0xff]
        %v559 = vld [vmem:[%s2 + $0x190] sm:$0xff]
        %v560 = vld [vmem:[%s2 + $0x198] sm:$0xff]
        %v561 = vld [vmem:[%s2 + $0x1a0] sm:$0xff]
        %v562 = vld [vmem:[%s2 + $0x1a8] sm:$0xff]
        %v563 = vld [vmem:[%s2 + $0x1b0] sm:$0xff]
        %v564 = vld [vmem:[%s2 + $0x1b8] sm:$0xff]
        %v565 = vld [vmem:[%s2 + $0x1c0] sm:$0xff]
        %v566 = vld [vmem:[%s2 + $0x1c8] sm:$0xff]
        %v567 = vld [vmem:[%s2 + $0x1d0] sm:$0xff]
        %v568 = vld [vmem:[%s2 + $0x1d8] sm:$0xff]
        %v569 = vld [vmem:[%s2 + $0x1e0] sm:$0xff]
        %v570 = vld [vmem:[%s2 + $0x1e8] sm:$0xff]
        %v571 = vld [vmem:[%s2 + $0x1f0] sm:$0xff]
        %v572 = vld [vmem:[%s2 + $0x1f8] sm:$0xff]
        %573 = vmatprep.subr.mxu0 %v510
        %574 = vmatpush1.msra.mxu0 %v509
        %575 = vmatprep.subr.mxu0 %v514
        %576 = vmatpush1.msra.mxu0 %v513
        %577 = vmatprep.subr.mxu0 %v518
        %578 = vmatpush1.msra.mxu0 %v517
        %579 = vmatprep.subr.mxu0 %v522
        %580 = vmatpush1.msra.mxu0 %v521
        %581 = vmatprep.subr.mxu0 %v526
        %582 = vmatpush1.msra.mxu0 %v525
        %583 = vmatprep.subr.mxu0 %v530
        %584 = vmatpush1.msra.mxu0 %v529
        %585 = vmatprep.subr.mxu0 %v534
        %586 = vmatpush1.msra.mxu0 %v533
        %587 = vmatprep.subr.mxu0 %v538
        %588 = vmatpush1.msra.mxu0 %v537
        %589 = vmatprep.subr.mxu0 %v542
        %590 = vmatpush1.msra.mxu0 %v541
        %591 = vmatprep.subr.mxu0 %v546
        %592 = vmatpush1.msra.mxu0 %v545
        %593 = vmatprep.subr.mxu0 %v550
        %594 = vmatpush1.msra.mxu0 %v549
        %595 = vmatprep.subr.mxu0 %v554
        %596 = vmatpush1.msra.mxu0 %v553
        %597 = vmatprep.subr.mxu0 %v558
        %598 = vmatpush1.msra.mxu0 %v557
        %599 = vmatprep.subr.mxu0 %v562
        %600 = vmatpush1.msra.mxu0 %v561
        %601 = vmatprep.subr.mxu0 %v566
        %602 = vmatpush1.msra.mxu0 %v565
        %603 = vmatprep.subr.mxu0 %v570
        %604 = vmatpush1.msra.mxu0 %v569
        %605 = vmatprep.subr.mxu0 0.0
        %606 = vmatpush1.msra.mxu0 0.0
        %607 = vmatprep.subr.mxu0 0.0
        %608 = vmatpush1.msra.mxu0 0.0
        %609 = vmatprep.subr.mxu0 0.0
        %610 = vmatpush1.msra.mxu0 0.0
        %611 = vmatprep.subr.mxu0 0.0
        %612 = vmatpush1.msra.mxu0 0.0
        %613 = vmatprep.subr.mxu0 0.0
        %614 = vmatpush1.msra.mxu0 0.0
        %615 = vmatprep.subr.mxu0 0.0
        %616 = vmatpush1.msra.mxu0 0.0
        %617 = vmatprep.subr.mxu0 0.0
        %618 = vmatpush1.msra.mxu0 0.0
        %619 = vmatprep.subr.mxu0 0.0
        %620 = vmatpush1.msra.mxu0 0.0
        %621 = vmatprep.subr.mxu0 0.0
        %622 = vmatpush1.msra.mxu0 0.0
        %623 = vmatprep.subr.mxu0 0.0
        %624 = vmatpush1.msra.mxu0 0.0
        %625 = vmatprep.subr.mxu0 0.0
        %626 = vmatpush1.msra.mxu0 0.0
        %627 = vmatprep.subr.mxu0 0.0
        %628 = vmatpush1.msra.mxu0 0.0
        %629 = vmatprep.subr.mxu0 0.0
        %630 = vmatpush1.msra.mxu0 0.0
        %631 = vmatprep.subr.mxu0 0.0
        %632 = vmatpush1.msra.mxu0 0.0
        %633 = vmatprep.subr.mxu0 0.0
        %634 = vmatpush1.msra.mxu0 0.0
        %635 = vmatprep.subr.mxu0 0.0
        %636 = vmatpush1.msra.mxu0 0.0
        %637 = vmatprep.mubr.f32.mxu0 0.0
        %638 = vmatmul.mubr.f32.gmra.mrb[0].mxu0 %v498
        %v639 = vpop.f32.mrb[0].mxu0
        %v640 = vadd.f32 0.0, %v639
        %v641 = vpop.f32.mrb[0].mxu0
        %v642 = vadd.f32 0.0, %v641
        %643 = vdwg.mxu0
        %644 = vmatprep.subr.mxu0 %v512
        %645 = vmatpush1.msra.mxu0 %v511
        %646 = vmatprep.subr.mxu0 %v516
        %647 = vmatpush1.msra.mxu0 %v515
        %648 = vmatprep.subr.mxu0 %v520
        %649 = vmatpush1.msra.mxu0 %v519
        %650 = vmatprep.subr.mxu0 %v524
        %651 = vmatpush1.msra.mxu0 %v523
        %652 = vmatprep.subr.mxu0 %v528
        %653 = vmatpush1.msra.mxu0 %v527
        %654 = vmatprep.subr.mxu0 %v532
        %655 = vmatpush1.msra.mxu0 %v531
        %656 = vmatprep.subr.mxu0 %v536
        %657 = vmatpush1.msra.mxu0 %v535
        %658 = vmatprep.subr.mxu0 %v540
        %659 = vmatpush1.msra.mxu0 %v539
        %660 = vmatprep.subr.mxu0 %v544
        %661 = vmatpush1.msra.mxu0 %v543
        %662 = vmatprep.subr.mxu0 %v548
        %663 = vmatpush1.msra.mxu0 %v547
        %664 = vmatprep.subr.mxu0 %v552
        %665 = vmatpush1.msra.mxu0 %v551
        %666 = vmatprep.subr.mxu0 %v556
        %667 = vmatpush1.msra.mxu0 %v555
        %668 = vmatprep.subr.mxu0 %v560
        %669 = vmatpush1.msra.mxu0 %v559
        %670 = vmatprep.subr.mxu0 %v564
        %671 = vmatpush1.msra.mxu0 %v563
        %672 = vmatprep.subr.mxu0 %v568
        %673 = vmatpush1.msra.mxu0 %v567
        %674 = vmatprep.subr.mxu0 %v572
        %675 = vmatpush1.msra.mxu0 %v571
        %676 = vmatprep.subr.mxu0 0.0
        %677 = vmatpush1.msra.mxu0 0.0
        %678 = vmatprep.subr.mxu0 0.0
        %679 = vmatpush1.msra.mxu0 0.0
        %680 = vmatprep.subr.mxu0 0.0
        %681 = vmatpush1.msra.mxu0 0.0
        %682 = vmatprep.subr.mxu0 0.0
        %683 = vmatpush1.msra.mxu0 0.0
        %684 = vmatprep.subr.mxu0 0.0
        %685 = vmatpush1.msra.mxu0 0.0
        %686 = vmatprep.subr.mxu0 0.0
        %687 = vmatpush1.msra.mxu0 0.0
        %688 = vmatprep.subr.mxu0 0.0
        %689 = vmatpush1.msra.mxu0 0.0
        %690 = vmatprep.subr.mxu0 0.0
        %691 = vmatpush1.msra.mxu0 0.0
        %692 = vmatprep.subr.mxu0 0.0
        %693 = vmatpush1.msra.mxu0 0.0
        %694 = vmatprep.subr.mxu0 0.0
        %695 = vmatpush1.msra.mxu0 0.0
        %696 = vmatprep.subr.mxu0 0.0
        %697 = vmatpush1.msra.mxu0 0.0
        %698 = vmatprep.subr.mxu0 0.0
        %699 = vmatpush1.msra.mxu0 0.0
        %700 = vmatprep.subr.mxu0 0.0
        %701 = vmatpush1.msra.mxu0 0.0
        %702 = vmatprep.subr.mxu0 0.0
        %703 = vmatpush1.msra.mxu0 0.0
        %704 = vmatprep.subr.mxu0 0.0
        %705 = vmatpush1.msra.mxu0 0.0
        %706 = vmatprep.subr.mxu0 0.0
        %707 = vmatpush1.msra.mxu0 0.0
        %708 = vmatprep.mubr.f32.mxu0 0.0
        %709 = vmatmul.mubr.f32.gmra.mrb[0].mxu0 %v498
        %v710 = vpop.f32.mrb[0].mxu0
        %v711 = vadd.f32 0.0, %v710
        %v712 = vpop.f32.mrb[0].mxu0
        %v713 = vadd.f32 0.0, %v712
        %714 = vdwg.mxu0
        %v715 = vadd.f32 %v505, %v640
        %v716 = vadd.f32 %v506, %v642
        %v717 = vadd.f32 %v507, %v711
        %v718 = vadd.f32 %v508, %v713
        %v719 = vxor.u32 %v715, 2147483648
        %v720 = vmul.f32 %v719, 1.442695
        %v721 = vpow.pop %v720
        %v722 = vadd.f32 %v721, 1.0
        %v723 = vrcp.pop %v722
        %v724 = vmul.f32 1.0, %v723
        %v725 = vxor.u32 %v716, 2147483648
        %v726 = vmul.f32 %v725, 1.442695
        %v727 = vpow.pop %v726
        %v728 = vadd.f32 %v727, 1.0
        %v729 = vrcp.pop %v728
        %v730 = vmul.f32 1.0, %v729
        %v731 = vtanh.pop %v717
        %v732 = vxor.u32 %v718, 2147483648
        %v733 = vmul.f32 %v732, 1.442695
        %v734 = vpow.pop %v733
        %v735 = vadd.f32 %v734, 1.0
        %v736 = vrcp.pop %v735
        %v737 = vmul.f32 1.0, %v736
        %v738 = vmul.f32 %v730, %v499
        %v739 = vmul.f32 %v724, %v731
        %v740 = vadd.f32 %v738, %v739
        %v741 = vtanh.pop %v740
        %v742 = vmul.f32 %v737, %v741
        %743 = vst [vmem:[#allocation2] sm:$0xff] %v742
        %744 = vst [vmem:[#allocation3] sm:$0xff] %v740
        %s745 = scalar_lea.vmem %s199, %s497
        %746 = vst [vmem:[%s745] sm:$0xff] %v742
      $region45: #{ar_step_forward.6} parent=35 // loop_footer
        %s496 = sadd.s32 1, %s492
      $region46: #{ar_step_forward.6} parent=35 // loop_footer_branch
        %491 = sbr.rel target = $region42
      $region47: #{ar_step_forward.6} parent=35 // loop_exit
        _
      %s747 = smul.u32 4, %s15
      %p748 = scmp.lt.s32.totalorder %s747, 7
      %s749 = scalar_select %p748, %s747, 7
      %s750 = smul.addr %s749, 8
      %s751 = scalar_lea.vmem %s4, %s750
      // Predicated region
      $region48: #{ar_step_forward.6} parent=35 // pred_check
        %p752 = pneg %p122
      $region49: #{ar_step_forward.6} parent=35 // pred_check_branch
        %754 = sbr.rel (%p752) target = $region51
      $region50: #{ar_step_forward.6} parent=35 // pred_region
        %s755 = smul.u32 4, %s15
      $region51: #{ar_step_forward.6} parent=35 // pred_fallthru
        _
    $region36: #{ar_step_forward.6} parent=5 // pred_fallthru
      _
    %p756 = scmp.le.s32.totalorder 2, %s10
    // Predicated region
    $region52: #{ar_step_forward.6} parent=5 // pred_check
      %p757 = pneg %p756
    $region53: #{ar_step_forward.6} parent=5 // pred_check_branch
      %759 = sbr.rel (%p757) target = $region55
    $region54: #{ar_step_forward.6} parent=5 // pred_region
      %s760 = ssub.s32 %s10, 2
      // Predicated region
      $region56: #{ar_step_forward.6} parent=54 // pred_check
        %p761 = pneg %p128
      $region57: #{ar_step_forward.6} parent=54 // pred_check_branch
        %763 = sbr.rel (%p761) target = $region59
      $region58: #{ar_step_forward.6} parent=54 // pred_region
        %s764 = smul.u32 4, %s16
        %p765 = scmp.lt.s32.totalorder %s764, 7
        %s766 = scalar_select %p765, %s764, 7
        %s767 = smul.addr %s766, 8
        %s768 = scalar_lea.vmem %s4, %s767
      $region59: #{ar_step_forward.6} parent=54 // pred_fallthru
        _
    $region55: #{ar_step_forward.6} parent=5 // pred_fallthru
      _
  $region6: #{ar_step_forward.6} parent=0 // loop_footer
    %s14 = sadd.s32 1, %s10
  $region7: #{ar_step_forward.6} parent=0 // loop_footer_branch
    %9 = sbr.rel target = $region3
  $region8: #{ar_step_forward.6} parent=0 // loop_exit
    _

// kernel: ar_step_forward.4
$region0: #{ar_step_forward.4}
  #allocation0 [shape = 'u32[]', space=smem, size = 0x4, offset = 0x4, fixed_abs, tag = 'smem constant byte address 0x4 - core index']
  #allocation1 [shape = 'u32[144,128]{1,0:T(1,128)}', space=vmem, size = 0x12000, scoped, tag = 'internal scratch']
  #allocation2 [shape = 'f32[8,128]{1,0:T(8,128)}', space=vmem, size = 0x1000, scoped, tag = 'scratch operand']
  #allocation3 [shape = 'f32[8,128]{1,0:T(8,128)}', space=vmem, size = 0x1000, scoped, tag = 'scratch operand']
  #allocation4 [shape = 'f32[32,512]{1,0:T(8,128)}', space=vmem, size = 0x10000, scoped, tag = 'scratch operand']
  %s0 = inlined_call_operand.vmem [shape: f32[64,4], index: 0, kind: input, shape index: {}]
  %s1 = inlined_call_operand.vmem [shape: f32[4,512], index: 1, kind: input, shape index: {}]
  %s2 = inlined_call_operand.hbm [shape: f32[128,512], index: 2, kind: input, shape index: {}]
  %s3 = inlined_call_operand.vmem [shape: f32[1,512], index: 3, kind: input, shape index: {}]
  %s4 = inlined_call_operand.vmem [shape: f32[64,128], index: 4, kind: output, shape index: {}]
  %s5 = sld [smem:[#allocation0]]
  $region64: #{ar_step_forward.4} parent=0
    _
  %s7 = ssub.s32 1, %s5
  %s8 = scalar_select 0, %s7, %s5
  $region1: #{ar_step_forward.4} parent=0
    #allocation5 [shape = 'u8[262144]{0}', space=vmem, size = 0x40000, scoped, tag = 'input window, operand 2, single buffered']
    #allocation6 [shape = 's32[2]{0}', space=sflag, size = 0x8, scoped, tag = 'scoped memory for ar_step_forward.4']
    %9 = vsyncpa [#allocation6], 0
    loop: start=0, step=1, limit=4
    $region2: #{ar_step_forward.4} parent=1 // loop_pre_header
      _
    $region3: #{ar_step_forward.4} parent=1 // loop_header
      %s11 = sphi 0, %s15
      %p12 = scmp.ge.s32.totalorder %s11, 4
      %s21 = sphi 0, %s23
      %s24 = sphi 0, %s21
      %s25 = sphi 0, %s24
      %s41 = sphi 0, %s25
      %s45 = sphi 0, %s45
      %s47 = sphi 0, %s45
      %s48 = sphi 0, %s47
      %s62 = sphi 0, %s48
      %s66 = sphi 0, %s66
      %s68 = sphi 0, %s66
      %s69 = sphi 0, %s68
      %s83 = sphi 0, %s69
      %s87 = sphi 0, %s87
      %s89 = sphi 0, %s87
      %s90 = sphi 0, %s89
      %s104 = sphi 0, %s90
      %s110 = sphi 0, %s112
      %s113 = sphi 0, %s110
      %s114 = sphi 0, %s113
      %s130 = sphi 0, %s114
    $region4: #{ar_step_forward.4} parent=1 // loop_header_branch
      %14 = sbr.rel (%p12) target = $region8
    $region5: #{ar_step_forward.4} parent=1 // loop_body
      %s16 = ssub.s32 %s11, 1
      %s17 = ssub.s32 %s11, 2
      %s18 = sadd.s32 %s11, 1
      %s19 = ssub.s32 %s11, %s18
      %p20 = scmp.eq.s32.totalorder %s19, 0
      %s22 = sadd.s32 %s21, 1
      %s23 = scalar_select %p20, %s21, %s22
      %p26 = pneg %p20
      %p27 = scmp.eq.s32.totalorder %s11, 1
      %p28 = por %p26, %p27
      %p29 = scmp.ne.s32.totalorder %s21, %s24
      %p30 = scmp.eq.s32.totalorder %s11, 0
      %p31 = por %p29, %p30
      %p32 = scmp.ne.s32.totalorder %s21, %s24
      %p33 = scmp.eq.s32.totalorder %s16, 1
      %p34 = por %p32, %p33
      %p35 = scmp.ne.s32.totalorder %s24, %s25
      %p36 = scmp.eq.s32.totalorder %s16, 0
      %p37 = por %p35, %p36
      %p38 = scmp.ne.s32.totalorder %s24, %s25
      %p39 = scmp.eq.s32.totalorder %s17, 1
      %p40 = por %p38, %p39
      %p42 = scmp.ne.s32.totalorder %s25, %s41
      %p43 = scmp.eq.s32.totalorder %s17, 0
      %p44 = por %p42, %p43
      %s46 = sadd.s32 %s45, 1
      %p49 = scmp.eq.s32.totalorder %s11, 1
      %p50 = scmp.ne.s32.totalorder %s45, %s47
      %p51 = scmp.eq.s32.totalorder %s11, 0
      %p52 = por %p50, %p51
      %p53 = scmp.ne.s32.totalorder %s45, %s47
      %p54 = scmp.eq.s32.totalorder %s16, 1
      %p55 = por %p53, %p54
      %p56 = scmp.ne.s32.totalorder %s47, %s48
      %p57 = scmp.eq.s32.totalorder %s16, 0
      %p58 = por %p56, %p57
      %p59 = scmp.ne.s32.totalorder %s47, %s48
      %p60 = scmp.eq.s32.totalorder %s17, 1
      %p61 = por %p59, %p60
      %p63 = scmp.ne.s32.totalorder %s48, %s62
      %p64 = scmp.eq.s32.totalorder %s17, 0
      %p65 = por %p63, %p64
      %s67 = sadd.s32 %s66, 1
      %p70 = scmp.eq.s32.totalorder %s11, 1
      %p71 = scmp.ne.s32.totalorder %s66, %s68
      %p72 = scmp.eq.s32.totalorder %s11, 0
      %p73 = por %p71, %p72
      %p74 = scmp.ne.s32.totalorder %s66, %s68
      %p75 = scmp.eq.s32.totalorder %s16, 1
      %p76 = por %p74, %p75
      %p77 = scmp.ne.s32.totalorder %s68, %s69
      %p78 = scmp.eq.s32.totalorder %s16, 0
      %p79 = por %p77, %p78
      %p80 = scmp.ne.s32.totalorder %s68, %s69
      %p81 = scmp.eq.s32.totalorder %s17, 1
      %p82 = por %p80, %p81
      %p84 = scmp.ne.s32.totalorder %s69, %s83
      %p85 = scmp.eq.s32.totalorder %s17, 0
      %p86 = por %p84, %p85
      %s88 = sadd.s32 %s87, 1
      %p91 = scmp.eq.s32.totalorder %s11, 1
      %p92 = scmp.ne.s32.totalorder %s87, %s89
      %p93 = scmp.eq.s32.totalorder %s11, 0
      %p94 = por %p92, %p93
      %p95 = scmp.ne.s32.totalorder %s87, %s89
      %p96 = scmp.eq.s32.totalorder %s16, 1
      %p97 = por %p95, %p96
      %p98 = scmp.ne.s32.totalorder %s89, %s90
      %p99 = scmp.eq.s32.totalorder %s16, 0
      %p100 = por %p98, %p99
      %p101 = scmp.ne.s32.totalorder %s89, %s90
      %p102 = scmp.eq.s32.totalorder %s17, 1
      %p103 = por %p101, %p102
      %p105 = scmp.ne.s32.totalorder %s90, %s104
      %p106 = scmp.eq.s32.totalorder %s17, 0
      %p107 = por %p105, %p106
      %s108 = ssub.s32 %s11, %s18
      %p109 = scmp.eq.s32.totalorder %s108, 0
      %s111 = sadd.s32 %s110, 1
      %s112 = scalar_select %p109, %s110, %s111
      %p115 = pneg %p109
      %p116 = scmp.eq.s32.totalorder %s11, 1
      %p117 = por %p115, %p116
      %p118 = scmp.ne.s32.totalorder %s110, %s113
      %p119 = scmp.eq.s32.totalorder %s11, 0
      %p120 = por %p118, %p119
      %p121 = scmp.ne.s32.totalorder %s110, %s113
      %p122 = scmp.eq.s32.totalorder %s16, 1
      %p123 = por %p121, %p122
      %p124 = scmp.ne.s32.totalorder %s113, %s114
      %p125 = scmp.eq.s32.totalorder %s16, 0
      %p126 = por %p124, %p125
      %p127 = scmp.ne.s32.totalorder %s113, %s114
      %p128 = scmp.eq.s32.totalorder %s17, 1
      %p129 = por %p127, %p128
      %p131 = scmp.ne.s32.totalorder %s114, %s130
      %p132 = scmp.eq.s32.totalorder %s17, 0
      %p133 = por %p131, %p132
      %p134 = scmp.le.s32.totalorder 1, %s11
      %p135 = scmp.lt.s32.totalorder %s11, 3
      %p136 = pnand %p134, %p135
      %p137 = pneg %p136
      // Predicated region
      $region9: #{ar_step_forward.4} parent=5 // pred_check
        _
      $region10: #{ar_step_forward.4} parent=5 // pred_check_branch
        %139 = sbr.rel (%p136) target = $region12
      $region11: #{ar_step_forward.4} parent=5 // pred_region
        %s140 = ssub.s32 %s11, 1
        // Predicated region
        $region13: #{ar_step_forward.4} parent=11 // pred_check
          %p141 = pneg %p58
        $region14: #{ar_step_forward.4} parent=11 // pred_check_branch
          %143 = sbr.rel (%p141) target = $region16
        $region15: #{ar_step_forward.4} parent=11 // pred_region
          _
        $region16: #{ar_step_forward.4} parent=11 // pred_fallthru
          _
        // Predicated region
        $region17: #{ar_step_forward.4} parent=11 // pred_check
          %p144 = pneg %p79
        $region18: #{ar_step_forward.4} parent=11 // pred_check_branch
          %146 = sbr.rel (%p144) target = $region20
        $region19: #{ar_step_forward.4} parent=11 // pred_region
          %s148 = ssub.s32 8192, 8192
          %149 = vsyncadd [#allocation6], %s148
          %s150 = sshll.u32 [#allocation5], 4
          %s151 = int_to_ptr.vmem [resolvable:$true] %s150
          %156 = dma.hbm_to_vmem [thread:$0]  %s2, 8192, %s151, [#allocation6], 512, 512, 32
        $region20: #{ar_step_forward.4} parent=11 // pred_fallthru
          _
        // Predicated region
        $region21: #{ar_step_forward.4} parent=11 // pred_check
          %p157 = pneg %p100
        $region22: #{ar_step_forward.4} parent=11 // pred_check_branch
          %159 = sbr.rel (%p157) target = $region24
        $region23: #{ar_step_forward.4} parent=11 // pred_region
          _
        $region24: #{ar_step_forward.4} parent=11 // pred_fallthru
          _
      $region12: #{ar_step_forward.4} parent=5 // pred_fallthru
        _
      %p160 = scmp.lt.s32.totalorder %s11, 2
      // Predicated region
      $region25: #{ar_step_forward.4} parent=5 // pred_check
        %p161 = pneg %p160
      $region26: #{ar_step_forward.4} parent=5 // pred_check_branch
        %163 = sbr.rel (%p161) target = $region28
      $region27: #{ar_step_forward.4} parent=5 // pred_region
        // Predicated region
        $region29: #{ar_step_forward.4} parent=27 // pred_check
          %p164 = pneg %p31
        $region30: #{ar_step_forward.4} parent=27 // pred_check_branch
          %166 = sbr.rel (%p164) target = $region32
        $region31: #{ar_step_forward.4} parent=27 // pred_region
          %s167 = smul.u32 4, %s11
          %p168 = scmp.lt.s32.totalorder %s167, 7
          %s169 = scalar_select %p168, %s167, 7
          %s170 = smul.addr %s169, 8
          %s171 = scalar_lea.vmem %s0, %s170
          %s172 = smul.u32 4, %s11
        $region32: #{ar_step_forward.4} parent=27 // pred_fallthru
          _
      $region28: #{ar_step_forward.4} parent=5 // pred_fallthru
        _
      %p173 = scmp.le.s32.totalorder 1, %s11
      %p174 = scmp.lt.s32.totalorder %s11, 3
      %p175 = pnand %p173, %p174
      %p176 = pneg %p175
      // Predicated region
      $region33: #{ar_step_forward.4} parent=5 // pred_check
        _
      $region34: #{ar_step_forward.4} parent=5 // pred_check_branch
        %178 = sbr.rel (%p175) target = $region36
      $region35: #{ar_step_forward.4} parent=5 // pred_region
        %s179 = ssub.s32 %s11, 1
        // Predicated region
        $region37: #{ar_step_forward.4} parent=35 // pred_check
          %p180 = pneg %p79
        $region38: #{ar_step_forward.4} parent=35 // pred_check_branch
          %182 = sbr.rel (%p180) target = $region40
        $region39: #{ar_step_forward.4} parent=35 // pred_region
          %183 = dma.done [#allocation6], 8192
        $region40: #{ar_step_forward.4} parent=35 // pred_fallthru
          _
        %s184 = smul.u32 4, %s16
        %p185 = scmp.lt.s32.totalorder %s184, 7
        %s186 = scalar_select %p185, %s184, 7
        %s187 = smul.addr %s186, 8
        %s188 = scalar_lea.vmem %s0, %s187
        %p189 = pneg %p37
        %p190 = pneg %p34
        %p191 = pneg %p58
        %p192 = pneg %p55
        %p193 = pneg %p79
        %p194 = pneg %p76
        %p195 = pneg %p100
        %p196 = pneg %p97
        %p197 = pneg %p126
        %p198 = pneg %p123
        %s199 = smul.u32 4, %s16
        %p200 = scmp.lt.s32.totalorder %s199, 7
        %s201 = scalar_select %p200, %s199, 7
        %s202 = smul.addr %s201, 8
        %s203 = scalar_lea.vmem %s4, %s202
        %s204 = smul.u32 4, %s16
        %p205 = scmp.lt.s32.totalorder %s204, 7
        %s206 = scalar_select %p205, %s204, 7
        %s207 = smul.addr %s206, 8
        %s208 = scalar_lea.vmem %s0, %s207
        %s209 = smul.u32 4, %s16
        %s210 = smul.u32 4, %s16
        %p211 = scmp.lt.s32.totalorder %s210, 7
        %s212 = scalar_select %p211, %s210, 7
        %s213 = smul.addr %s212, 8
        %s214 = scalar_lea.vmem %s4, %s213
        %s215 = smul.u32 4, %s16
        %p216 = scmp.eq.s32.totalorder %s16, 0
        // Predicated region
        $region41: #{ar_step_forward.4} parent=35 // pred_check
          %p217 = pneg %p216
        $region42: #{ar_step_forward.4} parent=35 // pred_check_branch
          %219 = sbr.rel (%p217) target = $region44
        $region43: #{ar_step_forward.4} parent=35 // pred_region
          %220 = vst [vmem:[#allocation2] sm:$0xff] 0.0
          %221 = vst [vmem:[#allocation3] sm:$0xff] 0.0
        $region44: #{ar_step_forward.4} parent=35 // pred_fallthru
          _
        %v222 = vld [vmem:[%s208] sm:$0xff]
        %v223 = vld [vmem:[%s208 + $0x8] sm:$0xff]
        %v224 = vld [vmem:[%s208 + $0x10] sm:$0xff]
        %v225 = vld [vmem:[%s208 + $0x18] sm:$0xff]
        %v226 = vld [vmem:[%s1] sm:$0xff]
        %v227 = vld [vmem:[%s1 + $0x8] sm:$0xff]
        %v228 = vld [vmem:[%s3] sm:$0xf]
        %v230 = vlaneseq
        %v231 = vshrl.u32 %v230, 7
        %v232 = vsub.s32 0, %v231
        %v233 = vrot.slane %v228, %v232
        %v234 = vlaneseq
        %v235 = vshrl.u32 %v234, 7
        %v236 = vsub.s32 1, %v235
        %v237 = vrot.slane %v228, %v236
        %v238 = vlaneseq
        %v239 = vshrl.u32 %v238, 7
        %v240 = vsub.s32 2, %v239
        %v241 = vrot.slane %v228, %v240
        %v242 = vlaneseq
        %v243 = vshrl.u32 %v242, 7
        %v244 = vsub.s32 3, %v243
        %v245 = vrot.slane %v228, %v244
        %v252 = vcombine.high %v226, %v226
        %v253 = vcombine.high %v227, %v227
        %vm254 = vcmask 31744
        %v256 = vsel %vm254, %v222, 0
        %v259 = vsel %vm254, %v223, 0
        %v262 = vsel %vm254, %v224, 0
        %v265 = vsel %vm254, %v225, 0
        %vm267 = vcmask 1043456
        %v268 = vsel %vm267, %v226, 0
        %v270 = vsel %vm267, %v252, 0
        %v272 = vsel %vm267, %v227, 0
        %v274 = vsel %vm267, %v253, 0
        %276 = vmatprep.subr.mxu0 %v270
        %277 = vmatpush1.msra.mxu0 %v268
        %278 = vmatprep.subr.mxu0 0.0
        %279 = vmatpush1.msra.mxu0 0.0
        %280 = vmatprep.subr.mxu0 0.0
        %281 = vmatpush1.msra.mxu0 0.0
        %282 = vmatprep.subr.mxu0 0.0
        %283 = vmatpush1.msra.mxu0 0.0
        %284 = vmatprep.subr.mxu0 0.0
        %285 = vmatpush1.msra.mxu0 0.0
        %286 = vmatprep.subr.mxu0 0.0
        %287 = vmatpush1.msra.mxu0 0.0
        %288 = vmatprep.subr.mxu0 0.0
        %289 = vmatpush1.msra.mxu0 0.0
        %290 = vmatprep.subr.mxu0 0.0
        %291 = vmatpush1.msra.mxu0 0.0
        %292 = vmatprep.subr.mxu0 0.0
        %293 = vmatpush1.msra.mxu0 0.0
        %294 = vmatprep.subr.mxu0 0.0
        %295 = vmatpush1.msra.mxu0 0.0
        %296 = vmatprep.subr.mxu0 0.0
        %297 = vmatpush1.msra.mxu0 0.0
        %298 = vmatprep.subr.mxu0 0.0
        %299 = vmatpush1.msra.mxu0 0.0
        %300 = vmatprep.subr.mxu0 0.0
        %301 = vmatpush1.msra.mxu0 0.0
        %302 = vmatprep.subr.mxu0 0.0
        %303 = vmatpush1.msra.mxu0 0.0
        %304 = vmatprep.subr.mxu0 0.0
        %305 = vmatpush1.msra.mxu0 0.0
        %306 = vmatprep.subr.mxu0 0.0
        %307 = vmatpush1.msra.mxu0 0.0
        %308 = vmatprep.subr.mxu0 0.0
        %309 = vmatpush1.msra.mxu0 0.0
        %310 = vmatprep.subr.mxu0 0.0
        %311 = vmatpush1.msra.mxu0 0.0
        %312 = vmatprep.subr.mxu0 0.0
        %313 = vmatpush1.msra.mxu0 0.0
        %314 = vmatprep.subr.mxu0 0.0
        %315 = vmatpush1.msra.mxu0 0.0
        %316 = vmatprep.subr.mxu0 0.0
        %317 = vmatpush1.msra.mxu0 0.0
        %318 = vmatprep.subr.mxu0 0.0
        %319 = vmatpush1.msra.mxu0 0.0
        %320 = vmatprep.subr.mxu0 0.0
        %321 = vmatpush1.msra.mxu0 0.0
        %322 = vmatprep.subr.mxu0 0.0
        %323 = vmatpush1.msra.mxu0 0.0
        %324 = vmatprep.subr.mxu0 0.0
        %325 = vmatpush1.msra.mxu0 0.0
        %326 = vmatprep.subr.mxu0 0.0
        %327 = vmatpush1.msra.mxu0 0.0
        %328 = vmatprep.subr.mxu0 0.0
        %329 = vmatpush1.msra.mxu0 0.0
        %330 = vmatprep.subr.mxu0 0.0
        %331 = vmatpush1.msra.mxu0 0.0
        %332 = vmatprep.subr.mxu0 0.0
        %333 = vmatpush1.msra.mxu0 0.0
        %334 = vmatprep.subr.mxu0 0.0
        %335 = vmatpush1.msra.mxu0 0.0
        %336 = vmatprep.subr.mxu0 0.0
        %337 = vmatpush1.msra.mxu0 0.0
        %338 = vmatprep.subr.mxu0 0.0
        %339 = vmatpush1.msra.mxu0 0.0
        %340 = vmatprep.mubr.f32.mxu0 0.0
        %341 = vmatmul.mubr.f32.gmra.mrb[0].mxu0 %v256
        %v342 = vpop.f32.mrb[0].mxu0
        %v343 = vadd.f32 %v233, %v342
        %v344 = vpop.f32.mrb[0].mxu0
        %v345 = vadd.f32 %v237, %v344
        %346 = vmatprep.mubr.f32.mxu0 0.0
        %347 = vmatmul.mubr.f32.gmra.mrb[0].mxu0 %v259
        %v348 = vpop.f32.mrb[0].mxu0
        %v349 = vadd.f32 %v233, %v348
        %v350 = vpop.f32.mrb[0].mxu0
        %v351 = vadd.f32 %v237, %v350
        %352 = vmatprep.mubr.f32.mxu0 0.0
        %353 = vmatmul.mubr.f32.gmra.mrb[0].mxu0 %v262
        %v354 = vpop.f32.mrb[0].mxu0
        %v355 = vadd.f32 %v233, %v354
        %v356 = vpop.f32.mrb[0].mxu0
        %v357 = vadd.f32 %v237, %v356
        %358 = vmatprep.mubr.f32.mxu0 0.0
        %359 = vmatmul.mubr.f32.gmra.mrb[0].mxu0 %v265
        %v360 = vpop.f32.mrb[0].mxu0
        %v361 = vadd.f32 %v233, %v360
        %v362 = vpop.f32.mrb[0].mxu0
        %v363 = vadd.f32 %v237, %v362
        %364 = vdwg.mxu0
        %365 = vmatprep.subr.mxu0 %v274
        %366 = vmatpush1.msra.mxu0 %v272
        %367 = vmatprep.subr.mxu0 0.0
        %368 = vmatpush1.msra.mxu0 0.0
        %369 = vmatprep.subr.mxu0 0.0
        %370 = vmatpush1.msra.mxu0 0.0
        %371 = vmatprep.subr.mxu0 0.0
        %372 = vmatpush1.msra.mxu0 0.0
        %373 = vmatprep.subr.mxu0 0.0
        %374 = vmatpush1.msra.mxu0 0.0
        %375 = vmatprep.subr.mxu0 0.0
        %376 = vmatpush1.msra.mxu0 0.0
        %377 = vmatprep.subr.mxu0 0.0
        %378 = vmatpush1.msra.mxu0 0.0
        %379 = vmatprep.subr.mxu0 0.0
        %380 = vmatpush1.msra.mxu0 0.0
        %381 = vmatprep.subr.mxu0 0.0
        %382 = vmatpush1.msra.mxu0 0.0
        %383 = vmatprep.subr.mxu0 0.0
        %384 = vmatpush1.msra.mxu0 0.0
        %385 = vmatprep.subr.mxu0 0.0
        %386 = vmatpush1.msra.mxu0 0.0
        %387 = vmatprep.subr.mxu0 0.0
        %388 = vmatpush1.msra.mxu0 0.0
        %389 = vmatprep.subr.mxu0 0.0
        %390 = vmatpush1.msra.mxu0 0.0
        %391 = vmatprep.subr.mxu0 0.0
        %392 = vmatpush1.msra.mxu0 0.0
        %393 = vmatprep.subr.mxu0 0.0
        %394 = vmatpush1.msra.mxu0 0.0
        %395 = vmatprep.subr.mxu0 0.0
        %396 = vmatpush1.msra.mxu0 0.0
        %397 = vmatprep.subr.mxu0 0.0
        %398 = vmatpush1.msra.mxu0 0.0
        %399 = vmatprep.subr.mxu0 0.0
        %400 = vmatpush1.msra.mxu0 0.0
        %401 = vmatprep.subr.mxu0 0.0
        %402 = vmatpush1.msra.mxu0 0.0
        %403 = vmatprep.subr.mxu0 0.0
        %404 = vmatpush1.msra.mxu0 0.0
        %405 = vmatprep.subr.mxu0 0.0
        %406 = vmatpush1.msra.mxu0 0.0
        %407 = vmatprep.subr.mxu0 0.0
        %408 = vmatpush1.msra.mxu0 0.0
        %409 = vmatprep.subr.mxu0 0.0
        %410 = vmatpush1.msra.mxu0 0.0
        %411 = vmatprep.subr.mxu0 0.0
        %412 = vmatpush1.msra.mxu0 0.0
        %413 = vmatprep.subr.mxu0 0.0
        %414 = vmatpush1.msra.mxu0 0.0
        %415 = vmatprep.subr.mxu0 0.0
        %416 = vmatpush1.msra.mxu0 0.0
        %417 = vmatprep.subr.mxu0 0.0
        %418 = vmatpush1.msra.mxu0 0.0
        %419 = vmatprep.subr.mxu0 0.0
        %420 = vmatpush1.msra.mxu0 0.0
        %421 = vmatprep.subr.mxu0 0.0
        %422 = vmatpush1.msra.mxu0 0.0
        %423 = vmatprep.subr.mxu0 0.0
        %424 = vmatpush1.msra.mxu0 0.0
        %425 = vmatprep.subr.mxu0 0.0
        %426 = vmatpush1.msra.mxu0 0.0
        %427 = vmatprep.subr.mxu0 0.0
        %428 = vmatpush1.msra.mxu0 0.0
        %429 = vmatprep.mubr.f32.mxu0 0.0
        %430 = vmatmul.mubr.f32.gmra.mrb[0].mxu0 %v256
        %v431 = vpop.f32.mrb[0].mxu0
        %v432 = vadd.f32 %v241, %v431
        %v433 = vpop.f32.mrb[0].mxu0
        %v434 = vadd.f32 %v245, %v433
        %435 = vmatprep.mubr.f32.mxu0 0.0
        %436 = vmatmul.mubr.f32.gmra.mrb[0].mxu0 %v259
        %v437 = vpop.f32.mrb[0].mxu0
        %v438 = vadd.f32 %v241, %v437
        %v439 = vpop.f32.mrb[0].mxu0
        %v440 = vadd.f32 %v245, %v439
        %441 = vmatprep.mubr.f32.mxu0 0.0
        %442 = vmatmul.mubr.f32.gmra.mrb[0].mxu0 %v262
        %v443 = vpop.f32.mrb[0].mxu0
        %v444 = vadd.f32 %v241, %v443
        %v445 = vpop.f32.mrb[0].mxu0
        %v446 = vadd.f32 %v245, %v445
        %447 = vmatprep.mubr.f32.mxu0 0.0
        %448 = vmatmul.mubr.f32.gmra.mrb[0].mxu0 %v265
        %v449 = vpop.f32.mrb[0].mxu0
        %v450 = vadd.f32 %v241, %v449
        %v451 = vpop.f32.mrb[0].mxu0
        %v452 = vadd.f32 %v245, %v451
        %453 = vdwg.mxu0
        %454 = vst [vmem:[#allocation4] sm:$0xff] %v343
        %455 = vst [vmem:[#allocation4 + $0x8] sm:$0xff] %v345
        %456 = vst [vmem:[#allocation4 + $0x10] sm:$0xff] %v432
        %457 = vst [vmem:[#allocation4 + $0x18] sm:$0xff] %v434
        %458 = vst [vmem:[#allocation4 + $0x20] sm:$0xff] %v349
        %459 = vst [vmem:[#allocation4 + $0x28] sm:$0xff] %v351
        %460 = vst [vmem:[#allocation4 + $0x30] sm:$0xff] %v438
        %461 = vst [vmem:[#allocation4 + $0x38] sm:$0xff] %v440
        %462 = vst [vmem:[#allocation4 + $0x40] sm:$0xff] %v355
        %463 = vst [vmem:[#allocation4 + $0x48] sm:$0xff] %v357
        %464 = vst [vmem:[#allocation4 + $0x50] sm:$0xff] %v444
        %465 = vst [vmem:[#allocation4 + $0x58] sm:$0xff] %v446
        %466 = vst [vmem:[#allocation4 + $0x60] sm:$0xff] %v361
        %467 = vst [vmem:[#allocation4 + $0x68] sm:$0xff] %v363
        %468 = vst [vmem:[#allocation4 + $0x70] sm:$0xff] %v450
        %469 = vst [vmem:[#allocation4 + $0x78] sm:$0xff] %v452
        loop: start=0, step=1, limit=4
        $region45: #{ar_step_forward.4} parent=35 // loop_pre_header
          _
        $region46: #{ar_step_forward.4} parent=35 // loop_header
          %s471 = sphi 0, %s475
          %p472 = scmp.ge.s32.totalorder %s471, 4
        $region47: #{ar_step_forward.4} parent=35 // loop_header_branch
          %474 = sbr.rel (%p472) target = $region51
        $region48: #{ar_step_forward.4} parent=35 // loop_body
          %s476 = smul.u32 %s471, 8
          %v477 = vld [vmem:[#allocation2] sm:$0xff]
          %v478 = vld [vmem:[#allocation3] sm:$0xff]
          %s479 = sshra.s32 %s476, 3
          %s480 = sand.u32 %s476, 7
          %s481 = smul.u32 %s479, 4
          %s482 = smul.addr %s481, 8
          %s483 = scalar_lea.vmem [#allocation4], %s482
          %v484 = vld [vmem:[%s483] sm:$0xff]
          %v485 = vld [vmem:[%s483 + $0x8] sm:$0xff]
          %v486 = vld [vmem:[%s483 + $0x10] sm:$0xff]
          %v487 = vld [vmem:[%s483 + $0x18] sm:$0xff]
          %v488 = vld [vmem:[#allocation5] sm:$0xff]
          %v489 = vld [vmem:[#allocation5 + $0x8] sm:$0xff]
          %v490 = vld [vmem:[#allocation5 + $0x10] sm:$0xff]
          %v491 = vld [vmem:[#allocation5 + $0x18] sm:$0xff]
          %v492 = vld [vmem:[#allocation5 + $0x20] sm:$0xff]
          %v493 = vld [vmem:[#allocation5 + $0x28] sm:$0xff]
          %v494 = vld [vmem:[#allocation5 + $0x30] sm:$0xff]
          %v495 = vld [vmem:[#allocation5 + $0x38] sm:$0xff]
          %v496 = vld [vmem:[#allocation5 + $0x40] sm:$0xff]
          %v497 = vld [vmem:[#allocation5 + $0x48] sm:$0xff]
          %v498 = vld [vmem:[#allocation5 + $0x50] sm:$0xff]
          %v499 = vld [vmem:[#allocation5 + $0x58] sm:$0xff]
          %v500 = vld [vmem:[#allocation5 + $0x60] sm:$0xff]
          %v501 = vld [vmem:[#allocation5 + $0x68] sm:$0xff]
          %v502 = vld [vmem:[#allocation5 + $0x70] sm:$0xff]
          %v503 = vld [vmem:[#allocation5 + $0x78] sm:$0xff]
          %v504 = vld [vmem:[#allocation5 + $0x80] sm:$0xff]
          %v505 = vld [vmem:[#allocation5 + $0x88] sm:$0xff]
          %v506 = vld [vmem:[#allocation5 + $0x90] sm:$0xff]
          %v507 = vld [vmem:[#allocation5 + $0x98] sm:$0xff]
          %v508 = vld [vmem:[#allocation5 + $0xa0] sm:$0xff]
          %v509 = vld [vmem:[#allocation5 + $0xa8] sm:$0xff]
          %v510 = vld [vmem:[#allocation5 + $0xb0] sm:$0xff]
          %v511 = vld [vmem:[#allocation5 + $0xb8] sm:$0xff]
          %v512 = vld [vmem:[#allocation5 + $0xc0] sm:$0xff]
          %v513 = vld [vmem:[#allocation5 + $0xc8] sm:$0xff]
          %v514 = vld [vmem:[#allocation5 + $0xd0] sm:$0xff]
          %v515 = vld [vmem:[#allocation5 + $0xd8] sm:$0xff]
          %v516 = vld [vmem:[#allocation5 + $0xe0] sm:$0xff]
          %v517 = vld [vmem:[#allocation5 + $0xe8] sm:$0xff]
          %v518 = vld [vmem:[#allocation5 + $0xf0] sm:$0xff]
          %v519 = vld [vmem:[#allocation5 + $0xf8] sm:$0xff]
          %v520 = vld [vmem:[#allocation5 + $0x100] sm:$0xff]
          %v521 = vld [vmem:[#allocation5 + $0x108] sm:$0xff]
          %v522 = vld [vmem:[#allocation5 + $0x110] sm:$0xff]
          %v523 = vld [vmem:[#allocation5 + $0x118] sm:$0xff]
          %v524 = vld [vmem:[#allocation5 + $0x120] sm:$0xff]
          %v525 = vld [vmem:[#allocation5 + $0x128] sm:$0xff]
          %v526 = vld [vmem:[#allocation5 + $0x130] sm:$0xff]
          %v527 = vld [vmem:[#allocation5 + $0x138] sm:$0xff]
          %v528 = vld [vmem:[#allocation5 + $0x140] sm:$0xff]
          %v529 = vld [vmem:[#allocation5 + $0x148] sm:$0xff]
          %v530 = vld [vmem:[#allocation5 + $0x150] sm:$0xff]
          %v531 = vld [vmem:[#allocation5 + $0x158] sm:$0xff]
          %v532 = vld [vmem:[#allocation5 + $0x160] sm:$0xff]
          %v533 = vld [vmem:[#allocation5 + $0x168] sm:$0xff]
          %v534 = vld [vmem:[#allocation5 + $0x170] sm:$0xff]
          %v535 = vld [vmem:[#allocation5 + $0x178] sm:$0xff]
          %v536 = vld [vmem:[#allocation5 + $0x180] sm:$0xff]
          %v537 = vld [vmem:[#allocation5 + $0x188] sm:$0xff]
          %v538 = vld [vmem:[#allocation5 + $0x190] sm:$0xff]
          %v539 = vld [vmem:[#allocation5 + $0x198] sm:$0xff]
          %v540 = vld [vmem:[#allocation5 + $0x1a0] sm:$0xff]
          %v541 = vld [vmem:[#allocation5 + $0x1a8] sm:$0xff]
          %v542 = vld [vmem:[#allocation5 + $0x1b0] sm:$0xff]
          %v543 = vld [vmem:[#allocation5 + $0x1b8] sm:$0xff]
          %v544 = vld [vmem:[#allocation5 + $0x1c0] sm:$0xff]
          %v545 = vld [vmem:[#allocation5 + $0x1c8] sm:$0xff]
          %v546 = vld [vmem:[#allocation5 + $0x1d0] sm:$0xff]
          %v547 = vld [vmem:[#allocation5 + $0x1d8] sm:$0xff]
          %v548 = vld [vmem:[#allocation5 + $0x1e0] sm:$0xff]
          %v549 = vld [vmem:[#allocation5 + $0x1e8] sm:$0xff]
          %v550 = vld [vmem:[#allocation5 + $0x1f0] sm:$0xff]
          %v551 = vld [vmem:[#allocation5 + $0x1f8] sm:$0xff]
          %552 = vmatprep.subr.mxu0 %v489
          %553 = vmatpush1.msra.mxu0 %v488
          %554 = vmatprep.subr.mxu0 %v493
          %555 = vmatpush1.msra.mxu0 %v492
          %556 = vmatprep.subr.mxu0 %v497
          %557 = vmatpush1.msra.mxu0 %v496
          %558 = vmatprep.subr.mxu0 %v501
          %559 = vmatpush1.msra.mxu0 %v500
          %560 = vmatprep.subr.mxu0 %v505
          %561 = vmatpush1.msra.mxu0 %v504
          %562 = vmatprep.subr.mxu0 %v509
          %563 = vmatpush1.msra.mxu0 %v508
          %564 = vmatprep.subr.mxu0 %v513
          %565 = vmatpush1.msra.mxu0 %v512
          %566 = vmatprep.subr.mxu0 %v517
          %567 = vmatpush1.msra.mxu0 %v516
          %568 = vmatprep.subr.mxu0 %v521
          %569 = vmatpush1.msra.mxu0 %v520
          %570 = vmatprep.subr.mxu0 %v525
          %571 = vmatpush1.msra.mxu0 %v524
          %572 = vmatprep.subr.mxu0 %v529
          %573 = vmatpush1.msra.mxu0 %v528
          %574 = vmatprep.subr.mxu0 %v533
          %575 = vmatpush1.msra.mxu0 %v532
          %576 = vmatprep.subr.mxu0 %v537
          %577 = vmatpush1.msra.mxu0 %v536
          %578 = vmatprep.subr.mxu0 %v541
          %579 = vmatpush1.msra.mxu0 %v540
          %580 = vmatprep.subr.mxu0 %v545
          %581 = vmatpush1.msra.mxu0 %v544
          %582 = vmatprep.subr.mxu0 %v549
          %583 = vmatpush1.msra.mxu0 %v548
          %584 = vmatprep.subr.mxu0 0.0
          %585 = vmatpush1.msra.mxu0 0.0
          %586 = vmatprep.subr.mxu0 0.0
          %587 = vmatpush1.msra.mxu0 0.0
          %588 = vmatprep.subr.mxu0 0.0
          %589 = vmatpush1.msra.mxu0 0.0
          %590 = vmatprep.subr.mxu0 0.0
          %591 = vmatpush1.msra.mxu0 0.0
          %592 = vmatprep.subr.mxu0 0.0
          %593 = vmatpush1.msra.mxu0 0.0
          %594 = vmatprep.subr.mxu0 0.0
          %595 = vmatpush1.msra.mxu0 0.0
          %596 = vmatprep.subr.mxu0 0.0
          %597 = vmatpush1.msra.mxu0 0.0
          %598 = vmatprep.subr.mxu0 0.0
          %599 = vmatpush1.msra.mxu0 0.0
          %600 = vmatprep.subr.mxu0 0.0
          %601 = vmatpush1.msra.mxu0 0.0
          %602 = vmatprep.subr.mxu0 0.0
          %603 = vmatpush1.msra.mxu0 0.0
          %604 = vmatprep.subr.mxu0 0.0
          %605 = vmatpush1.msra.mxu0 0.0
          %606 = vmatprep.subr.mxu0 0.0
          %607 = vmatpush1.msra.mxu0 0.0
          %608 = vmatprep.subr.mxu0 0.0
          %609 = vmatpush1.msra.mxu0 0.0
          %610 = vmatprep.subr.mxu0 0.0
          %611 = vmatpush1.msra.mxu0 0.0
          %612 = vmatprep.subr.mxu0 0.0
          %613 = vmatpush1.msra.mxu0 0.0
          %614 = vmatprep.subr.mxu0 0.0
          %615 = vmatpush1.msra.mxu0 0.0
          %616 = vmatprep.mubr.f32.mxu0 0.0
          %617 = vmatmul.mubr.f32.gmra.mrb[0].mxu0 %v477
          %v618 = vpop.f32.mrb[0].mxu0
          %v619 = vadd.f32 0.0, %v618
          %v620 = vpop.f32.mrb[0].mxu0
          %v621 = vadd.f32 0.0, %v620
          %622 = vdwg.mxu0
          %623 = vmatprep.subr.mxu0 %v491
          %624 = vmatpush1.msra.mxu0 %v490
          %625 = vmatprep.subr.mxu0 %v495
          %626 = vmatpush1.msra.mxu0 %v494
          %627 = vmatprep.subr.mxu0 %v499
          %628 = vmatpush1.msra.mxu0 %v498
          %629 = vmatprep.subr.mxu0 %v503
          %630 = vmatpush1.msra.mxu0 %v502
          %631 = vmatprep.subr.mxu0 %v507
          %632 = vmatpush1.msra.mxu0 %v506
          %633 = vmatprep.subr.mxu0 %v511
          %634 = vmatpush1.msra.mxu0 %v510
          %635 = vmatprep.subr.mxu0 %v515
          %636 = vmatpush1.msra.mxu0 %v514
          %637 = vmatprep.subr.mxu0 %v519
          %638 = vmatpush1.msra.mxu0 %v518
          %639 = vmatprep.subr.mxu0 %v523
          %640 = vmatpush1.msra.mxu0 %v522
          %641 = vmatprep.subr.mxu0 %v527
          %642 = vmatpush1.msra.mxu0 %v526
          %643 = vmatprep.subr.mxu0 %v531
          %644 = vmatpush1.msra.mxu0 %v530
          %645 = vmatprep.subr.mxu0 %v535
          %646 = vmatpush1.msra.mxu0 %v534
          %647 = vmatprep.subr.mxu0 %v539
          %648 = vmatpush1.msra.mxu0 %v538
          %649 = vmatprep.subr.mxu0 %v543
          %650 = vmatpush1.msra.mxu0 %v542
          %651 = vmatprep.subr.mxu0 %v547
          %652 = vmatpush1.msra.mxu0 %v546
          %653 = vmatprep.subr.mxu0 %v551
          %654 = vmatpush1.msra.mxu0 %v550
          %655 = vmatprep.subr.mxu0 0.0
          %656 = vmatpush1.msra.mxu0 0.0
          %657 = vmatprep.subr.mxu0 0.0
          %658 = vmatpush1.msra.mxu0 0.0
          %659 = vmatprep.subr.mxu0 0.0
          %660 = vmatpush1.msra.mxu0 0.0
          %661 = vmatprep.subr.mxu0 0.0
          %662 = vmatpush1.msra.mxu0 0.0
          %663 = vmatprep.subr.mxu0 0.0
          %664 = vmatpush1.msra.mxu0 0.0
          %665 = vmatprep.subr.mxu0 0.0
          %666 = vmatpush1.msra.mxu0 0.0
          %667 = vmatprep.subr.mxu0 0.0
          %668 = vmatpush1.msra.mxu0 0.0
          %669 = vmatprep.subr.mxu0 0.0
          %670 = vmatpush1.msra.mxu0 0.0
          %671 = vmatprep.subr.mxu0 0.0
          %672 = vmatpush1.msra.mxu0 0.0
          %673 = vmatprep.subr.mxu0 0.0
          %674 = vmatpush1.msra.mxu0 0.0
          %675 = vmatprep.subr.mxu0 0.0
          %676 = vmatpush1.msra.mxu0 0.0
          %677 = vmatprep.subr.mxu0 0.0
          %678 = vmatpush1.msra.mxu0 0.0
          %679 = vmatprep.subr.mxu0 0.0
          %680 = vmatpush1.msra.mxu0 0.0
          %681 = vmatprep.subr.mxu0 0.0
          %682 = vmatpush1.msra.mxu0 0.0
          %683 = vmatprep.subr.mxu0 0.0
          %684 = vmatpush1.msra.mxu0 0.0
          %685 = vmatprep.subr.mxu0 0.0
          %686 = vmatpush1.msra.mxu0 0.0
          %687 = vmatprep.mubr.f32.mxu0 0.0
          %688 = vmatmul.mubr.f32.gmra.mrb[0].mxu0 %v477
          %v689 = vpop.f32.mrb[0].mxu0
          %v690 = vadd.f32 0.0, %v689
          %v691 = vpop.f32.mrb[0].mxu0
          %v692 = vadd.f32 0.0, %v691
          %693 = vdwg.mxu0
          %v694 = vadd.f32 %v484, %v619
          %v695 = vadd.f32 %v485, %v621
          %v696 = vadd.f32 %v486, %v690
          %v697 = vadd.f32 %v487, %v692
          %v698 = vxor.u32 %v694, 2147483648
          %v699 = vmul.f32 %v698, 1.442695
          %v700 = vpow.pop %v699
          %v701 = vadd.f32 %v700, 1.0
          %v702 = vrcp.pop %v701
          %v703 = vmul.f32 1.0, %v702
          %v704 = vxor.u32 %v695, 2147483648
          %v705 = vmul.f32 %v704, 1.442695
          %v706 = vpow.pop %v705
          %v707 = vadd.f32 %v706, 1.0
          %v708 = vrcp.pop %v707
          %v709 = vmul.f32 1.0, %v708
          %v710 = vtanh.pop %v696
          %v711 = vxor.u32 %v697, 2147483648
          %v712 = vmul.f32 %v711, 1.442695
          %v713 = vpow.pop %v712
          %v714 = vadd.f32 %v713, 1.0
          %v715 = vrcp.pop %v714
          %v716 = vmul.f32 1.0, %v715
          %v717 = vmul.f32 %v709, %v478
          %v718 = vmul.f32 %v703, %v710
          %v719 = vadd.f32 %v717, %v718
          %v720 = vtanh.pop %v719
          %v721 = vmul.f32 %v716, %v720
          %722 = vst [vmem:[#allocation2] sm:$0xff] %v721
          %723 = vst [vmem:[#allocation3] sm:$0xff] %v719
          %s724 = scalar_lea.vmem %s214, %s476
          %725 = vst [vmem:[%s724] sm:$0xff] %v721
        $region49: #{ar_step_forward.4} parent=35 // loop_footer
          %s475 = sadd.s32 1, %s471
        $region50: #{ar_step_forward.4} parent=35 // loop_footer_branch
          %470 = sbr.rel target = $region46
        $region51: #{ar_step_forward.4} parent=35 // loop_exit
          _
        %s726 = smul.u32 4, %s16
        %p727 = scmp.lt.s32.totalorder %s726, 7
        %s728 = scalar_select %p727, %s726, 7
        %s729 = smul.addr %s728, 8
        %s730 = scalar_lea.vmem %s4, %s729
        // Predicated region
        $region52: #{ar_step_forward.4} parent=35 // pred_check
          %p731 = pneg %p123
        $region53: #{ar_step_forward.4} parent=35 // pred_check_branch
          %733 = sbr.rel (%p731) target = $region55
        $region54: #{ar_step_forward.4} parent=35 // pred_region
          %s734 = smul.u32 4, %s16
        $region55: #{ar_step_forward.4} parent=35 // pred_fallthru
          _
      $region36: #{ar_step_forward.4} parent=5 // pred_fallthru
        _
      %p735 = scmp.le.s32.totalorder 2, %s11
      // Predicated region
      $region56: #{ar_step_forward.4} parent=5 // pred_check
        %p736 = pneg %p735
      $region57: #{ar_step_forward.4} parent=5 // pred_check_branch
        %738 = sbr.rel (%p736) target = $region59
      $region58: #{ar_step_forward.4} parent=5 // pred_region
        %s739 = ssub.s32 %s11, 2
        // Predicated region
        $region60: #{ar_step_forward.4} parent=58 // pred_check
          %p740 = pneg %p129
        $region61: #{ar_step_forward.4} parent=58 // pred_check_branch
          %742 = sbr.rel (%p740) target = $region63
        $region62: #{ar_step_forward.4} parent=58 // pred_region
          %s743 = smul.u32 4, %s17
          %p744 = scmp.lt.s32.totalorder %s743, 7
          %s745 = scalar_select %p744, %s743, 7
          %s746 = smul.addr %s745, 8
          %s747 = scalar_lea.vmem %s4, %s746
        $region63: #{ar_step_forward.4} parent=58 // pred_fallthru
          _
      $region59: #{ar_step_forward.4} parent=5 // pred_fallthru
        _
    $region6: #{ar_step_forward.4} parent=1 // loop_footer
      %s15 = sadd.s32 1, %s11
    $region7: #{ar_step_forward.4} parent=1 // loop_footer_branch
      %10 = sbr.rel target = $region3
    $region8: #{ar_step_forward.4} parent=1 // loop_exit
      _
    %748 = vsyncpa [#allocation6], 1
    %s749 = scalar_lea.sflag [#allocation6], 1
    %750 = vsyncpa %s749, 1

// kernel: ar_step_forward.5
$region0: #{ar_step_forward.5}
  #allocation0 [shape = 'u32[]', space=smem, size = 0x4, offset = 0x4, fixed_abs, tag = 'smem constant byte address 0x4 - core index']
  #allocation1 [shape = 'u32[144,128]{1,0:T(1,128)}', space=vmem, size = 0x12000, scoped, tag = 'internal scratch']
  #allocation2 [shape = 'f32[8,128]{1,0:T(8,128)}', space=vmem, size = 0x1000, scoped, tag = 'scratch operand']
  #allocation3 [shape = 'f32[8,128]{1,0:T(8,128)}', space=vmem, size = 0x1000, scoped, tag = 'scratch operand']
  #allocation4 [shape = 'f32[32,512]{1,0:T(8,128)}', space=vmem, size = 0x10000, scoped, tag = 'scratch operand']
  %s0 = inlined_call_operand.vmem [shape: f32[64,128], index: 0, kind: input, shape index: {}]
  %s1 = inlined_call_operand.vmem [shape: f32[64,24], index: 1, kind: input, shape index: {}]
  %s2 = inlined_call_operand.vmem [shape: f32[128,512], index: 2, kind: input, shape index: {}]
  %s3 = inlined_call_operand.vmem [shape: f32[24,512], index: 3, kind: input, shape index: {}]
  %s4 = inlined_call_operand.hbm [shape: f32[128,512], index: 4, kind: input, shape index: {}]
  %s5 = inlined_call_operand.vmem [shape: f32[1,512], index: 5, kind: input, shape index: {}]
  %s6 = inlined_call_operand.vmem [shape: f32[64,128], index: 6, kind: output, shape index: {}]
  %s7 = sld [smem:[#allocation0]]
  $region72: #{ar_step_forward.5} parent=0
    _
  %s9 = ssub.s32 1, %s7
  %s10 = scalar_select 0, %s9, %s7
  $region1: #{ar_step_forward.5} parent=0
    #allocation5 [shape = 'u8[262144]{0}', space=vmem, size = 0x40000, scoped, tag = 'input window, operand 4, single buffered']
    #allocation6 [shape = 's32[2]{0}', space=sflag, size = 0x8, scoped, tag = 'scoped memory for ar_step_forward.5']
    %11 = vsyncpa [#allocation6], 0
    loop: start=0, step=1, limit=4
    $region2: #{ar_step_forward.5} parent=1 // loop_pre_header
      _
    $region3: #{ar_step_forward.5} parent=1 // loop_header
      %s13 = sphi 0, %s17
      %p14 = scmp.ge.s32.totalorder %s13, 4
      %s23 = sphi 0, %s25
      %s26 = sphi 0, %s23
      %s27 = sphi 0, %s26
      %s43 = sphi 0, %s27
      %s49 = sphi 0, %s51
      %s52 = sphi 0, %s49
      %s53 = sphi 0, %s52
      %s69 = sphi 0, %s53
      %s73 = sphi 0, %s73
      %s75 = sphi 0, %s73
      %s76 = sphi 0, %s75
      %s90 = sphi 0, %s76
      %s94 = sphi 0, %s94
      %s96 = sphi 0, %s94
      %s97 = sphi 0, %s96
      %s111 = sphi 0, %s97
      %s115 = sphi 0, %s115
      %s117 = sphi 0, %s115
      %s118 = sphi 0, %s117
      %s132 = sphi 0, %s118
      %s136 = sphi 0, %s136
      %s138 = sphi 0, %s136
      %s139 = sphi 0, %s138
      %s153 = sphi 0, %s139
      %s159 = sphi 0, %s161
      %s162 = sphi 0, %s159
      %s163 = sphi 0, %s162
      %s179 = sphi 0, %s163
    $region4: #{ar_step_forward.5} parent=1 // loop_header_branch
      %16 = sbr.rel (%p14) target = $region8
    $region5: #{ar_step_forward.5} parent=1 // loop_body
      %s18 = ssub.s32 %s13, 1
      %s19 = ssub.s32 %s13, 2
      %s20 = sadd.s32 %s13, 1
      %s21 = ssub.s32 %s13, %s20
      %p22 = scmp.eq.s32.totalorder %s21, 0
      %s24 = sadd.s32 %s23, 1
      %s25 = scalar_select %p22, %s23, %s24
      %p28 = pneg %p22
      %p29 = scmp.eq.s32.totalorder %s13, 1
      %p30 = por %p28, %p29
      %p31 = scmp.ne.s32.totalorder %s23, %s26
      %p32 = scmp.eq.s32.totalorder %s13, 0
      %p33 = por %p31, %p32
      %p34 = scmp.ne.s32.totalorder %s23, %s26
      %p35 = scmp.eq.s32.totalorder %s18, 1
      %p36 = por %p34, %p35
      %p37 = scmp.ne.s32.totalorder %s26, %s27
      %p38 = scmp.eq.s32.totalorder %s18, 0
      %p39 = por %p37, %p38
      %p40 = scmp.ne.s32.totalorder %s26, %s27
      %p41 = scmp.eq.s32.totalorder %s19, 1
      %p42 = por %p40, %p41
      %p44 = scmp.ne.s32.totalorder %s27, %s43
      %p45 = scmp.eq.s32.totalorder %s19, 0
      %p46 = por %p44, %p45
      %s47 = ssub.s32 %s13, %s20
      %p48 = scmp.eq.s32.totalorder %s47, 0
      %s50 = sadd.s32 %s49, 1
      %s51 = scalar_select %p48, %s49, %s50
      %p54 = pneg %p48
      %p55 = scmp.eq.s32.totalorder %s13, 1
      %p56 = por %p54, %p55
      %p57 = scmp.ne.s32.totalorder %s49, %s52
      %p58 = scmp.eq.s32.totalorder %s13, 0
      %p59 = por %p57, %p58
      %p60 = scmp.ne.s32.totalorder %s49, %s52
      %p61 = scmp.eq.s32.totalorder %s18, 1
      %p62 = por %p60, %p61
      %p63 = scmp.ne.s32.totalorder %s52, %s53
      %p64 = scmp.eq.s32.totalorder %s18, 0
      %p65 = por %p63, %p64
      %p66 = scmp.ne.s32.totalorder %s52, %s53
      %p67 = scmp.eq.s32.totalorder %s19, 1
      %p68 = por %p66, %p67
      %p70 = scmp.ne.s32.totalorder %s53, %s69
      %p71 = scmp.eq.s32.totalorder %s19, 0
      %p72 = por %p70, %p71
      %s74 = sadd.s32 %s73, 1
      %p77 = scmp.eq.s32.totalorder %s13, 1
      %p78 = scmp.ne.s32.totalorder %s73, %s75
      %p79 = scmp.eq.s32.totalorder %s13, 0
      %p80 = por %p78, %p79
      %p81 = scmp.ne.s32.totalorder %s73, %s75
      %p82 = scmp.eq.s32.totalorder %s18, 1
      %p83 = por %p81, %p82
      %p84 = scmp.ne.s32.totalorder %s75, %s76
      %p85 = scmp.eq.s32.totalorder %s18, 0
      %p86 = por %p84, %p85
      %p87 = scmp.ne.s32.totalorder %s75, %s76
      %p88 = scmp.eq.s32.totalorder %s19, 1
      %p89 = por %p87, %p88
      %p91 = scmp.ne.s32.totalorder %s76, %s90
      %p92 = scmp.eq.s32.totalorder %s19, 0
      %p93 = por %p91, %p92
      %s95 = sadd.s32 %s94, 1
      %p98 = scmp.eq.s32.totalorder %s13, 1
      %p99 = scmp.ne.s32.totalorder %s94, %s96
      %p100 = scmp.eq.s32.totalorder %s13, 0
      %p101 = por %p99, %p100
      %p102 = scmp.ne.s32.totalorder %s94, %s96
      %p103 = scmp.eq.s32.totalorder %s18, 1
      %p104 = por %p102, %p103
      %p105 = scmp.ne.s32.totalorder %s96, %s97
      %p106 = scmp.eq.s32.totalorder %s18, 0
      %p107 = por %p105, %p106
      %p108 = scmp.ne.s32.totalorder %s96, %s97
      %p109 = scmp.eq.s32.totalorder %s19, 1
      %p110 = por %p108, %p109
      %p112 = scmp.ne.s32.totalorder %s97, %s111
      %p113 = scmp.eq.s32.totalorder %s19, 0
      %p114 = por %p112, %p113
      %s116 = sadd.s32 %s115, 1
      %p119 = scmp.eq.s32.totalorder %s13, 1
      %p120 = scmp.ne.s32.totalorder %s115, %s117
      %p121 = scmp.eq.s32.totalorder %s13, 0
      %p122 = por %p120, %p121
      %p123 = scmp.ne.s32.totalorder %s115, %s117
      %p124 = scmp.eq.s32.totalorder %s18, 1
      %p125 = por %p123, %p124
      %p126 = scmp.ne.s32.totalorder %s117, %s118
      %p127 = scmp.eq.s32.totalorder %s18, 0
      %p128 = por %p126, %p127
      %p129 = scmp.ne.s32.totalorder %s117, %s118
      %p130 = scmp.eq.s32.totalorder %s19, 1
      %p131 = por %p129, %p130
      %p133 = scmp.ne.s32.totalorder %s118, %s132
      %p134 = scmp.eq.s32.totalorder %s19, 0
      %p135 = por %p133, %p134
      %s137 = sadd.s32 %s136, 1
      %p140 = scmp.eq.s32.totalorder %s13, 1
      %p141 = scmp.ne.s32.totalorder %s136, %s138
      %p142 = scmp.eq.s32.totalorder %s13, 0
      %p143 = por %p141, %p142
      %p144 = scmp.ne.s32.totalorder %s136, %s138
      %p145 = scmp.eq.s32.totalorder %s18, 1
      %p146 = por %p144, %p145
      %p147 = scmp.ne.s32.totalorder %s138, %s139
      %p148 = scmp.eq.s32.totalorder %s18, 0
      %p149 = por %p147, %p148
      %p150 = scmp.ne.s32.totalorder %s138, %s139
      %p151 = scmp.eq.s32.totalorder %s19, 1
      %p152 = por %p150, %p151
      %p154 = scmp.ne.s32.totalorder %s139, %s153
      %p155 = scmp.eq.s32.totalorder %s19, 0
      %p156 = por %p154, %p155
      %s157 = ssub.s32 %s13, %s20
      %p158 = scmp.eq.s32.totalorder %s157, 0
      %s160 = sadd.s32 %s159, 1
      %s161 = scalar_select %p158, %s159, %s160
      %p164 = pneg %p158
      %p165 = scmp.eq.s32.totalorder %s13, 1
      %p166 = por %p164, %p165
      %p167 = scmp.ne.s32.totalorder %s159, %s162
      %p168 = scmp.eq.s32.totalorder %s13, 0
      %p169 = por %p167, %p168
      %p170 = scmp.ne.s32.totalorder %s159, %s162
      %p171 = scmp.eq.s32.totalorder %s18, 1
      %p172 = por %p170, %p171
      %p173 = scmp.ne.s32.totalorder %s162, %s163
      %p174 = scmp.eq.s32.totalorder %s18, 0
      %p175 = por %p173, %p174
      %p176 = scmp.ne.s32.totalorder %s162, %s163
      %p177 = scmp.eq.s32.totalorder %s19, 1
      %p178 = por %p176, %p177
      %p180 = scmp.ne.s32.totalorder %s163, %s179
      %p181 = scmp.eq.s32.totalorder %s19, 0
      %p182 = por %p180, %p181
      %p183 = scmp.le.s32.totalorder 1, %s13
      %p184 = scmp.lt.s32.totalorder %s13, 3
      %p185 = pnand %p183, %p184
      %p186 = pneg %p185
      // Predicated region
      $region9: #{ar_step_forward.5} parent=5 // pred_check
        _
      $region10: #{ar_step_forward.5} parent=5 // pred_check_branch
        %188 = sbr.rel (%p185) target = $region12
      $region11: #{ar_step_forward.5} parent=5 // pred_region
        %s189 = ssub.s32 %s13, 1
        // Predicated region
        $region13: #{ar_step_forward.5} parent=11 // pred_check
          %p190 = pneg %p86
        $region14: #{ar_step_forward.5} parent=11 // pred_check_branch
          %192 = sbr.rel (%p190) target = $region16
        $region15: #{ar_step_forward.5} parent=11 // pred_region
          _
        $region16: #{ar_step_forward.5} parent=11 // pred_fallthru
          _
        // Predicated region
        $region17: #{ar_step_forward.5} parent=11 // pred_check
          %p193 = pneg %p107
        $region18: #{ar_step_forward.5} parent=11 // pred_check_branch
          %195 = sbr.rel (%p193) target = $region20
        $region19: #{ar_step_forward.5} parent=11 // pred_region
          _
        $region20: #{ar_step_forward.5} parent=11 // pred_fallthru
          _
        // Predicated region
        $region21: #{ar_step_forward.5} parent=11 // pred_check
          %p196 = pneg %p128
        $region22: #{ar_step_forward.5} parent=11 // pred_check_branch
          %198 = sbr.rel (%p196) target = $region24
        $region23: #{ar_step_forward.5} parent=11 // pred_region
          %s200 = ssub.s32 8192, 8192
          %201 = vsyncadd [#allocation6], %s200
          %s202 = sshll.u32 [#allocation5], 4
          %s203 = int_to_ptr.vmem [resolvable:$true] %s202
          %208 = dma.hbm_to_vmem [thread:$0]  %s4, 8192, %s203, [#allocation6], 512, 512, 32
        $region24: #{ar_step_forward.5} parent=11 // pred_fallthru
          _
        // Predicated region
        $region25: #{ar_step_forward.5} parent=11 // pred_check
          %p209 = pneg %p149
        $region26: #{ar_step_forward.5} parent=11 // pred_check_branch
          %211 = sbr.rel (%p209) target = $region28
        $region27: #{ar_step_forward.5} parent=11 // pred_region
          _
        $region28: #{ar_step_forward.5} parent=11 // pred_fallthru
          _
      $region12: #{ar_step_forward.5} parent=5 // pred_fallthru
        _
      %p212 = scmp.lt.s32.totalorder %s13, 2
      // Predicated region
      $region29: #{ar_step_forward.5} parent=5 // pred_check
        %p213 = pneg %p212
      $region30: #{ar_step_forward.5} parent=5 // pred_check_branch
        %215 = sbr.rel (%p213) target = $region32
      $region31: #{ar_step_forward.5} parent=5 // pred_region
        // Predicated region
        $region33: #{ar_step_forward.5} parent=31 // pred_check
          %p216 = pneg %p33
        $region34: #{ar_step_forward.5} parent=31 // pred_check_branch
          %218 = sbr.rel (%p216) target = $region36
        $region35: #{ar_step_forward.5} parent=31 // pred_region
          %s219 = smul.u32 4, %s13
          %p220 = scmp.lt.s32.totalorder %s219, 7
          %s221 = scalar_select %p220, %s219, 7
          %s222 = smul.addr %s221, 8
          %s223 = scalar_lea.vmem %s0, %s222
          %s224 = smul.u32 4, %s13
        $region36: #{ar_step_forward.5} parent=31 // pred_fallthru
          _
        // Predicated region
        $region37: #{ar_step_forward.5} parent=31 // pred_check
          %p225 = pneg %p59
        $region38: #{ar_step_forward.5} parent=31 // pred_check_branch
          %227 = sbr.rel (%p225) target = $region40
        $region39: #{ar_step_forward.5} parent=31 // pred_region
          %s228 = smul.u32 4, %s13
          %p229 = scmp.lt.s32.totalorder %s228, 7
          %s230 = scalar_select %p229, %s228, 7
          %s231 = smul.addr %s230, 8
          %s232 = scalar_lea.vmem %s1, %s231
          %s233 = smul.u32 4, %s13
        $region40: #{ar_step_forward.5} parent=31 // pred_fallthru
          _
      $region32: #{ar_step_forward.5} parent=5 // pred_fallthru
        _
      %p234 = scmp.le.s32.totalorder 1, %s13
      %p235 = scmp.lt.s32.totalorder %s13, 3
      %p236 = pnand %p234, %p235
      %p237 = pneg %p236
      // Predicated region
      $region41: #{ar_step_forward.5} parent=5 // pred_check
        _
      $region42: #{ar_step_forward.5} parent=5 // pred_check_branch
        %239 = sbr.rel (%p236) target = $region44
      $region43: #{ar_step_forward.5} parent=5 // pred_region
        %s240 = ssub.s32 %s13, 1
        // Predicated region
        $region45: #{ar_step_forward.5} parent=43 // pred_check
          %p241 = pneg %p128
        $region46: #{ar_step_forward.5} parent=43 // pred_check_branch
          %243 = sbr.rel (%p241) target = $region48
        $region47: #{ar_step_forward.5} parent=43 // pred_region
          %244 = dma.done [#allocation6], 8192
        $region48: #{ar_step_forward.5} parent=43 // pred_fallthru
          _
        %s245 = smul.u32 4, %s18
        %p246 = scmp.lt.s32.totalorder %s245, 7
        %s247 = scalar_select %p246, %s245, 7
        %s248 = smul.addr %s247, 8
        %s249 = scalar_lea.vmem %s0, %s248
        %p250 = pneg %p39
        %p251 = pneg %p36
        %s252 = smul.u32 4, %s18
        %p253 = scmp.lt.s32.totalorder %s252, 7
        %s254 = scalar_select %p253, %s252, 7
        %s255 = smul.addr %s254, 8
        %s256 = scalar_lea.vmem %s1, %s255
        %p257 = pneg %p65
        %p258 = pneg %p62
        %p259 = pneg %p86
        %p260 = pneg %p83
        %p261 = pneg %p107
        %p262 = pneg %p104
        %p263 = pneg %p128
        %p264 = pneg %p125
        %p265 = pneg %p149
        %p266 = pneg %p146
        %p267 = pneg %p175
        %p268 = pneg %p172
        %s269 = smul.u32 4, %s18
        %p270 = scmp.lt.s32.totalorder %s269, 7
        %s271 = scalar_select %p270, %s269, 7
        %s272 = smul.addr %s271, 8
        %s273 = scalar_lea.vmem %s6, %s272
        %s274 = smul.u32 4, %s18
        %p275 = scmp.lt.s32.totalorder %s274, 7
        %s276 = scalar_select %p275, %s274, 7
        %s277 = smul.addr %s276, 8
        %s278 = scalar_lea.vmem %s0, %s277
        %s279 = smul.u32 4, %s18
        %s280 = smul.u32 4, %s18
        %p281 = scmp.lt.s32.totalorder %s280, 7
        %s282 = scalar_select %p281, %s280, 7
        %s283 = smul.addr %s282, 8
        %s284 = scalar_lea.vmem %s1, %s283
        %s285 = smul.u32 4, %s18
        %s286 = smul.u32 4, %s18
        %p287 = scmp.lt.s32.totalorder %s286, 7
        %s288 = scalar_select %p287, %s286, 7
        %s289 = smul.addr %s288, 8
        %s290 = scalar_lea.vmem %s6, %s289
        %s291 = smul.u32 4, %s18
        %p292 = scmp.eq.s32.totalorder %s18, 0
        // Predicated region
        $region49: #{ar_step_forward.5} parent=43 // pred_check
          %p293 = pneg %p292
        $region50: #{ar_step_forward.5} parent=43 // pred_check_branch
          %295 = sbr.rel (%p293) target = $region52
        $region51: #{ar_step_forward.5} parent=43 // pred_region
          %296 = vst [vmem:[#allocation2] sm:$0xff] 0.0
          %297 = vst [vmem:[#allocation3] sm:$0xff] 0.0
        $region52: #{ar_step_forward.5} parent=43 // pred_fallthru
          _
        %v298 = vld [vmem:[%s278] sm:$0xff]
        %v299 = vld [vmem:[%s278 + $0x8] sm:$0xff]
        %v300 = vld [vmem:[%s278 + $0x10] sm:$0xff]
        %v301 = vld [vmem:[%s278 + $0x18] sm:$0xff]
        %v302 = vld [vmem:[%s2] sm:$0xff]
        %v303 = vld [vmem:[%s2 + $0x8] sm:$0xff]
        %v304 = vld [vmem:[%s2 + $0x10] sm:$0xff]
        %v305 = vld [vmem:[%s2 + $0x18] sm:$0xff]
        %v306 = vld [vmem:[%s2 + $0x20] sm:$0xff]
        %v307 = vld [vmem:[%s2 + $0x28] sm:$0xff]
        %v308 = vld [vmem:[%s2 + $0x30] sm:$0xff]
        %v309 = vld [vmem:[%s2 + $0x38] sm:$0xff]
        %v310 = vld [vmem:[%s2 + $0x40] sm:$0xff]
        %v311 = vld [vmem:[%s2 + $0x48] sm:$0xff]
        %v312 = vld [vmem:[%s2 + $0x50] sm:$0xff]
        %v313 = vld [vmem:[%s2 + $0x58] sm:$0xff]
        %v314 = vld [vmem:[%s2 + $0x60] sm:$0xff]
        %v315 = vld [vmem:[%s2 + $0x68] sm:$0xff]
        %v316 = vld [vmem:[%s2 + $0x70] sm:$0xff]
        %v317 = vld [vmem:[%s2 + $0x78] sm:$0xff]
        %v318 = vld [vmem:[%s2 + $0x80] sm:$0xff]
        %v319 = vld [vmem:[%s2 + $0x88] sm:$0xff]
        %v320 = vld [vmem:[%s2 + $0x90] sm:$0xff]
        %v321 = vld [vmem:[%s2 + $0x98] sm:$0xff]
        %v322 = vld [vmem:[%s2 + $0xa0] sm:$0xff]
        %v323 = vld [vmem:[%s2 + $0xa8] sm:$0xff]
        %v324 = vld [vmem:[%s2 + $0xb0] sm:$0xff]
        %v325 = vld [vmem:[%s2 + $0xb8] sm:$0xff]
        %v326 = vld [vmem:[%s2 + $0xc0] sm:$0xff]
        %v327 = vld [vmem:[%s2 + $0xc8] sm:$0xff]
        %v328 = vld [vmem:[%s2 + $0xd0] sm:$0xff]
        %v329 = vld [vmem:[%s2 + $0xd8] sm:$0xff]
        %v330 = vld [vmem:[%s2 + $0xe0] sm:$0xff]
        %v331 = vld [vmem:[%s2 + $0xe8] sm:$0xff]
        %v332 = vld [vmem:[%s2 + $0xf0] sm:$0xff]
        %v333 = vld [vmem:[%s2 + $0xf8] sm:$0xff]
        %v334 = vld [vmem:[%s2 + $0x100] sm:$0xff]
        %v335 = vld [vmem:[%s2 + $0x108] sm:$0xff]
        %v336 = vld [vmem:[%s2 + $0x110] sm:$0xff]
        %v337 = vld [vmem:[%s2 + $0x118] sm:$0xff]
        %v338 = vld [vmem:[%s2 + $0x120] sm:$0xff]
        %v339 = vld [vmem:[%s2 + $0x128] sm:$0xff]
        %v340 = vld [vmem:[%s2 + $0x130] sm:$0xff]
        %v341 = vld [vmem:[%s2 + $0x138] sm:$0xff]
        %v342 = vld [vmem:[%s2 + $0x140] sm:$0xff]
        %v343 = vld [vmem:[%s2 + $0x148] sm:$0xff]
        %v344 = vld [vmem:[%s2 + $0x150] sm:$0xff]
        %v345 = vld [vmem:[%s2 + $0x158] sm:$0xff]
        %v346 = vld [vmem:[%s2 + $0x160] sm:$0xff]
        %v347 = vld [vmem:[%s2 + $0x168] sm:$0xff]
        %v348 = vld [vmem:[%s2 + $0x170] sm:$0xff]
        %v349 = vld [vmem:[%s2 + $0x178] sm:$0xff]
        %v350 = vld [vmem:[%s2 + $0x180] sm:$0xff]
        %v351 = vld [vmem:[%s2 + $0x188] sm:$0xff]
        %v352 = vld [vmem:[%s2 + $0x190] sm:$0xff]
        %v353 = vld [vmem:[%s2 + $0x198] sm:$0xff]
        %v354 = vld [vmem:[%s2 + $0x1a0] sm:$0xff]
        %v355 = vld [vmem:[%s2 + $0x1a8] sm:$0xff]
        %v356 = vld [vmem:[%s2 + $0x1b0] sm:$0xff]
        %v357 = vld [vmem:[%s2 + $0x1b8] sm:$0xff]
        %v358 = vld [vmem:[%s2 + $0x1c0] sm:$0xff]
        %v359 = vld [vmem:[%s2 + $0x1c8] sm:$0xff]
        %v360 = vld [vmem:[%s2 + $0x1d0] sm:$0xff]
        %v361 = vld [vmem:[%s2 + $0x1d8] sm:$0xff]
        %v362 = vld [vmem:[%s2 + $0x1e0] sm:$0xff]
        %v363 = vld [vmem:[%s2 + $0x1e8] sm:$0xff]
        %v364 = vld [vmem:[%s2 + $0x1f0] sm:$0xff]
        %v365 = vld [vmem:[%s2 + $0x1f8] sm:$0xff]
        %v366 = vld [vmem:[%s284] sm:$0xff]
        %v367 = vld [vmem:[%s284 + $0x8] sm:$0xff]
        %v368 = vld [vmem:[%s284 + $0x10] sm:$0xff]
        %v369 = vld [vmem:[%s284 + $0x18] sm:$0xff]
        %v370 = vld [vmem:[%s3] sm:$0xff]
        %v371 = vld [vmem:[%s3 + $0x8] sm:$0xff]
        %v372 = vld [vmem:[%s3 + $0x10] sm:$0xff]
        %v373 = vld [vmem:[%s3 + $0x18] sm:$0xff]
        %v374 = vld [vmem:[%s3 + $0x20] sm:$0xff]
        %v375 = vld [vmem:[%s3 + $0x28] sm:$0xff]
        %v376 = vld [vmem:[%s3 + $0x30] sm:$0xff]
        %v377 = vld [vmem:[%s3 + $0x38] sm:$0xff]
        %v378 = vld [vmem:[%s3 + $0x40] sm:$0xff]
        %v379 = vld [vmem:[%s3 + $0x48] sm:$0xff]
        %v380 = vld [vmem:[%s3 + $0x50] sm:$0xff]
        %v381 = vld [vmem:[%s3 + $0x58] sm:$0xff]
        %vm382 = vcmask 195584
        %v384 = vsel %vm382, %v366, 0
        %v387 = vsel %vm382, %v367, 0
        %v390 = vsel %vm382, %v368, 0
        %v393 = vsel %vm382, %v369, 0
        %395 = vmatprep.subr.mxu0 %v371
        %396 = vmatpush1.msra.mxu0 %v370
        %397 = vmatprep.subr.mxu0 %v375
        %398 = vmatpush1.msra.mxu0 %v374
        %399 = vmatprep.subr.mxu0 %v379
        %400 = vmatpush1.msra.mxu0 %v378
        %401 = vmatprep.subr.mxu0 0.0
        %402 = vmatpush1.msra.mxu0 0.0
        %403 = vmatprep.subr.mxu0 0.0
        %404 = vmatpush1.msra.mxu0 0.0
        %405 = vmatprep.subr.mxu0 0.0
        %406 = vmatpush1.msra.mxu0 0.0
        %407 = vmatprep.subr.mxu0 0.0
        %408 = vmatpush1.msra.mxu0 0.0
        %409 = vmatprep.subr.mxu0 0.0
        %410 = vmatpush1.msra.mxu0 0.0
        %411 = vmatprep.subr.mxu0 0.0
        %412 = vmatpush1.msra.mxu0 0.0
        %413 = vmatprep.subr.mxu0 0.0
        %414 = vmatpush1.msra.mxu0 0.0
        %415 = vmatprep.subr.mxu0 0.0
        %416 = vmatpush1.msra.mxu0 0.0
        %417 = vmatprep.subr.mxu0 0.0
        %418 = vmatpush1.msra.mxu0 0.0
        %419 = vmatprep.subr.mxu0 0.0
        %420 = vmatpush1.msra.mxu0 0.0
        %421 = vmatprep.subr.mxu0 0.0
        %422 = vmatpush1.msra.mxu0 0.0
        %423 = vmatprep.subr.mxu0 0.0
        %424 = vmatpush1.msra.mxu0 0.0
        %425 = vmatprep.subr.mxu0 0.0
        %426 = vmatpush1.msra.mxu0 0.0
        %427 = vmatprep.subr.mxu0 0.0
        %428 = vmatpush1.msra.mxu0 0.0
        %429 = vmatprep.subr.mxu0 0.0
        %430 = vmatpush1.msra.mxu0 0.0
        %431 = vmatprep.subr.mxu0 0.0
        %432 = vmatpush1.msra.mxu0 0.0
        %433 = vmatprep.subr.mxu0 0.0
        %434 = vmatpush1.msra.mxu0 0.0
        %435 = vmatprep.subr.mxu0 0.0
        %436 = vmatpush1.msra.mxu0 0.0
        %437 = vmatprep.subr.mxu0 0.0
        %438 = vmatpush1.msra.mxu0 0.0
        %439 = vmatprep.subr.mxu0 0.0
        %440 = vmatpush1.msra.mxu0 0.0
        %441 = vmatprep.subr.mxu0 0.0
        %442 = vmatpush1.msra.mxu0 0.0
        %443 = vmatprep.subr.mxu0 0.0
        %444 = vmatpush1.msra.mxu0 0.0
        %445 = vmatprep.subr.mxu0 0.0
        %446 = vmatpush1.msra.mxu0 0.0
        %447 = vmatprep.subr.mxu0 0.0
        %448 = vmatpush1.msra.mxu0 0.0
        %449 = vmatprep.subr.mxu0 0.0
        %450 = vmatpush1.msra.mxu0 0.0
        %451 = vmatprep.subr.mxu0 0.0
        %452 = vmatpush1.msra.mxu0 0.0
        %453 = vmatprep.subr.mxu0 0.0
        %454 = vmatpush1.msra.mxu0 0.0
        %455 = vmatprep.subr.mxu0 0.0
        %456 = vmatpush1.msra.mxu0 0.0
        %457 = vmatprep.subr.mxu0 0.0
        %458 = vmatpush1.msra.mxu0 0.0
        %459 = vmatprep.mubr.f32.mxu0 0.0
        %460 = vmatmul.mubr.f32.gmra.mrb[0].mxu0 %v384
        %v461 = vpop.f32.mrb[0].mxu0
        %v462 = vadd.f32 0.0, %v461
        %v463 = vpop.f32.mrb[0].mxu0
        %v464 = vadd.f32 0.0, %v463
        %465 = vmatprep.mubr.f32.mxu0 0.0
        %466 = vmatmul.mubr.f32.gmra.mrb[0].mxu0 %v387
        %v467 = vpop.f32.mrb[0].mxu0
        %v468 = vadd.f32 0.0, %v467
        %v469 = vpop.f32.mrb[0].mxu0
        %v470 = vadd.f32 0.0, %v469
        %471 = vmatprep.mubr.f32.mxu0 0.0
        %472 = vmatmul.mubr.f32.gmra.mrb[0].mxu0 %v390
        %v473 = vpop.f32.mrb[0].mxu0
        %v474 = vadd.f32 0.0, %v473
        %v475 = vpop.f32.mrb[0].mxu0
        %v476 = vadd.f32 0.0, %v475
        %477 = vmatprep.mubr.f32.mxu0 0.0
        %478 = vmatmul.mubr.f32.gmra.mrb[0].mxu0 %v393
        %v479 = vpop.f32.mrb[0].mxu0
        %v480 = vadd.f32 0.0, %v479
        %v481 = vpop.f32.mrb[0].mxu0
        %v482 = vadd.f32 0.0, %v481
        %483 = vdwg.mxu0
        %484 = vmatprep.subr.mxu0 %v373
        %485 = vmatpush1.msra.mxu0 %v372
        %486 = vmatprep.subr.mxu0 %v377
        %487 = vmatpush1.msra.mxu0 %v376
        %488 = vmatprep.subr.mxu0 %v381
        %489 = vmatpush1.msra.mxu0 %v380
        %490 = vmatprep.subr.mxu0 0.0
        %491 = vmatpush1.msra.mxu0 0.0
        %492 = vmatprep.subr.mxu0 0.0
        %493 = vmatpush1.msra.mxu0 0.0
        %494 = vmatprep.subr.mxu0 0.0
        %495 = vmatpush1.msra.mxu0 0.0
        %496 = vmatprep.subr.mxu0 0.0
        %497 = vmatpush1.msra.mxu0 0.0
        %498 = vmatprep.subr.mxu0 0.0
        %499 = vmatpush1.msra.mxu0 0.0
        %500 = vmatprep.subr.mxu0 0.0
        %501 = vmatpush1.msra.mxu0 0.0
        %502 = vmatprep.subr.mxu0 0.0
        %503 = vmatpush1.msra.mxu0 0.0
        %504 = vmatprep.subr.mxu0 0.0
        %505 = vmatpush1.msra.mxu0 0.0
        %506 = vmatprep.subr.mxu0 0.0
        %507 = vmatpush1.msra.mxu0 0.0
        %508 = vmatprep.subr.mxu0 0.0
        %509 = vmatpush1.msra.mxu0 0.0
        %510 = vmatprep.subr.mxu0 0.0
        %511 = vmatpush1.msra.mxu0 0.0
        %512 = vmatprep.subr.mxu0 0.0
        %513 = vmatpush1.msra.mxu0 0.0
        %514 = vmatprep.subr.mxu0 0.0
        %515 = vmatpush1.msra.mxu0 0.0
        %516 = vmatprep.subr.mxu0 0.0
        %517 = vmatpush1.msra.mxu0 0.0
        %518 = vmatprep.subr.mxu0 0.0
        %519 = vmatpush1.msra.mxu0 0.0
        %520 = vmatprep.subr.mxu0 0.0
        %521 = vmatpush1.msra.mxu0 0.0
        %522 = vmatprep.subr.mxu0 0.0
        %523 = vmatpush1.msra.mxu0 0.0
        %524 = vmatprep.subr.mxu0 0.0
        %525 = vmatpush1.msra.mxu0 0.0
        %526 = vmatprep.subr.mxu0 0.0
        %527 = vmatpush1.msra.mxu0 0.0
        %528 = vmatprep.subr.mxu0 0.0
        %529 = vmatpush1.msra.mxu0 0.0
        %530 = vmatprep.subr.mxu0 0.0
        %531 = vmatpush1.msra.mxu0 0.0
        %532 = vmatprep.subr.mxu0 0.0
        %533 = vmatpush1.msra.mxu0 0.0
        %534 = vmatprep.subr.mxu0 0.0
        %535 = vmatpush1.msra.mxu0 0.0
        %536 = vmatprep.subr.mxu0 0.0
        %537 = vmatpush1.msra.mxu0 0.0
        %538 = vmatprep.subr.mxu0 0.0
        %539 = vmatpush1.msra.mxu0 0.0
        %540 = vmatprep.subr.mxu0 0.0
        %541 = vmatpush1.msra.mxu0 0.0
        %542 = vmatprep.subr.mxu0 0.0
        %543 = vmatpush1.msra.mxu0 0.0
        %544 = vmatprep.subr.mxu0 0.0
        %545 = vmatpush1.msra.mxu0 0.0
        %546 = vmatprep.subr.mxu0 0.0
        %547 = vmatpush1.msra.mxu0 0.0
        %548 = vmatprep.mubr.f32.mxu0 0.0
        %549 = vmatmul.mubr.f32.gmra.mrb[0].mxu0 %v384
        %v550 = vpop.f32.mrb[0].mxu0
        %v551 = vadd.f32 0.0, %v550
        %v552 = vpop.f32.mrb[0].mxu0
        %v553 = vadd.f32 0.0, %v552
        %554 = vmatprep.mubr.f32.mxu0 0.0
        %555 = vmatmul.mubr.f32.gmra.mrb[0].mxu0 %v387
        %v556 = vpop.f32.mrb[0].mxu0
        %v557 = vadd.f32 0.0, %v556
        %v558 = vpop.f32.mrb[0].mxu0
        %v559 = vadd.f32 0.0, %v558
        %560 = vmatprep.mubr.f32.mxu0 0.0
        %561 = vmatmul.mubr.f32.gmra.mrb[0].mxu0 %v390
        %v562 = vpop.f32.mrb[0].mxu0
        %v563 = vadd.f32 0.0, %v562
        %v564 = vpop.f32.mrb[0].mxu0
        %v565 = vadd.f32 0.0, %v564
        %566 = vmatprep.mubr.f32.mxu0 0.0
        %567 = vmatmul.mubr.f32.gmra.mrb[0].mxu0 %v393
        %v568 = vpop.f32.mrb[0].mxu0
        %v569 = vadd.f32 0.0, %v568
        %v570 = vpop.f32.mrb[0].mxu0
        %v571 = vadd.f32 0.0, %v570
        %572 = vdwg.mxu0
        %573 = vmatprep.subr.mxu0 %v303
        %574 = vmatpush1.msra.mxu0 %v302
        %575 = vmatprep.subr.mxu0 %v307
        %576 = vmatpush1.msra.mxu0 %v306
        %577 = vmatprep.subr.mxu0 %v311
        %578 = vmatpush1.msra.mxu0 %v310
        %579 = vmatprep.subr.mxu0 %v315
        %580 = vmatpush1.msra.mxu0 %v314
        %581 = vmatprep.subr.mxu0 %v319
        %582 = vmatpush1.msra.mxu0 %v318
        %583 = vmatprep.subr.mxu0 %v323
        %584 = vmatpush1.msra.mxu0 %v322
        %585 = vmatprep.subr.mxu0 %v327
        %586 = vmatpush1.msra.mxu0 %v326
        %587 = vmatprep.subr.mxu0 %v331
        %588 = vmatpush1.msra.mxu0 %v330
        %589 = vmatprep.subr.mxu0 %v335
        %590 = vmatpush1.msra.mxu0 %v334
        %591 = vmatprep.subr.mxu0 %v339
        %592 = vmatpush1.msra.mxu0 %v338
        %593 = vmatprep.subr.mxu0 %v343
        %594 = vmatpush1.msra.mxu0 %v342
        %595 = vmatprep.subr.mxu0 %v347
        %596 = vmatpush1.msra.mxu0 %v346
        %597 = vmatprep.subr.mxu0 %v351
        %598 = vmatpush1.msra.mxu0 %v350
        %599 = vmatprep.subr.mxu0 %v355
        %600 = vmatpush1.msra.mxu0 %v354
        %601 = vmatprep.subr.mxu0 %v359
        %602 = vmatpush1.msra.mxu0 %v358
        %603 = vmatprep.subr.mxu0 %v363
        %604 = vmatpush1.msra.mxu0 %v362
        %605 = vmatprep.subr.mxu0 0.0
        %606 = vmatpush1.msra.mxu0 0.0
        %607 = vmatprep.subr.mxu0 0.0
        %608 = vmatpush1.msra.mxu0 0.0
        %609 = vmatprep.subr.mxu0 0.0
        %610 = vmatpush1.msra.mxu0 0.0
        %611 = vmatprep.subr.mxu0 0.0
        %612 = vmatpush1.msra.mxu0 0.0
        %613 = vmatprep.subr.mxu0 0.0
        %614 = vmatpush1.msra.mxu0 0.0
        %615 = vmatprep.subr.mxu0 0.0
        %616 = vmatpush1.msra.mxu0 0.0
        %617 = vmatprep.subr.mxu0 0.0
        %618 = vmatpush1.msra.mxu0 0.0
        %619 = vmatprep.subr.mxu0 0.0
        %620 = vmatpush1.msra.mxu0 0.0
        %621 = vmatprep.subr.mxu0 0.0
        %622 = vmatpush1.msra.mxu0 0.0
        %623 = vmatprep.subr.mxu0 0.0
        %624 = vmatpush1.msra.mxu0 0.0
        %625 = vmatprep.subr.mxu0 0.0
        %626 = vmatpush1.msra.mxu0 0.0
        %627 = vmatprep.subr.mxu0 0.0
        %628 = vmatpush1.msra.mxu0 0.0
        %629 = vmatprep.subr.mxu0 0.0
        %630 = vmatpush1.msra.mxu0 0.0
        %631 = vmatprep.subr.mxu0 0.0
        %632 = vmatpush1.msra.mxu0 0.0
        %633 = vmatprep.subr.mxu0 0.0
        %634 = vmatpush1.msra.mxu0 0.0
        %635 = vmatprep.subr.mxu0 0.0
        %636 = vmatpush1.msra.mxu0 0.0
        %637 = vmatprep.mubr.f32.mxu0 0.0
        %638 = vmatmul.mubr.f32.gmra.mrb[0].mxu0 %v298
        %v639 = vpop.f32.mrb[0].mxu0
        %v640 = vadd.f32 %v462, %v639
        %v641 = vpop.f32.mrb[0].mxu0
        %v642 = vadd.f32 %v464, %v641
        %643 = vmatprep.mubr.f32.mxu0 0.0
        %644 = vmatmul.mubr.f32.gmra.mrb[0].mxu0 %v299
        %v645 = vpop.f32.mrb[0].mxu0
        %v646 = vadd.f32 %v468, %v645
        %v647 = vpop.f32.mrb[0].mxu0
        %v648 = vadd.f32 %v470, %v647
        %649 = vmatprep.mubr.f32.mxu0 0.0
        %650 = vmatmul.mubr.f32.gmra.mrb[0].mxu0 %v300
        %v651 = vpop.f32.mrb[0].mxu0
        %v652 = vadd.f32 %v474, %v651
        %v653 = vpop.f32.mrb[0].mxu0
        %v654 = vadd.f32 %v476, %v653
        %655 = vmatprep.mubr.f32.mxu0 0.0
        %656 = vmatmul.mubr.f32.gmra.mrb[0].mxu0 %v301
        %v657 = vpop.f32.mrb[0].mxu0
        %v658 = vadd.f32 %v480, %v657
        %v659 = vpop.f32.mrb[0].mxu0
        %v660 = vadd.f32 %v482, %v659
        %661 = vdwg.mxu0
        %662 = vmatprep.subr.mxu0 %v305
        %663 = vmatpush1.msra.mxu0 %v304
        %664 = vmatprep.subr.mxu0 %v309
        %665 = vmatpush1.msra.mxu0 %v308
        %666 = vmatprep.subr.mxu0 %v313
        %667 = vmatpush1.msra.mxu0 %v312
        %668 = vmatprep.subr.mxu0 %v317
        %669 = vmatpush1.msra.mxu0 %v316
        %670 = vmatprep.subr.mxu0 %v321
        %671 = vmatpush1.msra.mxu0 %v320
        %672 = vmatprep.subr.mxu0 %v325
        %673 = vmatpush1.msra.mxu0 %v324
        %674 = vmatprep.subr.mxu0 %v329
        %675 = vmatpush1.msra.mxu0 %v328
        %676 = vmatprep.subr.mxu0 %v333
        %677 = vmatpush1.msra.mxu0 %v332
        %678 = vmatprep.subr.mxu0 %v337
        %679 = vmatpush1.msra.mxu0 %v336
        %680 = vmatprep.subr.mxu0 %v341
        %681 = vmatpush1.msra.mxu0 %v340
        %682 = vmatprep.subr.mxu0 %v345
        %683 = vmatpush1.msra.mxu0 %v344
        %684 = vmatprep.subr.mxu0 %v349
        %685 = vmatpush1.msra.mxu0 %v348
        %686 = vmatprep.subr.mxu0 %v353
        %687 = vmatpush1.msra.mxu0 %v352
        %688 = vmatprep.subr.mxu0 %v357
        %689 = vmatpush1.msra.mxu0 %v356
        %690 = vmatprep.subr.mxu0 %v361
        %691 = vmatpush1.msra.mxu0 %v360
        %692 = vmatprep.subr.mxu0 %v365
        %693 = vmatpush1.msra.mxu0 %v364
        %694 = vmatprep.subr.mxu0 0.0
        %695 = vmatpush1.msra.mxu0 0.0
        %696 = vmatprep.subr.mxu0 0.0
        %697 = vmatpush1.msra.mxu0 0.0
        %698 = vmatprep.subr.mxu0 0.0
        %699 = vmatpush1.msra.mxu0 0.0
        %700 = vmatprep.subr.mxu0 0.0
        %701 = vmatpush1.msra.mxu0 0.0
        %702 = vmatprep.subr.mxu0 0.0
        %703 = vmatpush1.msra.mxu0 0.0
        %704 = vmatprep.subr.mxu0 0.0
        %705 = vmatpush1.msra.mxu0 0.0
        %706 = vmatprep.subr.mxu0 0.0
        %707 = vmatpush1.msra.mxu0 0.0
        %708 = vmatprep.subr.mxu0 0.0
        %709 = vmatpush1.msra.mxu0 0.0
        %710 = vmatprep.subr.mxu0 0.0
        %711 = vmatpush1.msra.mxu0 0.0
        %712 = vmatprep.subr.mxu0 0.0
        %713 = vmatpush1.msra.mxu0 0.0
        %714 = vmatprep.subr.mxu0 0.0
        %715 = vmatpush1.msra.mxu0 0.0
        %716 = vmatprep.subr.mxu0 0.0
        %717 = vmatpush1.msra.mxu0 0.0
        %718 = vmatprep.subr.mxu0 0.0
        %719 = vmatpush1.msra.mxu0 0.0
        %720 = vmatprep.subr.mxu0 0.0
        %721 = vmatpush1.msra.mxu0 0.0
        %722 = vmatprep.subr.mxu0 0.0
        %723 = vmatpush1.msra.mxu0 0.0
        %724 = vmatprep.subr.mxu0 0.0
        %725 = vmatpush1.msra.mxu0 0.0
        %726 = vmatprep.mubr.f32.mxu0 0.0
        %727 = vmatmul.mubr.f32.gmra.mrb[0].mxu0 %v298
        %v728 = vpop.f32.mrb[0].mxu0
        %v729 = vadd.f32 %v551, %v728
        %v730 = vpop.f32.mrb[0].mxu0
        %v731 = vadd.f32 %v553, %v730
        %732 = vmatprep.mubr.f32.mxu0 0.0
        %733 = vmatmul.mubr.f32.gmra.mrb[0].mxu0 %v299
        %v734 = vpop.f32.mrb[0].mxu0
        %v735 = vadd.f32 %v557, %v734
        %v736 = vpop.f32.mrb[0].mxu0
        %v737 = vadd.f32 %v559, %v736
        %738 = vmatprep.mubr.f32.mxu0 0.0
        %739 = vmatmul.mubr.f32.gmra.mrb[0].mxu0 %v300
        %v740 = vpop.f32.mrb[0].mxu0
        %v741 = vadd.f32 %v563, %v740
        %v742 = vpop.f32.mrb[0].mxu0
        %v743 = vadd.f32 %v565, %v742
        %744 = vmatprep.mubr.f32.mxu0 0.0
        %745 = vmatmul.mubr.f32.gmra.mrb[0].mxu0 %v301
        %v746 = vpop.f32.mrb[0].mxu0
        %v747 = vadd.f32 %v569, %v746
        %v748 = vpop.f32.mrb[0].mxu0
        %v749 = vadd.f32 %v571, %v748
        %750 = vdwg.mxu0
        %v751 = vld [vmem:[%s5] sm:$0xf]
        %v753 = vlaneseq
        %v754 = vshrl.u32 %v753, 7
        %v755 = vsub.s32 0, %v754
        %v756 = vrot.slane %v751, %v755
        %v757 = vlaneseq
        %v758 = vshrl.u32 %v757, 7
        %v759 = vsub.s32 1, %v758
        %v760 = vrot.slane %v751, %v759
        %v761 = vlaneseq
        %v762 = vshrl.u32 %v761, 7
        %v763 = vsub.s32 2, %v762
        %v764 = vrot.slane %v751, %v763
        %v765 = vlaneseq
        %v766 = vshrl.u32 %v765, 7
        %v767 = vsub.s32 3, %v766
        %v768 = vrot.slane %v751, %v767
        %v773 = vadd.f32 %v640, %v756
        %v774 = vadd.f32 %v642, %v760
        %v775 = vadd.f32 %v729, %v764
        %v776 = vadd.f32 %v731, %v768
        %v777 = vadd.f32 %v646, %v756
        %v778 = vadd.f32 %v648, %v760
        %v779 = vadd.f32 %v735, %v764
        %v780 = vadd.f32 %v737, %v768
        %v781 = vadd.f32 %v652, %v756
        %v782 = vadd.f32 %v654, %v760
        %v783 = vadd.f32 %v741, %v764
        %v784 = vadd.f32 %v743, %v768
        %v785 = vadd.f32 %v658, %v756
        %v786 = vadd.f32 %v660, %v760
        %v787 = vadd.f32 %v747, %v764
        %v788 = vadd.f32 %v749, %v768
        %789 = vst [vmem:[#allocation4] sm:$0xff] %v773
        %790 = vst [vmem:[#allocation4 + $0x8] sm:$0xff] %v774
        %791 = vst [vmem:[#allocation4 + $0x10] sm:$0xff] %v775
        %792 = vst [vmem:[#allocation4 + $0x18] sm:$0xff] %v776
        %793 = vst [vmem:[#allocation4 + $0x20] sm:$0xff] %v777
        %794 = vst [vmem:[#allocation4 + $0x28] sm:$0xff] %v778
        %795 = vst [vmem:[#allocation4 + $0x30] sm:$0xff] %v779
        %796 = vst [vmem:[#allocation4 + $0x38] sm:$0xff] %v780
        %797 = vst [vmem:[#allocation4 + $0x40] sm:$0xff] %v781
        %798 = vst [vmem:[#allocation4 + $0x48] sm:$0xff] %v782
        %799 = vst [vmem:[#allocation4 + $0x50] sm:$0xff] %v783
        %800 = vst [vmem:[#allocation4 + $0x58] sm:$0xff] %v784
        %801 = vst [vmem:[#allocation4 + $0x60] sm:$0xff] %v785
        %802 = vst [vmem:[#allocation4 + $0x68] sm:$0xff] %v786
        %803 = vst [vmem:[#allocation4 + $0x70] sm:$0xff] %v787
        %804 = vst [vmem:[#allocation4 + $0x78] sm:$0xff] %v788
        loop: start=0, step=1, limit=4
        $region53: #{ar_step_forward.5} parent=43 // loop_pre_header
          _
        $region54: #{ar_step_forward.5} parent=43 // loop_header
          %s806 = sphi 0, %s810
          %p807 = scmp.ge.s32.totalorder %s806, 4
        $region55: #{ar_step_forward.5} parent=43 // loop_header_branch
          %809 = sbr.rel (%p807) target = $region59
        $region56: #{ar_step_forward.5} parent=43 // loop_body
          %s811 = smul.u32 %s806, 8
          %v812 = vld [vmem:[#allocation2] sm:$0xff]
          %v813 = vld [vmem:[#allocation3] sm:$0xff]
          %s814 = sshra.s32 %s811, 3
          %s815 = sand.u32 %s811, 7
          %s816 = smul.u32 %s814, 4
          %s817 = smul.addr %s816, 8
          %s818 = scalar_lea.vmem [#allocation4], %s817
          %v819 = vld [vmem:[%s818] sm:$0xff]
          %v820 = vld [vmem:[%s818 + $0x8] sm:$0xff]
          %v821 = vld [vmem:[%s818 + $0x10] sm:$0xff]
          %v822 = vld [vmem:[%s818 + $0x18] sm:$0xff]
          %v823 = vld [vmem:[#allocation5] sm:$0xff]
          %v824 = vld [vmem:[#allocation5 + $0x8] sm:$0xff]
          %v825 = vld [vmem:[#allocation5 + $0x10] sm:$0xff]
          %v826 = vld [vmem:[#allocation5 + $0x18] sm:$0xff]
          %v827 = vld [vmem:[#allocation5 + $0x20] sm:$0xff]
          %v828 = vld [vmem:[#allocation5 + $0x28] sm:$0xff]
          %v829 = vld [vmem:[#allocation5 + $0x30] sm:$0xff]
          %v830 = vld [vmem:[#allocation5 + $0x38] sm:$0xff]
          %v831 = vld [vmem:[#allocation5 + $0x40] sm:$0xff]
          %v832 = vld [vmem:[#allocation5 + $0x48] sm:$0xff]
          %v833 = vld [vmem:[#allocation5 + $0x50] sm:$0xff]
          %v834 = vld [vmem:[#allocation5 + $0x58] sm:$0xff]
          %v835 = vld [vmem:[#allocation5 + $0x60] sm:$0xff]
          %v836 = vld [vmem:[#allocation5 + $0x68] sm:$0xff]
          %v837 = vld [vmem:[#allocation5 + $0x70] sm:$0xff]
          %v838 = vld [vmem:[#allocation5 + $0x78] sm:$0xff]
          %v839 = vld [vmem:[#allocation5 + $0x80] sm:$0xff]
          %v840 = vld [vmem:[#allocation5 + $0x88] sm:$0xff]
          %v841 = vld [vmem:[#allocation5 + $0x90] sm:$0xff]
          %v842 = vld [vmem:[#allocation5 + $0x98] sm:$0xff]
          %v843 = vld [vmem:[#allocation5 + $0xa0] sm:$0xff]
          %v844 = vld [vmem:[#allocation5 + $0xa8] sm:$0xff]
          %v845 = vld [vmem:[#allocation5 + $0xb0] sm:$0xff]
          %v846 = vld [vmem:[#allocation5 + $0xb8] sm:$0xff]
          %v847 = vld [vmem:[#allocation5 + $0xc0] sm:$0xff]
          %v848 = vld [vmem:[#allocation5 + $0xc8] sm:$0xff]
          %v849 = vld [vmem:[#allocation5 + $0xd0] sm:$0xff]
          %v850 = vld [vmem:[#allocation5 + $0xd8] sm:$0xff]
          %v851 = vld [vmem:[#allocation5 + $0xe0] sm:$0xff]
          %v852 = vld [vmem:[#allocation5 + $0xe8] sm:$0xff]
          %v853 = vld [vmem:[#allocation5 + $0xf0] sm:$0xff]
          %v854 = vld [vmem:[#allocation5 + $0xf8] sm:$0xff]
          %v855 = vld [vmem:[#allocation5 + $0x100] sm:$0xff]
          %v856 = vld [vmem:[#allocation5 + $0x108] sm:$0xff]
          %v857 = vld [vmem:[#allocation5 + $0x110] sm:$0xff]
          %v858 = vld [vmem:[#allocation5 + $0x118] sm:$0xff]
          %v859 = vld [vmem:[#allocation5 + $0x120] sm:$0xff]
          %v860 = vld [vmem:[#allocation5 + $0x128] sm:$0xff]
          %v861 = vld [vmem:[#allocation5 + $0x130] sm:$0xff]
          %v862 = vld [vmem:[#allocation5 + $0x138] sm:$0xff]
          %v863 = vld [vmem:[#allocation5 + $0x140] sm:$0xff]
          %v864 = vld [vmem:[#allocation5 + $0x148] sm:$0xff]
          %v865 = vld [vmem:[#allocation5 + $0x150] sm:$0xff]
          %v866 = vld [vmem:[#allocation5 + $0x158] sm:$0xff]
          %v867 = vld [vmem:[#allocation5 + $0x160] sm:$0xff]
          %v868 = vld [vmem:[#allocation5 + $0x168] sm:$0xff]
          %v869 = vld [vmem:[#allocation5 + $0x170] sm:$0xff]
          %v870 = vld [vmem:[#allocation5 + $0x178] sm:$0xff]
          %v871 = vld [vmem:[#allocation5 + $0x180] sm:$0xff]
          %v872 = vld [vmem:[#allocation5 + $0x188] sm:$0xff]
          %v873 = vld [vmem:[#allocation5 + $0x190] sm:$0xff]
          %v874 = vld [vmem:[#allocation5 + $0x198] sm:$0xff]
          %v875 = vld [vmem:[#allocation5 + $0x1a0] sm:$0xff]
          %v876 = vld [vmem:[#allocation5 + $0x1a8] sm:$0xff]
          %v877 = vld [vmem:[#allocation5 + $0x1b0] sm:$0xff]
          %v878 = vld [vmem:[#allocation5 + $0x1b8] sm:$0xff]
          %v879 = vld [vmem:[#allocation5 + $0x1c0] sm:$0xff]
          %v880 = vld [vmem:[#allocation5 + $0x1c8] sm:$0xff]
          %v881 = vld [vmem:[#allocation5 + $0x1d0] sm:$0xff]
          %v882 = vld [vmem:[#allocation5 + $0x1d8] sm:$0xff]
          %v883 = vld [vmem:[#allocation5 + $0x1e0] sm:$0xff]
          %v884 = vld [vmem:[#allocation5 + $0x1e8] sm:$0xff]
          %v885 = vld [vmem:[#allocation5 + $0x1f0] sm:$0xff]
          %v886 = vld [vmem:[#allocation5 + $0x1f8] sm:$0xff]
          %887 = vmatprep.subr.mxu0 %v824
          %888 = vmatpush1.msra.mxu0 %v823
          %889 = vmatprep.subr.mxu0 %v828
          %890 = vmatpush1.msra.mxu0 %v827
          %891 = vmatprep.subr.mxu0 %v832
          %892 = vmatpush1.msra.mxu0 %v831
          %893 = vmatprep.subr.mxu0 %v836
          %894 = vmatpush1.msra.mxu0 %v835
          %895 = vmatprep.subr.mxu0 %v840
          %896 = vmatpush1.msra.mxu0 %v839
          %897 = vmatprep.subr.mxu0 %v844
          %898 = vmatpush1.msra.mxu0 %v843
          %899 = vmatprep.subr.mxu0 %v848
          %900 = vmatpush1.msra.mxu0 %v847
          %901 = vmatprep.subr.mxu0 %v852
          %902 = vmatpush1.msra.mxu0 %v851
          %903 = vmatprep.subr.mxu0 %v856
          %904 = vmatpush1.msra.mxu0 %v855
          %905 = vmatprep.subr.mxu0 %v860
          %906 = vmatpush1.msra.mxu0 %v859
          %907 = vmatprep.subr.mxu0 %v864
          %908 = vmatpush1.msra.mxu0 %v863
          %909 = vmatprep.subr.mxu0 %v868
          %910 = vmatpush1.msra.mxu0 %v867
          %911 = vmatprep.subr.mxu0 %v872
          %912 = vmatpush1.msra.mxu0 %v871
          %913 = vmatprep.subr.mxu0 %v876
          %914 = vmatpush1.msra.mxu0 %v875
          %915 = vmatprep.subr.mxu0 %v880
          %916 = vmatpush1.msra.mxu0 %v879
          %917 = vmatprep.subr.mxu0 %v884
          %918 = vmatpush1.msra.mxu0 %v883
          %919 = vmatprep.subr.mxu0 0.0
          %920 = vmatpush1.msra.mxu0 0.0
          %921 = vmatprep.subr.mxu0 0.0
          %922 = vmatpush1.msra.mxu0 0.0
          %923 = vmatprep.subr.mxu0 0.0
          %924 = vmatpush1.msra.mxu0 0.0
          %925 = vmatprep.subr.mxu0 0.0
          %926 = vmatpush1.msra.mxu0 0.0
          %927 = vmatprep.subr.mxu0 0.0
          %928 = vmatpush1.msra.mxu0 0.0
          %929 = vmatprep.subr.mxu0 0.0
          %930 = vmatpush1.msra.mxu0 0.0
          %931 = vmatprep.subr.mxu0 0.0
          %932 = vmatpush1.msra.mxu0 0.0
          %933 = vmatprep.subr.mxu0 0.0
          %934 = vmatpush1.msra.mxu0 0.0
          %935 = vmatprep.subr.mxu0 0.0
          %936 = vmatpush1.msra.mxu0 0.0
          %937 = vmatprep.subr.mxu0 0.0
          %938 = vmatpush1.msra.mxu0 0.0
          %939 = vmatprep.subr.mxu0 0.0
          %940 = vmatpush1.msra.mxu0 0.0
          %941 = vmatprep.subr.mxu0 0.0
          %942 = vmatpush1.msra.mxu0 0.0
          %943 = vmatprep.subr.mxu0 0.0
          %944 = vmatpush1.msra.mxu0 0.0
          %945 = vmatprep.subr.mxu0 0.0
          %946 = vmatpush1.msra.mxu0 0.0
          %947 = vmatprep.subr.mxu0 0.0
          %948 = vmatpush1.msra.mxu0 0.0
          %949 = vmatprep.subr.mxu0 0.0
          %950 = vmatpush1.msra.mxu0 0.0
          %951 = vmatprep.mubr.f32.mxu0 0.0
          %952 = vmatmul.mubr.f32.gmra.mrb[0].mxu0 %v812
          %v953 = vpop.f32.mrb[0].mxu0
          %v954 = vadd.f32 0.0, %v953
          %v955 = vpop.f32.mrb[0].mxu0
          %v956 = vadd.f32 0.0, %v955
          %957 = vdwg.mxu0
          %958 = vmatprep.subr.mxu0 %v826
          %959 = vmatpush1.msra.mxu0 %v825
          %960 = vmatprep.subr.mxu0 %v830
          %961 = vmatpush1.msra.mxu0 %v829
          %962 = vmatprep.subr.mxu0 %v834
          %963 = vmatpush1.msra.mxu0 %v833
          %964 = vmatprep.subr.mxu0 %v838
          %965 = vmatpush1.msra.mxu0 %v837
          %966 = vmatprep.subr.mxu0 %v842
          %967 = vmatpush1.msra.mxu0 %v841
          %968 = vmatprep.subr.mxu0 %v846
          %969 = vmatpush1.msra.mxu0 %v845
          %970 = vmatprep.subr.mxu0 %v850
          %971 = vmatpush1.msra.mxu0 %v849
          %972 = vmatprep.subr.mxu0 %v854
          %973 = vmatpush1.msra.mxu0 %v853
          %974 = vmatprep.subr.mxu0 %v858
          %975 = vmatpush1.msra.mxu0 %v857
          %976 = vmatprep.subr.mxu0 %v862
          %977 = vmatpush1.msra.mxu0 %v861
          %978 = vmatprep.subr.mxu0 %v866
          %979 = vmatpush1.msra.mxu0 %v865
          %980 = vmatprep.subr.mxu0 %v870
          %981 = vmatpush1.msra.mxu0 %v869
          %982 = vmatprep.subr.mxu0 %v874
          %983 = vmatpush1.msra.mxu0 %v873
          %984 = vmatprep.subr.mxu0 %v878
          %985 = vmatpush1.msra.mxu0 %v877
          %986 = vmatprep.subr.mxu0 %v882
          %987 = vmatpush1.msra.mxu0 %v881
          %988 = vmatprep.subr.mxu0 %v886
          %989 = vmatpush1.msra.mxu0 %v885
          %990 = vmatprep.subr.mxu0 0.0
          %991 = vmatpush1.msra.mxu0 0.0
          %992 = vmatprep.subr.mxu0 0.0
          %993 = vmatpush1.msra.mxu0 0.0
          %994 = vmatprep.subr.mxu0 0.0
          %995 = vmatpush1.msra.mxu0 0.0
          %996 = vmatprep.subr.mxu0 0.0
          %997 = vmatpush1.msra.mxu0 0.0
          %998 = vmatprep.subr.mxu0 0.0
          %999 = vmatpush1.msra.mxu0 0.0
          %1000 = vmatprep.subr.mxu0 0.0
          %1001 = vmatpush1.msra.mxu0 0.0
          %1002 = vmatprep.subr.mxu0 0.0
          %1003 = vmatpush1.msra.mxu0 0.0
          %1004 = vmatprep.subr.mxu0 0.0
          %1005 = vmatpush1.msra.mxu0 0.0
          %1006 = vmatprep.subr.mxu0 0.0
          %1007 = vmatpush1.msra.mxu0 0.0
          %1008 = vmatprep.subr.mxu0 0.0
          %1009 = vmatpush1.msra.mxu0 0.0
          %1010 = vmatprep.subr.mxu0 0.0
          %1011 = vmatpush1.msra.mxu0 0.0
          %1012 = vmatprep.subr.mxu0 0.0
          %1013 = vmatpush1.msra.mxu0 0.0
          %1014 = vmatprep.subr.mxu0 0.0
          %1015 = vmatpush1.msra.mxu0 0.0
          %1016 = vmatprep.subr.mxu0 0.0
          %1017 = vmatpush1.msra.mxu0 0.0
          %1018 = vmatprep.subr.mxu0 0.0
          %1019 = vmatpush1.msra.mxu0 0.0
          %1020 = vmatprep.subr.mxu0 0.0
          %1021 = vmatpush1.msra.mxu0 0.0
          %1022 = vmatprep.mubr.f32.mxu0 0.0
          %1023 = vmatmul.mubr.f32.gmra.mrb[0].mxu0 %v812
          %v1024 = vpop.f32.mrb[0].mxu0
          %v1025 = vadd.f32 0.0, %v1024
          %v1026 = vpop.f32.mrb[0].mxu0
          %v1027 = vadd.f32 0.0, %v1026
          %1028 = vdwg.mxu0
          %v1029 = vadd.f32 %v819, %v954
          %v1030 = vadd.f32 %v820, %v956
          %v1031 = vadd.f32 %v821, %v1025
          %v1032 = vadd.f32 %v822, %v1027
          %v1033 = vxor.u32 %v1029, 2147483648
          %v1034 = vmul.f32 %v1033, 1.442695
          %v1035 = vpow.pop %v1034
          %v1036 = vadd.f32 %v1035, 1.0
          %v1037 = vrcp.pop %v1036
          %v1038 = vmul.f32 1.0, %v1037
          %v1039 = vxor.u32 %v1030, 2147483648
          %v1040 = vmul.f32 %v1039, 1.442695
          %v1041 = vpow.pop %v1040
          %v1042 = vadd.f32 %v1041, 1.0
          %v1043 = vrcp.pop %v1042
          %v1044 = vmul.f32 1.0, %v1043
          %v1045 = vtanh.pop %v1031
          %v1046 = vxor.u32 %v1032, 2147483648
          %v1047 = vmul.f32 %v1046, 1.442695
          %v1048 = vpow.pop %v1047
          %v1049 = vadd.f32 %v1048, 1.0
          %v1050 = vrcp.pop %v1049
          %v1051 = vmul.f32 1.0, %v1050
          %v1052 = vmul.f32 %v1044, %v813
          %v1053 = vmul.f32 %v1038, %v1045
          %v1054 = vadd.f32 %v1052, %v1053
          %v1055 = vtanh.pop %v1054
          %v1056 = vmul.f32 %v1051, %v1055
          %1057 = vst [vmem:[#allocation2] sm:$0xff] %v1056
          %1058 = vst [vmem:[#allocation3] sm:$0xff] %v1054
          %s1059 = scalar_lea.vmem %s290, %s811
          %1060 = vst [vmem:[%s1059] sm:$0xff] %v1056
        $region57: #{ar_step_forward.5} parent=43 // loop_footer
          %s810 = sadd.s32 1, %s806
        $region58: #{ar_step_forward.5} parent=43 // loop_footer_branch
          %805 = sbr.rel target = $region54
        $region59: #{ar_step_forward.5} parent=43 // loop_exit
          _
        %s1061 = smul.u32 4, %s18
        %p1062 = scmp.lt.s32.totalorder %s1061, 7
        %s1063 = scalar_select %p1062, %s1061, 7
        %s1064 = smul.addr %s1063, 8
        %s1065 = scalar_lea.vmem %s6, %s1064
        // Predicated region
        $region60: #{ar_step_forward.5} parent=43 // pred_check
          %p1066 = pneg %p172
        $region61: #{ar_step_forward.5} parent=43 // pred_check_branch
          %1068 = sbr.rel (%p1066) target = $region63
        $region62: #{ar_step_forward.5} parent=43 // pred_region
          %s1069 = smul.u32 4, %s18
        $region63: #{ar_step_forward.5} parent=43 // pred_fallthru
          _
      $region44: #{ar_step_forward.5} parent=5 // pred_fallthru
        _
      %p1070 = scmp.le.s32.totalorder 2, %s13
      // Predicated region
      $region64: #{ar_step_forward.5} parent=5 // pred_check
        %p1071 = pneg %p1070
      $region65: #{ar_step_forward.5} parent=5 // pred_check_branch
        %1073 = sbr.rel (%p1071) target = $region67
      $region66: #{ar_step_forward.5} parent=5 // pred_region
        %s1074 = ssub.s32 %s13, 2
        // Predicated region
        $region68: #{ar_step_forward.5} parent=66 // pred_check
          %p1075 = pneg %p178
        $region69: #{ar_step_forward.5} parent=66 // pred_check_branch
          %1077 = sbr.rel (%p1075) target = $region71
        $region70: #{ar_step_forward.5} parent=66 // pred_region
          %s1078 = smul.u32 4, %s19
          %p1079 = scmp.lt.s32.totalorder %s1078, 7
          %s1080 = scalar_select %p1079, %s1078, 7
          %s1081 = smul.addr %s1080, 8
          %s1082 = scalar_lea.vmem %s6, %s1081
        $region71: #{ar_step_forward.5} parent=66 // pred_fallthru
          _
      $region67: #{ar_step_forward.5} parent=5 // pred_fallthru
        _
    $region6: #{ar_step_forward.5} parent=1 // loop_footer
      %s17 = sadd.s32 1, %s13
    $region7: #{ar_step_forward.5} parent=1 // loop_footer_branch
      %12 = sbr.rel target = $region3
    $region8: #{ar_step_forward.5} parent=1 // loop_exit
      _
    %1083 = vsyncpa [#allocation6], 1
    %s1084 = scalar_lea.sflag [#allocation6], 1
    %1085 = vsyncpa %s1084, 1

// kernel: ar_step_forward.7
$region0: #{ar_step_forward.7}
  #allocation0 [shape = 'u32[]', space=smem, size = 0x4, offset = 0x4, fixed_abs, tag = 'smem constant byte address 0x4 - core index']
  #allocation1 [shape = 'u32[144,128]{1,0:T(1,128)}', space=vmem, size = 0x12000, scoped, tag = 'internal scratch']
  %s0 = inlined_call_operand.vmem [shape: f32[128,128], index: 0, kind: input, shape index: {}]
  %s1 = inlined_call_operand.vmem [shape: f32[4,128], index: 1, kind: input, shape index: {}]
  %s2 = inlined_call_operand.vmem [shape: f32[32,128], index: 2, kind: input, shape index: {}]
  %s3 = inlined_call_operand.vmem [shape: f32[32,1], index: 3, kind: input, shape index: {}]
  %s4 = inlined_call_operand.vmem [shape: f32[32,32], index: 4, kind: input, shape index: {}]
  %s5 = inlined_call_operand.vmem [shape: f32[32,1], index: 5, kind: input, shape index: {}]
  %s6 = inlined_call_operand.vmem [shape: f32[8,32], index: 6, kind: input, shape index: {}]
  %s7 = inlined_call_operand.vmem [shape: f32[8,1], index: 7, kind: input, shape index: {}]
  %s8 = inlined_call_operand.vmem [shape: f32[4,128], index: 8, kind: output, shape index: {0}]
  %s9 = inlined_call_operand.vmem [shape: f32[4,128], index: 9, kind: output, shape index: {1}]
  %10 = xla_tuple %s8, %s9
  %s11 = sld [smem:[#allocation0]]
  $region50: #{ar_step_forward.7} parent=0
    _
  %s13 = ssub.s32 1, %s11
  %s14 = scalar_select 0, %s13, %s11
  // Predicated region
  $region2: #{ar_step_forward.7} parent=0 // pred_check
    _
  $region3: #{ar_step_forward.7} parent=0 // pred_check_branch
    %16 = sbr.rel (0) target = $region5
  $region4: #{ar_step_forward.7} parent=0 // pred_region
    _
  $region5: #{ar_step_forward.7} parent=0 // pred_fallthru
    _
  // Predicated region
  $region6: #{ar_step_forward.7} parent=0 // pred_check
    _
  $region7: #{ar_step_forward.7} parent=0 // pred_check_branch
    %18 = sbr.rel (0) target = $region9
  $region8: #{ar_step_forward.7} parent=0 // pred_region
    _
  $region9: #{ar_step_forward.7} parent=0 // pred_fallthru
    _
  // Predicated region
  $region10: #{ar_step_forward.7} parent=0 // pred_check
    _
  $region11: #{ar_step_forward.7} parent=0 // pred_check_branch
    %20 = sbr.rel (0) target = $region13
  $region12: #{ar_step_forward.7} parent=0 // pred_region
    _
  $region13: #{ar_step_forward.7} parent=0 // pred_fallthru
    _
  // Predicated region
  $region14: #{ar_step_forward.7} parent=0 // pred_check
    _
  $region15: #{ar_step_forward.7} parent=0 // pred_check_branch
    %22 = sbr.rel (0) target = $region17
  $region16: #{ar_step_forward.7} parent=0 // pred_region
    _
  $region17: #{ar_step_forward.7} parent=0 // pred_fallthru
    _
  // Predicated region
  $region18: #{ar_step_forward.7} parent=0 // pred_check
    _
  $region19: #{ar_step_forward.7} parent=0 // pred_check_branch
    %24 = sbr.rel (0) target = $region21
  $region20: #{ar_step_forward.7} parent=0 // pred_region
    _
  $region21: #{ar_step_forward.7} parent=0 // pred_fallthru
    _
  // Predicated region
  $region22: #{ar_step_forward.7} parent=0 // pred_check
    _
  $region23: #{ar_step_forward.7} parent=0 // pred_check_branch
    %26 = sbr.rel (0) target = $region25
  $region24: #{ar_step_forward.7} parent=0 // pred_region
    _
  $region25: #{ar_step_forward.7} parent=0 // pred_fallthru
    _
  // Predicated region
  $region26: #{ar_step_forward.7} parent=0 // pred_check
    _
  $region27: #{ar_step_forward.7} parent=0 // pred_check_branch
    %28 = sbr.rel (0) target = $region29
  $region28: #{ar_step_forward.7} parent=0 // pred_region
    _
  $region29: #{ar_step_forward.7} parent=0 // pred_fallthru
    _
  // Predicated region
  $region30: #{ar_step_forward.7} parent=0 // pred_check
    _
  $region31: #{ar_step_forward.7} parent=0 // pred_check_branch
    %30 = sbr.rel (0) target = $region33
  $region32: #{ar_step_forward.7} parent=0 // pred_region
    _
  $region33: #{ar_step_forward.7} parent=0 // pred_fallthru
    _
  %v31 = vld [vmem:[%s0] sm:$0xff]
  %v32 = vld [vmem:[%s0 + $0x8] sm:$0xff]
  %v33 = vld [vmem:[%s0 + $0x10] sm:$0xff]
  %v34 = vld [vmem:[%s0 + $0x18] sm:$0xff]
  %v35 = vld [vmem:[%s0 + $0x20] sm:$0xff]
  %v36 = vld [vmem:[%s0 + $0x28] sm:$0xff]
  %v37 = vld [vmem:[%s0 + $0x30] sm:$0xff]
  %v38 = vld [vmem:[%s0 + $0x38] sm:$0xff]
  %v39 = vld [vmem:[%s0 + $0x40] sm:$0xff]
  %v40 = vld [vmem:[%s0 + $0x48] sm:$0xff]
  %v41 = vld [vmem:[%s0 + $0x50] sm:$0xff]
  %v42 = vld [vmem:[%s0 + $0x58] sm:$0xff]
  %v43 = vld [vmem:[%s0 + $0x60] sm:$0xff]
  %v44 = vld [vmem:[%s0 + $0x68] sm:$0xff]
  %v45 = vld [vmem:[%s0 + $0x70] sm:$0xff]
  %v46 = vld [vmem:[%s0 + $0x78] sm:$0xff]
  %v47 = vld [vmem:[%s2] sm:$0xff]
  %v48 = vld [vmem:[%s2 + $0x8] sm:$0xff]
  %v49 = vld [vmem:[%s2 + $0x10] sm:$0xff]
  %v50 = vld [vmem:[%s2 + $0x18] sm:$0xff]
  %v51 = vld [vmem:[%s3] sm:$0xff]
  %v52 = vld [vmem:[%s3 + $0x8] sm:$0xff]
  %v53 = vld [vmem:[%s3 + $0x10] sm:$0xff]
  %v54 = vld [vmem:[%s3 + $0x18] sm:$0xff]
  %56 = vset.pattern.permute.xlu0 0
  %57 = vperm.xlu0 %56, %v51
  %v58 = vpop.permute.xlu0 %57
  %61 = vset.pattern.permute.xlu0 0
  %62 = vperm.xlu0 %61, %v52
  %v63 = vpop.permute.xlu0 %62
  %66 = vset.pattern.permute.xlu0 0
  %67 = vperm.xlu0 %66, %v53
  %v68 = vpop.permute.xlu0 %67
  %71 = vset.pattern.permute.xlu0 0
  %72 = vperm.xlu0 %71, %v54
  %v73 = vpop.permute.xlu0 %72
  %75 = vmatprep.subr.mxu0 0.0
  %76 = vmatpush1.msra.mxu0 %v31
  %77 = vmatprep.subr.mxu0 0.0
  %78 = vmatpush1.msra.mxu0 %v32
  %79 = vmatprep.subr.mxu0 0.0
  %80 = vmatpush1.msra.mxu0 %v33
  %81 = vmatprep.subr.mxu0 0.0
  %82 = vmatpush1.msra.mxu0 %v34
  %83 = vmatprep.subr.mxu0 0.0
  %84 = vmatpush1.msra.mxu0 %v35
  %85 = vmatprep.subr.mxu0 0.0
  %86 = vmatpush1.msra.mxu0 %v36
  %87 = vmatprep.subr.mxu0 0.0
  %88 = vmatpush1.msra.mxu0 %v37
  %89 = vmatprep.subr.mxu0 0.0
  %90 = vmatpush1.msra.mxu0 %v38
  %91 = vmatprep.subr.mxu0 0.0
  %92 = vmatpush1.msra.mxu0 %v39
  %93 = vmatprep.subr.mxu0 0.0
  %94 = vmatpush1.msra.mxu0 %v40
  %95 = vmatprep.subr.mxu0 0.0
  %96 = vmatpush1.msra.mxu0 %v41
  %97 = vmatprep.subr.mxu0 0.0
  %98 = vmatpush1.msra.mxu0 %v42
  %99 = vmatprep.subr.mxu0 0.0
  %100 = vmatpush1.msra.mxu0 %v43
  %101 = vmatprep.subr.mxu0 0.0
  %102 = vmatpush1.msra.mxu0 %v44
  %103 = vmatprep.subr.mxu0 0.0
  %104 = vmatpush1.msra.mxu0 %v45
  %105 = vmatprep.subr.mxu0 0.0
  %106 = vmatpush1.msra.mxu0 %v46
  %107 = vmatprep.subr.mxu0 0.0
  %108 = vmatpush1.msra.mxu0 0.0
  %109 = vmatprep.subr.mxu0 0.0
  %110 = vmatpush1.msra.mxu0 0.0
  %111 = vmatprep.subr.mxu0 0.0
  %112 = vmatpush1.msra.mxu0 0.0
  %113 = vmatprep.subr.mxu0 0.0
  %114 = vmatpush1.msra.mxu0 0.0
  %115 = vmatprep.subr.mxu0 0.0
  %116 = vmatpush1.msra.mxu0 0.0
  %117 = vmatprep.subr.mxu0 0.0
  %118 = vmatpush1.msra.mxu0 0.0
  %119 = vmatprep.subr.mxu0 0.0
  %120 = vmatpush1.msra.mxu0 0.0
  %121 = vmatprep.subr.mxu0 0.0
  %122 = vmatpush1.msra.mxu0 0.0
  %123 = vmatprep.subr.mxu0 0.0
  %124 = vmatpush1.msra.mxu0 0.0
  %125 = vmatprep.subr.mxu0 0.0
  %126 = vmatpush1.msra.mxu0 0.0
  %127 = vmatprep.subr.mxu0 0.0
  %128 = vmatpush1.msra.mxu0 0.0
  %129 = vmatprep.subr.mxu0 0.0
  %130 = vmatpush1.msra.mxu0 0.0
  %131 = vmatprep.subr.mxu0 0.0
  %132 = vmatpush1.msra.mxu0 0.0
  %133 = vmatprep.subr.mxu0 0.0
  %134 = vmatpush1.msra.mxu0 0.0
  %135 = vmatprep.subr.mxu0 0.0
  %136 = vmatpush1.msra.mxu0 0.0
  %137 = vmatprep.subr.mxu0 0.0
  %138 = vmatpush1.msra.mxu0 0.0
  %139 = vmatprep.mubr.f32.mxu0 0.0
  %140 = vmatmul.mubr.f32.gmra.mrb[0].mxu0 %v47
  %v141 = vpop.f32.mrb[0].mxu0
  %v142 = vadd.f32 %v58, %v141
  %v143 = vpop.f32.mrb[0].mxu0
  %144 = vmatprep.mubr.f32.mxu0 0.0
  %145 = vmatmul.mubr.f32.gmra.mrb[0].mxu0 %v48
  %v146 = vpop.f32.mrb[0].mxu0
  %v147 = vadd.f32 %v63, %v146
  %v148 = vpop.f32.mrb[0].mxu0
  %149 = vmatprep.mubr.f32.mxu0 0.0
  %150 = vmatmul.mubr.f32.gmra.mrb[0].mxu0 %v49
  %v151 = vpop.f32.mrb[0].mxu0
  %v152 = vadd.f32 %v68, %v151
  %v153 = vpop.f32.mrb[0].mxu0
  %154 = vmatprep.mubr.f32.mxu0 0.0
  %155 = vmatmul.mubr.f32.gmra.mrb[0].mxu0 %v50
  %v156 = vpop.f32.mrb[0].mxu0
  %v157 = vadd.f32 %v73, %v156
  %v158 = vpop.f32.mrb[0].mxu0
  %159 = vdwg.mxu0
  %v160 = vtanh.pop %v142
  %v161 = vtanh.pop %v147
  %v162 = vtanh.pop %v152
  %v163 = vtanh.pop %v157
  %v164 = vld [vmem:[%s4] sm:$0xff]
  %v165 = vld [vmem:[%s4 + $0x8] sm:$0xff]
  %v166 = vld [vmem:[%s4 + $0x10] sm:$0xff]
  %v167 = vld [vmem:[%s4 + $0x18] sm:$0xff]
  %v168 = vld [vmem:[%s5] sm:$0xff]
  %v169 = vld [vmem:[%s5 + $0x8] sm:$0xff]
  %v170 = vld [vmem:[%s5 + $0x10] sm:$0xff]
  %v171 = vld [vmem:[%s5 + $0x18] sm:$0xff]
  %173 = vset.pattern.permute.xlu0 0
  %174 = vperm.xlu0 %173, %v168
  %v175 = vpop.permute.xlu0 %174
  %178 = vset.pattern.permute.xlu0 0
  %179 = vperm.xlu0 %178, %v169
  %v180 = vpop.permute.xlu0 %179
  %183 = vset.pattern.permute.xlu0 0
  %184 = vperm.xlu0 %183, %v170
  %v185 = vpop.permute.xlu0 %184
  %188 = vset.pattern.permute.xlu0 0
  %189 = vperm.xlu0 %188, %v171
  %v190 = vpop.permute.xlu0 %189
  %vm192 = vcmask 261120
  %v194 = vsel %vm192, %v164, 0
  %v197 = vsel %vm192, %v165, 0
  %v200 = vsel %vm192, %v166, 0
  %v203 = vsel %vm192, %v167, 0
  %205 = vmatprep.subr.mxu0 0.0
  %206 = vmatpush1.msra.mxu0 %v160
  %207 = vmatprep.subr.mxu0 0.0
  %208 = vmatpush1.msra.mxu0 %v161
  %209 = vmatprep.subr.mxu0 0.0
  %210 = vmatpush1.msra.mxu0 %v162
  %211 = vmatprep.subr.mxu0 0.0
  %212 = vmatpush1.msra.mxu0 %v163
  %213 = vmatprep.subr.mxu0 0.0
  %214 = vmatpush1.msra.mxu0 0.0
  %215 = vmatprep.subr.mxu0 0.0
  %216 = vmatpush1.msra.mxu0 0.0
  %217 = vmatprep.subr.mxu0 0.0
  %218 = vmatpush1.msra.mxu0 0.0
  %219 = vmatprep.subr.mxu0 0.0
  %220 = vmatpush1.msra.mxu0 0.0
  %221 = vmatprep.subr.mxu0 0.0
  %222 = vmatpush1.msra.mxu0 0.0
  %223 = vmatprep.subr.mxu0 0.0
  %224 = vmatpush1.msra.mxu0 0.0
  %225 = vmatprep.subr.mxu0 0.0
  %226 = vmatpush1.msra.mxu0 0.0
  %227 = vmatprep.subr.mxu0 0.0
  %228 = vmatpush1.msra.mxu0 0.0
  %229 = vmatprep.subr.mxu0 0.0
  %230 = vmatpush1.msra.mxu0 0.0
  %231 = vmatprep.subr.mxu0 0.0
  %232 = vmatpush1.msra.mxu0 0.0
  %233 = vmatprep.subr.mxu0 0.0
  %234 = vmatpush1.msra.mxu0 0.0
  %235 = vmatprep.subr.mxu0 0.0
  %236 = vmatpush1.msra.mxu0 0.0
  %237 = vmatprep.subr.mxu0 0.0
  %238 = vmatpush1.msra.mxu0 0.0
  %239 = vmatprep.subr.mxu0 0.0
  %240 = vmatpush1.msra.mxu0 0.0
  %241 = vmatprep.subr.mxu0 0.0
  %242 = vmatpush1.msra.mxu0 0.0
  %243 = vmatprep.subr.mxu0 0.0
  %244 = vmatpush1.msra.mxu0 0.0
  %245 = vmatprep.subr.mxu0 0.0
  %246 = vmatpush1.msra.mxu0 0.0
  %247 = vmatprep.subr.mxu0 0.0
  %248 = vmatpush1.msra.mxu0 0.0
  %249 = vmatprep.subr.mxu0 0.0
  %250 = vmatpush1.msra.mxu0 0.0
  %251 = vmatprep.subr.mxu0 0.0
  %252 = vmatpush1.msra.mxu0 0.0
  %253 = vmatprep.subr.mxu0 0.0
  %254 = vmatpush1.msra.mxu0 0.0
  %255 = vmatprep.subr.mxu0 0.0
  %256 = vmatpush1.msra.mxu0 0.0
  %257 = vmatprep.subr.mxu0 0.0
  %258 = vmatpush1.msra.mxu0 0.0
  %259 = vmatprep.subr.mxu0 0.0
  %260 = vmatpush1.msra.mxu0 0.0
  %261 = vmatprep.subr.mxu0 0.0
  %262 = vmatpush1.msra.mxu0 0.0
  %263 = vmatprep.subr.mxu0 0.0
  %264 = vmatpush1.msra.mxu0 0.0
  %265 = vmatprep.subr.mxu0 0.0
  %266 = vmatpush1.msra.mxu0 0.0
  %267 = vmatprep.subr.mxu0 0.0
  %268 = vmatpush1.msra.mxu0 0.0
  %269 = vmatprep.mubr.f32.mxu0 0.0
  %270 = vmatmul.mubr.f32.gmra.mrb[0].mxu0 %v194
  %v271 = vpop.f32.mrb[0].mxu0
  %v272 = vadd.f32 %v175, %v271
  %v273 = vpop.f32.mrb[0].mxu0
  %274 = vmatprep.mubr.f32.mxu0 0.0
  %275 = vmatmul.mubr.f32.gmra.mrb[0].mxu0 %v197
  %v276 = vpop.f32.mrb[0].mxu0
  %v277 = vadd.f32 %v180, %v276
  %v278 = vpop.f32.mrb[0].mxu0
  %279 = vmatprep.mubr.f32.mxu0 0.0
  %280 = vmatmul.mubr.f32.gmra.mrb[0].mxu0 %v200
  %v281 = vpop.f32.mrb[0].mxu0
  %v282 = vadd.f32 %v185, %v281
  %v283 = vpop.f32.mrb[0].mxu0
  %284 = vmatprep.mubr.f32.mxu0 0.0
  %285 = vmatmul.mubr.f32.gmra.mrb[0].mxu0 %v203
  %v286 = vpop.f32.mrb[0].mxu0
  %v287 = vadd.f32 %v190, %v286
  %v288 = vpop.f32.mrb[0].mxu0
  %289 = vdwg.mxu0
  %v290 = vtanh.pop %v272
  %v291 = vtanh.pop %v277
  %v292 = vtanh.pop %v282
  %v293 = vtanh.pop %v287
  %v294 = vld [vmem:[%s6] sm:$0xff]
  %v295 = vld [vmem:[%s7] sm:$0xff]
  %297 = vset.pattern.permute.xlu0 0
  %298 = vperm.xlu0 %297, %v295
  %v299 = vpop.permute.xlu0 %298
  %v302 = vsel %vm192, %v294, 0
  %304 = vmatprep.subr.mxu0 0.0
  %305 = vmatpush1.msra.mxu0 %v290
  %306 = vmatprep.subr.mxu0 0.0
  %307 = vmatpush1.msra.mxu0 %v291
  %308 = vmatprep.subr.mxu0 0.0
  %309 = vmatpush1.msra.mxu0 %v292
  %310 = vmatprep.subr.mxu0 0.0
  %311 = vmatpush1.msra.mxu0 %v293
  %312 = vmatprep.subr.mxu0 0.0
  %313 = vmatpush1.msra.mxu0 0.0
  %314 = vmatprep.subr.mxu0 0.0
  %315 = vmatpush1.msra.mxu0 0.0
  %316 = vmatprep.subr.mxu0 0.0
  %317 = vmatpush1.msra.mxu0 0.0
  %318 = vmatprep.subr.mxu0 0.0
  %319 = vmatpush1.msra.mxu0 0.0
  %320 = vmatprep.subr.mxu0 0.0
  %321 = vmatpush1.msra.mxu0 0.0
  %322 = vmatprep.subr.mxu0 0.0
  %323 = vmatpush1.msra.mxu0 0.0
  %324 = vmatprep.subr.mxu0 0.0
  %325 = vmatpush1.msra.mxu0 0.0
  %326 = vmatprep.subr.mxu0 0.0
  %327 = vmatpush1.msra.mxu0 0.0
  %328 = vmatprep.subr.mxu0 0.0
  %329 = vmatpush1.msra.mxu0 0.0
  %330 = vmatprep.subr.mxu0 0.0
  %331 = vmatpush1.msra.mxu0 0.0
  %332 = vmatprep.subr.mxu0 0.0
  %333 = vmatpush1.msra.mxu0 0.0
  %334 = vmatprep.subr.mxu0 0.0
  %335 = vmatpush1.msra.mxu0 0.0
  %336 = vmatprep.subr.mxu0 0.0
  %337 = vmatpush1.msra.mxu0 0.0
  %338 = vmatprep.subr.mxu0 0.0
  %339 = vmatpush1.msra.mxu0 0.0
  %340 = vmatprep.subr.mxu0 0.0
  %341 = vmatpush1.msra.mxu0 0.0
  %342 = vmatprep.subr.mxu0 0.0
  %343 = vmatpush1.msra.mxu0 0.0
  %344 = vmatprep.subr.mxu0 0.0
  %345 = vmatpush1.msra.mxu0 0.0
  %346 = vmatprep.subr.mxu0 0.0
  %347 = vmatpush1.msra.mxu0 0.0
  %348 = vmatprep.subr.mxu0 0.0
  %349 = vmatpush1.msra.mxu0 0.0
  %350 = vmatprep.subr.mxu0 0.0
  %351 = vmatpush1.msra.mxu0 0.0
  %352 = vmatprep.subr.mxu0 0.0
  %353 = vmatpush1.msra.mxu0 0.0
  %354 = vmatprep.subr.mxu0 0.0
  %355 = vmatpush1.msra.mxu0 0.0
  %356 = vmatprep.subr.mxu0 0.0
  %357 = vmatpush1.msra.mxu0 0.0
  %358 = vmatprep.subr.mxu0 0.0
  %359 = vmatpush1.msra.mxu0 0.0
  %360 = vmatprep.subr.mxu0 0.0
  %361 = vmatpush1.msra.mxu0 0.0
  %362 = vmatprep.subr.mxu0 0.0
  %363 = vmatpush1.msra.mxu0 0.0
  %364 = vmatprep.subr.mxu0 0.0
  %365 = vmatpush1.msra.mxu0 0.0
  %366 = vmatprep.subr.mxu0 0.0
  %367 = vmatpush1.msra.mxu0 0.0
  %368 = vmatprep.mubr.f32.mxu0 0.0
  %369 = vmatmul.mubr.f32.gmra.mrb[0].mxu0 %v302
  %v370 = vpop.f32.mrb[0].mxu0
  %v371 = vadd.f32 %v299, %v370
  %v372 = vpop.f32.mrb[0].mxu0
  %373 = vdwg.mxu0
  %v374 = vmul.f32 %v371, 1.442695
  %v375 = vpow.pop %v374
  %v376 = vld [vmem:[%s1] sm:$0xf]
  %v377 = vmul.f32 %v375, %v376
  %v379 = vrot.slane %v371, 4
  %v381 = vadd.f32 %v377, %v379
  %382 = vst [vmem:[%s8] sm:$0xf] %v381
  %383 = vst [vmem:[%s9] sm:$0xf] %v371
  // Predicated region
  $region34: #{ar_step_forward.7} parent=0 // pred_check
    _
  $region35: #{ar_step_forward.7} parent=0 // pred_check_branch
    %385 = sbr.rel (0) target = $region37
  $region36: #{ar_step_forward.7} parent=0 // pred_region
    _
  $region37: #{ar_step_forward.7} parent=0 // pred_fallthru
    _
  // Predicated region
  $region38: #{ar_step_forward.7} parent=0 // pred_check
    _
  $region39: #{ar_step_forward.7} parent=0 // pred_check_branch
    %387 = sbr.rel (0) target = $region41
  $region40: #{ar_step_forward.7} parent=0 // pred_region
    _
  $region41: #{ar_step_forward.7} parent=0 // pred_fallthru
    _
  // Predicated region
  $region42: #{ar_step_forward.7} parent=0 // pred_check
    _
  $region43: #{ar_step_forward.7} parent=0 // pred_check_branch
    %389 = sbr.rel (0) target = $region45
  $region44: #{ar_step_forward.7} parent=0 // pred_region
    _
  $region45: #{ar_step_forward.7} parent=0 // pred_fallthru
    _
  // Predicated region
  $region46: #{ar_step_forward.7} parent=0 // pred_check
    _
  $region47: #{ar_step_forward.7} parent=0 // pred_check_branch
    %391 = sbr.rel (0) target = $region49
  $region48: #{ar_step_forward.7} parent=0 // pred_region
    _
  $region49: #{ar_step_forward.7} parent=0 // pred_fallthru
    _

</llo_original>
